<compile_context>
chip_gen: v6e
topology: v6e:2x2x1
jax: 0.10.0
libtpu: 0.0.40
codegen_flags: <defaults>
</compile_context>

<pallas_src>
import functools

import jax
import jax.numpy as jnp
from jax.experimental import pallas as pl
from jax.experimental.pallas import tpu as pltpu


def _round_up(x, m):
    return (x + m - 1) // m * m


# ----------------------------------------------------------------------------
# Fused kernel: RNN(tanh) + LSTM recurrence + length-gather + Linear + log_softmax
# ----------------------------------------------------------------------------
def _fused_rnn_kernel(len_ref, x_ref, w1i_ref, b1_ref, w1h_ref,
                      w2i_ref, w2h_ref, b2_ref, wout_ref, bout_ref,
                      out_ref,
                      h1_ref, h2_ref, c2_ref, sel_ref, xw1_ref,
                      *, hp, bp, tblk, unroll, num_classes, mm_dtype):
    tb = pl.program_id(0)

    @pl.when(tb == 0)
    def _():
        h1_ref[...] = jnp.zeros_like(h1_ref)
        h2_ref[...] = jnp.zeros_like(h2_ref)
        c2_ref[...] = jnp.zeros_like(c2_ref)
        sel_ref[...] = jnp.zeros_like(sel_ref)

    # Hoisted layer-1 input projection for the whole time block: one matmul with
    # M = tblk*bp rows; bias b1 folded in here (once per block, not per step).
    xw1_ref[...] = (
        jnp.dot(x_ref[...].astype(mm_dtype), w1i_ref[...],
                preferred_element_type=jnp.float32) + b1_ref[...])

    # Lane-broadcast the per-row gather index once, outside the recurrence.
    len_b = jnp.broadcast_to(len_ref[...], (bp, hp))

    def step(s, carry):
        h1, h2, c2, sel = carry
        t = tb * tblk + s
        row = pl.multiple_of(s * bp, bp)   # sublane-aligned slice into xw1

        # ---- layer 1: vanilla tanh RNN; only h @ W_hh is on the serial chain ----
        pre1 = xw1_ref[pl.ds(row, bp), :] + jnp.dot(
            h1.astype(mm_dtype), w1h_ref[...], preferred_element_type=jnp.float32)
        h1 = jnp.tanh(pre1)
        x2 = jnp.tanh(h1)            # forward() applies an extra tanh to rnn_out1

        # ---- layer 2: LSTM, PyTorch gate order (i, f, g, o); split dots, no concat ----
        gates = (jnp.dot(x2.astype(mm_dtype), w2i_ref[...],
                         preferred_element_type=jnp.float32)
                 + jnp.dot(h2.astype(mm_dtype), w2h_ref[...],
                           preferred_element_type=jnp.float32)
                 + b2_ref[...])
        # Gate blocks are padded to hp=128 lanes, so each slice is vreg-aligned.
        i_g = jax.nn.sigmoid(gates[:, 0 * hp:1 * hp])
        f_g = jax.nn.sigmoid(gates[:, 1 * hp:2 * hp])
        g_g = jnp.tanh(gates[:, 2 * hp:3 * hp])
        o_g = jax.nn.sigmoid(gates[:, 3 * hp:4 * hp])
        c2 = f_g * c2 + i_g * g_g
        h2 = o_g * jnp.tanh(c2)

        out_t = jnp.tanh(h2)         # tanh on the LSTM output sequence
        # fused gather: rnn_out[length[b], b] (raw time index, same as the module)
        sel = jnp.where(len_b == t, out_t, sel)
        return h1, h2, c2, sel

    carry = (h1_ref[...], h2_ref[...], c2_ref[...], sel_ref[...])
    carry = jax.lax.fori_loop(0, tblk, step, carry, unroll=unroll)
    h1_ref[...], h2_ref[...], c2_ref[...], sel_ref[...] = carry

    # Final grid step: fused Linear head + log_softmax over the real classes only.
    @pl.when(tb == pl.num_programs(0) - 1)
    def _():
        logits = jnp.dot(sel_ref[...], wout_ref[...],
                         preferred_element_type=jnp.float32) + bout_ref[...]
        col = jax.lax.broadcasted_iota(jnp.int32, logits.shape, 1)
        logits = jnp.where(col < num_classes, logits, jnp.float32(-1e30))
        m = jnp.max(logits, axis=-1, keepdims=True)
        lse = m + jnp.log(jnp.sum(jnp.exp(logits - m), axis=-1, keepdims=True))
        out_ref[...] = logits - lse


# ----------------------------------------------------------------------------
# Full forward (dropout is identity in eval mode)
# ----------------------------------------------------------------------------
def rnn_forward(params, input_y, length, *, tblk=32, unroll=8,
                matmul_dtype=jnp.bfloat16):
    # TODO(synk): nn.Dropout is identity at inference; training-mode dropout not modeled.
    T, B, I = input_y.shape
    H = params["whh1"].shape[0]
    O = params["w_out"].shape[1]

    HP = _round_up(H, 128)           # lane-pad hidden size (gate slices = full vregs)
    OP = _round_up(O, 128)           # lane-dense output tile
    BP = _round_up(max(B, 1), 8)     # pad batch to full sublanes

    tblk = max(1, min(tblk, T))
    unroll = max(1, min(unroll, tblk))
    T_pad = _round_up(T, tblk)

    # Activation stream kept at natural feature width I (no 128-lane inflation);
    # padded batch rows / trailing timesteps are zeros (exact: tanh(0)=0 and the
    # padded hidden/gate lanes provably stay 0 through the recurrence).
    x_p = jnp.zeros((T_pad, BP, I), jnp.float32).at[:T, :B, :].set(input_y)
    x2d = x_p.reshape(T_pad * BP, I)

    # ---- weight packing (stored transposed so the kernel does x @ W) ----
    w1i = jnp.zeros((I, HP), jnp.float32).at[:, :H].set(params["wih1"])
    w1h = jnp.zeros((HP, HP), jnp.float32).at[:H, :H].set(params["whh1"])
    b1 = jnp.zeros((1, HP), jnp.float32).at[:, :H].set(params["b1"])

    w2i = jnp.zeros((HP, 4 * HP), jnp.float32)
    w2h = jnp.zeros((HP, 4 * HP), jnp.float32)
    b2 = jnp.zeros((1, 4 * HP), jnp.float32)
    for k in range(4):  # keep PyTorch gate order i, f, g, o on 128-lane boundaries
        w2i = w2i.at[:H, k * HP:k * HP + H].set(params["wih2"][:, k * H:(k + 1) * H])
        w2h = w2h.at[:H, k * HP:k * HP + H].set(params["whh2"][:, k * H:(k + 1) * H])
        b2 = b2.at[:, k * HP:k * HP + H].set(params["b2"][:, k * H:(k + 1) * H])

    # Recurrent-path weights feed the MXU in matmul_dtype (bf16 by default);
    # the once-only head stays f32.
    w1i = w1i.astype(matmul_dtype)
    w1h = w1h.astype(matmul_dtype)
    w2i = w2i.astype(matmul_dtype)
    w2h = w2h.astype(matmul_dtype)

    w_out = jnp.zeros((HP, OP), jnp.float32).at[:H, :O].set(params["w_out"])
    b_out = jnp.zeros((1, OP), jnp.float32).at[:, :O].set(params["b_out"])

    # Per-row gather index as a slim (BP, 1) tile; padded rows get -1 (never match).
    len_col = jnp.full((BP, 1), -1, jnp.int32).at[:B, 0].set(length.astype(jnp.int32))

    kernel = functools.partial(_fused_rnn_kernel, hp=HP, bp=BP, tblk=tblk,
                               unroll=unroll, num_classes=O, mm_dtype=matmul_dtype)

    out_p = pl.pallas_call(
        kernel,
        out_shape=jax.ShapeDtypeStruct((BP, OP), jnp.float32),
        grid=(T_pad // tblk,),
        in_specs=[
            pl.BlockSpec((BP, 1), lambda tb: (0, 0)),             # gather index (length)
            pl.BlockSpec((tblk * BP, I), lambda tb: (tb, 0)),     # x time-block, 2-D slab
            pl.BlockSpec((I, HP), lambda tb: (0, 0)),             # rnn1 W_ih
            pl.BlockSpec((1, HP), lambda tb: (0, 0)),             # rnn1 bias (b_ih + b_hh)
            pl.BlockSpec((HP, HP), lambda tb: (0, 0)),            # rnn1 W_hh
            pl.BlockSpec((HP, 4 * HP), lambda tb: (0, 0)),        # lstm W_ih
            pl.BlockSpec((HP, 4 * HP), lambda tb: (0, 0)),        # lstm W_hh
            pl.BlockSpec((1, 4 * HP), lambda tb: (0, 0)),         # lstm bias (b_ih + b_hh)
            pl.BlockSpec((HP, OP), lambda tb: (0, 0)),            # head W (transposed)
            pl.BlockSpec((1, OP), lambda tb: (0, 0)),             # head b
        ],
        out_specs=pl.BlockSpec((BP, OP), lambda tb: (0, 0)),      # resident; written last
        scratch_shapes=[
            pltpu.VMEM((BP, HP), jnp.float32),          # h of rnn1
            pltpu.VMEM((BP, HP), jnp.float32),          # h of lstm
            pltpu.VMEM((BP, HP), jnp.float32),          # c of lstm
            pltpu.VMEM((BP, HP), jnp.float32),          # selected rnn_out[length[b], b]
            pltpu.VMEM((tblk * BP, HP), jnp.float32),   # hoisted x @ W_ih1 + b1 block
        ],
        compiler_params=pltpu.CompilerParams(
            dimension_semantics=("arbitrary",)),  # time recurrence is serial
    )(len_col, x2d, w1i, b1, w1h, w2i, w2h, b2, w_out, b_out)

    return out_p[:B, :O]


# ----------------------------------------------------------------------------
# Pure-JAX f32 reference (unpadded) for correctness checks
# ----------------------------------------------------------------------------
def reference_forward(params, input_y, length):
    T, B, I = input_y.shape
    H = params["whh1"].shape[0]

    def step(carry, x_t):
        h1, h2, c2 = carry
        h1 = jnp.tanh(x_t @ params["wih1"] + h1 @ params["whh1"] + params["b1"])
        x2 = jnp.tanh(h1)
        gates = x2 @ params["wih2"] + h2 @ params["whh2"] + params["b2"]
        i_g = jax.nn.sigmoid(gates[:, 0 * H:1 * H])
        f_g = jax.nn.sigmoid(gates[:, 1 * H:2 * H])
        g_g = jnp.tanh(gates[:, 2 * H:3 * H])
        o_g = jax.nn.sigmoid(gates[:, 3 * H:4 * H])
        c2 = f_g * c2 + i_g * g_g
        h2 = o_g * jnp.tanh(c2)
        return (h1, h2, c2), jnp.tanh(h2)

    init = (jnp.zeros((B, H)), jnp.zeros((B, H)), jnp.zeros((B, H)))
    _, seq_out = jax.lax.scan(step, init, input_y)
    sel = seq_out[length, jnp.arange(B)]
    logits = sel @ params["w_out"] + params["b_out"]
    return jax.nn.log_softmax(logits, axis=1)


if __name__ == "__main__":
    # Small shapes consistent with the module: (seq, batch, input_size)
    T, B, I, H, O = 20, 2, 16, 32, 8

    key = jax.random.PRNGKey(0)
    keys = jax.random.split(key, 10)
    s1 = 1.0 / jnp.sqrt(H)  # PyTorch-style uniform init scale

    params = {
        # stored transposed relative to PyTorch (so kernel does x @ W)
        "wih1": jax.random.uniform(keys[0], (I, H), minval=-s1, maxval=s1, dtype=jnp.float32),
        "whh1": jax.random.uniform(keys[1], (H, H), minval=-s1, maxval=s1, dtype=jnp.float32),
        "b1": jax.random.uniform(keys[2], (1, H), minval=-s1, maxval=s1, dtype=jnp.float32),
        "wih2": jax.random.uniform(keys[3], (I if False else H, 4 * H), minval=-s1, maxval=s1, dtype=jnp.float32),
        "whh2": jax.random.uniform(keys[4], (H, 4 * H), minval=-s1, maxval=s1, dtype=jnp.float32),
        "b2": jax.random.uniform(keys[5], (1, 4 * H), minval=-s1, maxval=s1, dtype=jnp.float32),
        "w_out": jax.random.uniform(keys[6], (H, O), minval=-s1, maxval=s1, dtype=jnp.float32),
        "b_out": jax.random.uniform(keys[7], (1, O), minval=-s1, maxval=s1, dtype=jnp.float32),
    }

    input_y = jax.random.normal(keys[8], (T, B, I), dtype=jnp.float32)
    # NOTE: matches the module exactly — rnn_out[length[i], i] uses length[i] as a raw
    # time index (no length-1 / packed-sequence semantics).
    length = jnp.array([3, 12], dtype=jnp.int32)
    # review correctness concern: raw time indices must be in range [0, T)
    assert int(jnp.max(length)) < T and int(jnp.min(length)) >= 0

    ref = jax.block_until_ready(reference_forward(params, input_y, length))

    # f32 matmul path: bit-for-bit the module semantics (tight tolerance).
    out_f32 = jax.block_until_ready(
        rnn_forward(params, input_y, length, tblk=8, matmul_dtype=jnp.float32))
    assert out_f32.shape == (B, O)
    assert jnp.allclose(out_f32, ref, atol=2e-4, rtol=2e-4), "f32 path mismatch vs reference"

    # bf16 matmul-input path (perf review item #5): f32 accumulation, looser tolerance.
    out_bf16 = jax.block_until_ready(
        rnn_forward(params, input_y, length, tblk=8, matmul_dtype=jnp.bfloat16))
    assert out_bf16.shape == (B, O)
    assert jnp.allclose(out_bf16, ref, atol=5e-2, rtol=5e-2), "bf16 path mismatch vs reference"

    print("KERNEL_OK")
</pallas_src>

<mosaic_0001>
module attributes {stable_mosaic.version = 11 : i64} {
  func.func @_fused_rnn_kernel(%arg0: i32, %arg1: memref<8x1xi32, #tpu.memory_space<vmem>>, %arg2: memref<64x16xf32, #tpu.memory_space<vmem>>, %arg3: memref<16x128xf32, #tpu.memory_space<vmem>>, %arg4: memref<1x128xf32, #tpu.memory_space<vmem>>, %arg5: memref<128x128xf32, #tpu.memory_space<vmem>>, %arg6: memref<128x512xf32, #tpu.memory_space<vmem>>, %arg7: memref<128x512xf32, #tpu.memory_space<vmem>>, %arg8: memref<1x512xf32, #tpu.memory_space<vmem>>, %arg9: memref<128x128xf32, #tpu.memory_space<vmem>>, %arg10: memref<1x128xf32, #tpu.memory_space<vmem>>, %arg11: memref<8x128xf32, #tpu.memory_space<vmem>>, %arg12: memref<8x128xf32, #tpu.memory_space<vmem>>, %arg13: memref<8x128xf32, #tpu.memory_space<vmem>>, %arg14: memref<8x128xf32, #tpu.memory_space<vmem>>, %arg15: memref<8x128xf32, #tpu.memory_space<vmem>>, %arg16: memref<64x128xf32, #tpu.memory_space<vmem>>) attributes {dimension_semantics = [#tpu.dimension_semantics<arbitrary>], iteration_bounds = array<i64: 3>, scalar_prefetch = 0 : i64, scratch_operands = 5 : i64, tpu.core_type = #tpu.core_type<tc>, window_params = [{pipeline_mode = #tpu.pipeline_mode<synchronous>, transform_indices = @transform_0, window_bounds = array<i64: 8, 1>}, {transform_indices = @transform_1, window_bounds = array<i64: 64, 16>}, {pipeline_mode = #tpu.pipeline_mode<synchronous>, transform_indices = @transform_2, window_bounds = array<i64: 16, 128>}, {pipeline_mode = #tpu.pipeline_mode<synchronous>, transform_indices = @transform_3, window_bounds = array<i64: 1, 128>}, {pipeline_mode = #tpu.pipeline_mode<synchronous>, transform_indices = @transform_4, window_bounds = array<i64: 128, 128>}, {pipeline_mode = #tpu.pipeline_mode<synchronous>, transform_indices = @transform_5, window_bounds = array<i64: 128, 512>}, {pipeline_mode = #tpu.pipeline_mode<synchronous>, transform_indices = @transform_6, window_bounds = array<i64: 128, 512>}, {pipeline_mode = #tpu.pipeline_mode<synchronous>, transform_indices = @transform_7, window_bounds = array<i64: 1, 512>}, {pipeline_mode = #tpu.pipeline_mode<synchronous>, transform_indices = @transform_8, window_bounds = array<i64: 128, 128>}, {pipeline_mode = #tpu.pipeline_mode<synchronous>, transform_indices = @transform_9, window_bounds = array<i64: 1, 128>}, {pipeline_mode = #tpu.pipeline_mode<synchronous>, transform_indices = @transform_10, window_bounds = array<i64: 8, 128>}]} {
    %c0_i32 = arith.constant 0 : i32
    %0 = arith.cmpi eq, %arg0, %c0_i32 : i32
    %1 = arith.extui %0 : i1 to i32
    %c0_i32_0 = arith.constant 0 : i32
    %2 = arith.cmpi ne, %1, %c0_i32_0 : i32
    scf.if %2 {
      %cst_165 = arith.constant 0.000000e+00 : f32
      %408 = vector.broadcast %cst_165 : f32 to vector<8x128xf32>
      %c0_166 = arith.constant 0 : index
      %c0_167 = arith.constant 0 : index
      %409 = vector.load %arg12[%c0_166, %c0_167] : memref<8x128xf32, #tpu.memory_space<vmem>>, vector<8x128xf32>
      tpu.vector_store %arg12[%c0_166, %c0_167], %408 {strides = array<i32>} : memref<8x128xf32, #tpu.memory_space<vmem>>, vector<8x128xf32>,
      %cst_168 = arith.constant 0.000000e+00 : f32
      %410 = vector.broadcast %cst_168 : f32 to vector<8x128xf32>
      %c0_169 = arith.constant 0 : index
      %c0_170 = arith.constant 0 : index
      %411 = vector.load %arg13[%c0_169, %c0_170] : memref<8x128xf32, #tpu.memory_space<vmem>>, vector<8x128xf32>
      tpu.vector_store %arg13[%c0_169, %c0_170], %410 {strides = array<i32>} : memref<8x128xf32, #tpu.memory_space<vmem>>, vector<8x128xf32>,
      %cst_171 = arith.constant 0.000000e+00 : f32
      %412 = vector.broadcast %cst_171 : f32 to vector<8x128xf32>
      %c0_172 = arith.constant 0 : index
      %c0_173 = arith.constant 0 : index
      %413 = vector.load %arg14[%c0_172, %c0_173] : memref<8x128xf32, #tpu.memory_space<vmem>>, vector<8x128xf32>
      tpu.vector_store %arg14[%c0_172, %c0_173], %412 {strides = array<i32>} : memref<8x128xf32, #tpu.memory_space<vmem>>, vector<8x128xf32>,
      %cst_174 = arith.constant 0.000000e+00 : f32
      %414 = vector.broadcast %cst_174 : f32 to vector<8x128xf32>
      %c0_175 = arith.constant 0 : index
      %c0_176 = arith.constant 0 : index
      %415 = vector.load %arg15[%c0_175, %c0_176] : memref<8x128xf32, #tpu.memory_space<vmem>>, vector<8x128xf32>
      tpu.vector_store %arg15[%c0_175, %c0_176], %414 {strides = array<i32>} : memref<8x128xf32, #tpu.memory_space<vmem>>, vector<8x128xf32>,
    } else {
    }
    %c0 = arith.constant 0 : index
    %c0_1 = arith.constant 0 : index
    %3 = vector.load %arg2[%c0, %c0_1] : memref<64x16xf32, #tpu.memory_space<vmem>>, vector<64x16xf32>
    %c0_2 = arith.constant 0 : index
    %c0_3 = arith.constant 0 : index
    %4 = vector.load %arg3[%c0_2, %c0_3] : memref<16x128xf32, #tpu.memory_space<vmem>>, vector<16x128xf32>
    %cst = arith.constant dense<0.000000e+00> : vector<64x128xf32>
    %5 = tpu.matmul %3, %4, %cst {dimension_numbers = #tpu.dot_dimension_numbers<[1], [0], [0], [1], [0, 0, 1, 1], [], []>} : vector<64x16xf32>, vector<16x128xf32>, vector<64x128xf32> -> vector<64x128xf32>
    %c0_4 = arith.constant 0 : index
    %c0_5 = arith.constant 0 : index
    %6 = vector.load %arg4[%c0_4, %c0_5] : memref<1x128xf32, #tpu.memory_space<vmem>>, vector<1x128xf32>
    %7 = vector.broadcast %6 : vector<1x128xf32> to vector<64x128xf32>
    %8 = arith.addf %5, %7 : vector<64x128xf32>
    %c0_6 = arith.constant 0 : index
    %c0_7 = arith.constant 0 : index
    %9 = vector.load %arg16[%c0_6, %c0_7] : memref<64x128xf32, #tpu.memory_space<vmem>>, vector<64x128xf32>
    tpu.vector_store %arg16[%c0_6, %c0_7], %8 {strides = array<i32>} : memref<64x128xf32, #tpu.memory_space<vmem>>, vector<64x128xf32>,
    %c0_8 = arith.constant 0 : index
    %c0_9 = arith.constant 0 : index
    %10 = vector.load %arg1[%c0_8, %c0_9] : memref<8x1xi32, #tpu.memory_space<vmem>>, vector<8x1xi32>
    %11 = vector.shape_cast %10 : vector<8x1xi32> to vector<8x1xi32>
    %12 = vector.broadcast %11 : vector<8x1xi32> to vector<8x128xi32>
    %c0_10 = arith.constant 0 : index
    %c0_11 = arith.constant 0 : index
    %13 = vector.load %arg12[%c0_10, %c0_11] : memref<8x128xf32, #tpu.memory_space<vmem>>, vector<8x128xf32>
    %c0_12 = arith.constant 0 : index
    %c0_13 = arith.constant 0 : index
    %14 = vector.load %arg13[%c0_12, %c0_13] : memref<8x128xf32, #tpu.memory_space<vmem>>, vector<8x128xf32>
    %c0_14 = arith.constant 0 : index
    %c0_15 = arith.constant 0 : index
    %15 = vector.load %arg14[%c0_14, %c0_15] : memref<8x128xf32, #tpu.memory_space<vmem>>, vector<8x128xf32>
    %c0_16 = arith.constant 0 : index
    %c0_17 = arith.constant 0 : index
    %16 = vector.load %arg15[%c0_16, %c0_17] : memref<8x128xf32, #tpu.memory_space<vmem>>, vector<8x128xf32>
    %c0_i32_18 = arith.constant 0 : i32
    %c8_i32 = arith.constant 8 : i32
    %17 = arith.muli %arg0, %c8_i32 : i32
    %18 = arith.addi %17, %c0_i32_18 : i32
    %c8_i32_19 = arith.constant 8 : i32
    %19 = arith.muli %c0_i32_18, %c8_i32_19 : i32
    %20 = tpu.assume_multiple %19, 8 : i32
    %21 = arith.index_cast %20 : i32 to index
    %c0_20 = arith.constant 0 : index
    %22 = vector.load %arg16[%21, %c0_20] : memref<64x128xf32, #tpu.memory_space<vmem>>, vector<8x128xf32>
    %c0_21 = arith.constant 0 : index
    %c0_22 = arith.constant 0 : index
    %23 = vector.load %arg5[%c0_21, %c0_22] : memref<128x128xf32, #tpu.memory_space<vmem>>, vector<128x128xf32>
    %cst_23 = arith.constant dense<0.000000e+00> : vector<8x128xf32>
    %24 = tpu.matmul %13, %23, %cst_23 {dimension_numbers = #tpu.dot_dimension_numbers<[1], [0], [0], [1], [0, 0, 1, 1], [], []>} : vector<8x128xf32>, vector<128x128xf32>, vector<8x128xf32> -> vector<8x128xf32>
    %25 = arith.addf %22, %24 : vector<8x128xf32>
    %26 = math.tanh %25 : vector<8x128xf32>
    %27 = math.tanh %26 : vector<8x128xf32>
    %c0_24 = arith.constant 0 : index
    %c0_25 = arith.constant 0 : index
    %28 = vector.load %arg6[%c0_24, %c0_25] : memref<128x512xf32, #tpu.memory_space<vmem>>, vector<128x512xf32>
    %cst_26 = arith.constant dense<0.000000e+00> : vector<8x512xf32>
    %29 = tpu.matmul %27, %28, %cst_26 {dimension_numbers = #tpu.dot_dimension_numbers<[1], [0], [0], [1], [0, 0, 1, 1], [], []>} : vector<8x128xf32>, vector<128x512xf32>, vector<8x512xf32> -> vector<8x512xf32>
    %c0_27 = arith.constant 0 : index
    %c0_28 = arith.constant 0 : index
    %30 = vector.load %arg7[%c0_27, %c0_28] : memref<128x512xf32, #tpu.memory_space<vmem>>, vector<128x512xf32>
    %cst_29 = arith.constant dense<0.000000e+00> : vector<8x512xf32>
    %31 = tpu.matmul %14, %30, %cst_29 {dimension_numbers = #tpu.dot_dimension_numbers<[1], [0], [0], [1], [0, 0, 1, 1], [], []>} : vector<8x128xf32>, vector<128x512xf32>, vector<8x512xf32> -> vector<8x512xf32>
    %32 = arith.addf %29, %31 : vector<8x512xf32>
    %c0_30 = arith.constant 0 : index
    %c0_31 = arith.constant 0 : index
    %33 = vector.load %arg8[%c0_30, %c0_31] : memref<1x512xf32, #tpu.memory_space<vmem>>, vector<1x512xf32>
    %34 = vector.broadcast %33 : vector<1x512xf32> to vector<8x512xf32>
    %35 = arith.addf %32, %34 : vector<8x512xf32>
    %36 = vector.extract_strided_slice %35 {offsets = [0, 0], sizes = [8, 128], strides = [1, 1]} : vector<8x512xf32> to vector<8x128xf32>
    %37 = arith.negf %36 : vector<8x128xf32>
    %38 = math.exp %37 : vector<8x128xf32>
    %cst_32 = arith.constant 1.000000e+00 : f32
    %39 = vector.broadcast %cst_32 : f32 to vector<8x128xf32>
    %40 = arith.addf %39, %38 : vector<8x128xf32>
    %41 = arith.divf %39, %40 : vector<8x128xf32>
    %42 = vector.extract_strided_slice %35 {offsets = [0, 128], sizes = [8, 128], strides = [1, 1]} : vector<8x512xf32> to vector<8x128xf32>
    %43 = arith.negf %42 : vector<8x128xf32>
    %44 = math.exp %43 : vector<8x128xf32>
    %cst_33 = arith.constant 1.000000e+00 : f32
    %45 = vector.broadcast %cst_33 : f32 to vector<8x128xf32>
    %46 = arith.addf %45, %44 : vector<8x128xf32>
    %47 = arith.divf %45, %46 : vector<8x128xf32>
    %48 = vector.extract_strided_slice %35 {offsets = [0, 256], sizes = [8, 128], strides = [1, 1]} : vector<8x512xf32> to vector<8x128xf32>
    %49 = math.tanh %48 : vector<8x128xf32>
    %50 = vector.extract_strided_slice %35 {offsets = [0, 384], sizes = [8, 128], strides = [1, 1]} : vector<8x512xf32> to vector<8x128xf32>
    %51 = arith.negf %50 : vector<8x128xf32>
    %52 = math.exp %51 : vector<8x128xf32>
    %cst_34 = arith.constant 1.000000e+00 : f32
    %53 = vector.broadcast %cst_34 : f32 to vector<8x128xf32>
    %54 = arith.addf %53, %52 : vector<8x128xf32>
    %55 = arith.divf %53, %54 : vector<8x128xf32>
    %56 = arith.mulf %47, %15 : vector<8x128xf32>
    %57 = arith.mulf %41, %49 : vector<8x128xf32>
    %58 = arith.addf %56, %57 : vector<8x128xf32>
    %59 = math.tanh %58 : vector<8x128xf32>
    %60 = arith.mulf %55, %59 : vector<8x128xf32>
    %61 = math.tanh %60 : vector<8x128xf32>
    %62 = vector.broadcast %18 : i32 to vector<8x128xi32>
    %63 = arith.cmpi eq, %12, %62 : vector<8x128xi32>
    %64 = arith.select %63, %61, %16 : vector<8x128xi1>, vector<8x128xf32>
    %c1_i32 = arith.constant 1 : i32
    %c8_i32_35 = arith.constant 8 : i32
    %65 = arith.muli %arg0, %c8_i32_35 : i32
    %66 = arith.addi %65, %c1_i32 : i32
    %c8_i32_36 = arith.constant 8 : i32
    %67 = arith.muli %c1_i32, %c8_i32_36 : i32
    %68 = tpu.assume_multiple %67, 8 : i32
    %69 = arith.index_cast %68 : i32 to index
    %c0_37 = arith.constant 0 : index
    %70 = vector.load %arg16[%69, %c0_37] : memref<64x128xf32, #tpu.memory_space<vmem>>, vector<8x128xf32>
    %c0_38 = arith.constant 0 : index
    %c0_39 = arith.constant 0 : index
    %71 = vector.load %arg5[%c0_38, %c0_39] : memref<128x128xf32, #tpu.memory_space<vmem>>, vector<128x128xf32>
    %cst_40 = arith.constant dense<0.000000e+00> : vector<8x128xf32>
    %72 = tpu.matmul %26, %71, %cst_40 {dimension_numbers = #tpu.dot_dimension_numbers<[1], [0], [0], [1], [0, 0, 1, 1], [], []>} : vector<8x128xf32>, vector<128x128xf32>, vector<8x128xf32> -> vector<8x128xf32>
    %73 = arith.addf %70, %72 : vector<8x128xf32>
    %74 = math.tanh %73 : vector<8x128xf32>
    %75 = math.tanh %74 : vector<8x128xf32>
    %c0_41 = arith.constant 0 : index
    %c0_42 = arith.constant 0 : index
    %76 = vector.load %arg6[%c0_41, %c0_42] : memref<128x512xf32, #tpu.memory_space<vmem>>, vector<128x512xf32>
    %cst_43 = arith.constant dense<0.000000e+00> : vector<8x512xf32>
    %77 = tpu.matmul %75, %76, %cst_43 {dimension_numbers = #tpu.dot_dimension_numbers<[1], [0], [0], [1], [0, 0, 1, 1], [], []>} : vector<8x128xf32>, vector<128x512xf32>, vector<8x512xf32> -> vector<8x512xf32>
    %c0_44 = arith.constant 0 : index
    %c0_45 = arith.constant 0 : index
    %78 = vector.load %arg7[%c0_44, %c0_45] : memref<128x512xf32, #tpu.memory_space<vmem>>, vector<128x512xf32>
    %cst_46 = arith.constant dense<0.000000e+00> : vector<8x512xf32>
    %79 = tpu.matmul %60, %78, %cst_46 {dimension_numbers = #tpu.dot_dimension_numbers<[1], [0], [0], [1], [0, 0, 1, 1], [], []>} : vector<8x128xf32>, vector<128x512xf32>, vector<8x512xf32> -> vector<8x512xf32>
    %80 = arith.addf %77, %79 : vector<8x512xf32>
    %c0_47 = arith.constant 0 : index
    %c0_48 = arith.constant 0 : index
    %81 = vector.load %arg8[%c0_47, %c0_48] : memref<1x512xf32, #tpu.memory_space<vmem>>, vector<1x512xf32>
    %82 = vector.broadcast %81 : vector<1x512xf32> to vector<8x512xf32>
    %83 = arith.addf %80, %82 : vector<8x512xf32>
    %84 = vector.extract_strided_slice %83 {offsets = [0, 0], sizes = [8, 128], strides = [1, 1]} : vector<8x512xf32> to vector<8x128xf32>
    %85 = arith.negf %84 : vector<8x128xf32>
    %86 = math.exp %85 : vector<8x128xf32>
    %cst_49 = arith.constant 1.000000e+00 : f32
    %87 = vector.broadcast %cst_49 : f32 to vector<8x128xf32>
    %88 = arith.addf %87, %86 : vector<8x128xf32>
    %89 = arith.divf %87, %88 : vector<8x128xf32>
    %90 = vector.extract_strided_slice %83 {offsets = [0, 128], sizes = [8, 128], strides = [1, 1]} : vector<8x512xf32> to vector<8x128xf32>
    %91 = arith.negf %90 : vector<8x128xf32>
    %92 = math.exp %91 : vector<8x128xf32>
    %cst_50 = arith.constant 1.000000e+00 : f32
    %93 = vector.broadcast %cst_50 : f32 to vector<8x128xf32>
    %94 = arith.addf %93, %92 : vector<8x128xf32>
    %95 = arith.divf %93, %94 : vector<8x128xf32>
    %96 = vector.extract_strided_slice %83 {offsets = [0, 256], sizes = [8, 128], strides = [1, 1]} : vector<8x512xf32> to vector<8x128xf32>
    %97 = math.tanh %96 : vector<8x128xf32>
    %98 = vector.extract_strided_slice %83 {offsets = [0, 384], sizes = [8, 128], strides = [1, 1]} : vector<8x512xf32> to vector<8x128xf32>
    %99 = arith.negf %98 : vector<8x128xf32>
    %100 = math.exp %99 : vector<8x128xf32>
    %cst_51 = arith.constant 1.000000e+00 : f32
    %101 = vector.broadcast %cst_51 : f32 to vector<8x128xf32>
    %102 = arith.addf %101, %100 : vector<8x128xf32>
    %103 = arith.divf %101, %102 : vector<8x128xf32>
    %104 = arith.mulf %95, %58 : vector<8x128xf32>
    %105 = arith.mulf %89, %97 : vector<8x128xf32>
    %106 = arith.addf %104, %105 : vector<8x128xf32>
    %107 = math.tanh %106 : vector<8x128xf32>
    %108 = arith.mulf %103, %107 : vector<8x128xf32>
    %109 = math.tanh %108 : vector<8x128xf32>
    %110 = vector.broadcast %66 : i32 to vector<8x128xi32>
    %111 = arith.cmpi eq, %12, %110 : vector<8x128xi32>
    %112 = arith.select %111, %109, %64 : vector<8x128xi1>, vector<8x128xf32>
    %c2_i32 = arith.constant 2 : i32
    %c8_i32_52 = arith.constant 8 : i32
    %113 = arith.muli %arg0, %c8_i32_52 : i32
    %114 = arith.addi %113, %c2_i32 : i32
    %c8_i32_53 = arith.constant 8 : i32
    %115 = arith.muli %c2_i32, %c8_i32_53 : i32
    %116 = tpu.assume_multiple %115, 8 : i32
    %117 = arith.index_cast %116 : i32 to index
    %c0_54 = arith.constant 0 : index
    %118 = vector.load %arg16[%117, %c0_54] : memref<64x128xf32, #tpu.memory_space<vmem>>, vector<8x128xf32>
    %c0_55 = arith.constant 0 : index
    %c0_56 = arith.constant 0 : index
    %119 = vector.load %arg5[%c0_55, %c0_56] : memref<128x128xf32, #tpu.memory_space<vmem>>, vector<128x128xf32>
    %cst_57 = arith.constant dense<0.000000e+00> : vector<8x128xf32>
    %120 = tpu.matmul %74, %119, %cst_57 {dimension_numbers = #tpu.dot_dimension_numbers<[1], [0], [0], [1], [0, 0, 1, 1], [], []>} : vector<8x128xf32>, vector<128x128xf32>, vector<8x128xf32> -> vector<8x128xf32>
    %121 = arith.addf %118, %120 : vector<8x128xf32>
    %122 = math.tanh %121 : vector<8x128xf32>
    %123 = math.tanh %122 : vector<8x128xf32>
    %c0_58 = arith.constant 0 : index
    %c0_59 = arith.constant 0 : index
    %124 = vector.load %arg6[%c0_58, %c0_59] : memref<128x512xf32, #tpu.memory_space<vmem>>, vector<128x512xf32>
    %cst_60 = arith.constant dense<0.000000e+00> : vector<8x512xf32>
    %125 = tpu.matmul %123, %124, %cst_60 {dimension_numbers = #tpu.dot_dimension_numbers<[1], [0], [0], [1], [0, 0, 1, 1], [], []>} : vector<8x128xf32>, vector<128x512xf32>, vector<8x512xf32> -> vector<8x512xf32>
    %c0_61 = arith.constant 0 : index
    %c0_62 = arith.constant 0 : index
    %126 = vector.load %arg7[%c0_61, %c0_62] : memref<128x512xf32, #tpu.memory_space<vmem>>, vector<128x512xf32>
    %cst_63 = arith.constant dense<0.000000e+00> : vector<8x512xf32>
    %127 = tpu.matmul %108, %126, %cst_63 {dimension_numbers = #tpu.dot_dimension_numbers<[1], [0], [0], [1], [0, 0, 1, 1], [], []>} : vector<8x128xf32>, vector<128x512xf32>, vector<8x512xf32> -> vector<8x512xf32>
    %128 = arith.addf %125, %127 : vector<8x512xf32>
    %c0_64 = arith.constant 0 : index
    %c0_65 = arith.constant 0 : index
    %129 = vector.load %arg8[%c0_64, %c0_65] : memref<1x512xf32, #tpu.memory_space<vmem>>, vector<1x512xf32>
    %130 = vector.broadcast %129 : vector<1x512xf32> to vector<8x512xf32>
    %131 = arith.addf %128, %130 : vector<8x512xf32>
    %132 = vector.extract_strided_slice %131 {offsets = [0, 0], sizes = [8, 128], strides = [1, 1]} : vector<8x512xf32> to vector<8x128xf32>
    %133 = arith.negf %132 : vector<8x128xf32>
    %134 = math.exp %133 : vector<8x128xf32>
    %cst_66 = arith.constant 1.000000e+00 : f32
    %135 = vector.broadcast %cst_66 : f32 to vector<8x128xf32>
    %136 = arith.addf %135, %134 : vector<8x128xf32>
    %137 = arith.divf %135, %136 : vector<8x128xf32>
    %138 = vector.extract_strided_slice %131 {offsets = [0, 128], sizes = [8, 128], strides = [1, 1]} : vector<8x512xf32> to vector<8x128xf32>
    %139 = arith.negf %138 : vector<8x128xf32>
    %140 = math.exp %139 : vector<8x128xf32>
    %cst_67 = arith.constant 1.000000e+00 : f32
    %141 = vector.broadcast %cst_67 : f32 to vector<8x128xf32>
    %142 = arith.addf %141, %140 : vector<8x128xf32>
    %143 = arith.divf %141, %142 : vector<8x128xf32>
    %144 = vector.extract_strided_slice %131 {offsets = [0, 256], sizes = [8, 128], strides = [1, 1]} : vector<8x512xf32> to vector<8x128xf32>
    %145 = math.tanh %144 : vector<8x128xf32>
    %146 = vector.extract_strided_slice %131 {offsets = [0, 384], sizes = [8, 128], strides = [1, 1]} : vector<8x512xf32> to vector<8x128xf32>
    %147 = arith.negf %146 : vector<8x128xf32>
    %148 = math.exp %147 : vector<8x128xf32>
    %cst_68 = arith.constant 1.000000e+00 : f32
    %149 = vector.broadcast %cst_68 : f32 to vector<8x128xf32>
    %150 = arith.addf %149, %148 : vector<8x128xf32>
    %151 = arith.divf %149, %150 : vector<8x128xf32>
    %152 = arith.mulf %143, %106 : vector<8x128xf32>
    %153 = arith.mulf %137, %145 : vector<8x128xf32>
    %154 = arith.addf %152, %153 : vector<8x128xf32>
    %155 = math.tanh %154 : vector<8x128xf32>
    %156 = arith.mulf %151, %155 : vector<8x128xf32>
    %157 = math.tanh %156 : vector<8x128xf32>
    %158 = vector.broadcast %114 : i32 to vector<8x128xi32>
    %159 = arith.cmpi eq, %12, %158 : vector<8x128xi32>
    %160 = arith.select %159, %157, %112 : vector<8x128xi1>, vector<8x128xf32>
    %c3_i32 = arith.constant 3 : i32
    %c8_i32_69 = arith.constant 8 : i32
    %161 = arith.muli %arg0, %c8_i32_69 : i32
    %162 = arith.addi %161, %c3_i32 : i32
    %c8_i32_70 = arith.constant 8 : i32
    %163 = arith.muli %c3_i32, %c8_i32_70 : i32
    %164 = tpu.assume_multiple %163, 8 : i32
    %165 = arith.index_cast %164 : i32 to index
    %c0_71 = arith.constant 0 : index
    %166 = vector.load %arg16[%165, %c0_71] : memref<64x128xf32, #tpu.memory_space<vmem>>, vector<8x128xf32>
    %c0_72 = arith.constant 0 : index
    %c0_73 = arith.constant 0 : index
    %167 = vector.load %arg5[%c0_72, %c0_73] : memref<128x128xf32, #tpu.memory_space<vmem>>, vector<128x128xf32>
    %cst_74 = arith.constant dense<0.000000e+00> : vector<8x128xf32>
    %168 = tpu.matmul %122, %167, %cst_74 {dimension_numbers = #tpu.dot_dimension_numbers<[1], [0], [0], [1], [0, 0, 1, 1], [], []>} : vector<8x128xf32>, vector<128x128xf32>, vector<8x128xf32> -> vector<8x128xf32>
    %169 = arith.addf %166, %168 : vector<8x128xf32>
    %170 = math.tanh %169 : vector<8x128xf32>
    %171 = math.tanh %170 : vector<8x128xf32>
    %c0_75 = arith.constant 0 : index
    %c0_76 = arith.constant 0 : index
    %172 = vector.load %arg6[%c0_75, %c0_76] : memref<128x512xf32, #tpu.memory_space<vmem>>, vector<128x512xf32>
    %cst_77 = arith.constant dense<0.000000e+00> : vector<8x512xf32>
    %173 = tpu.matmul %171, %172, %cst_77 {dimension_numbers = #tpu.dot_dimension_numbers<[1], [0], [0], [1], [0, 0, 1, 1], [], []>} : vector<8x128xf32>, vector<128x512xf32>, vector<8x512xf32> -> vector<8x512xf32>
    %c0_78 = arith.constant 0 : index
    %c0_79 = arith.constant 0 : index
    %174 = vector.load %arg7[%c0_78, %c0_79] : memref<128x512xf32, #tpu.memory_space<vmem>>, vector<128x512xf32>
    %cst_80 = arith.constant dense<0.000000e+00> : vector<8x512xf32>
    %175 = tpu.matmul %156, %174, %cst_80 {dimension_numbers = #tpu.dot_dimension_numbers<[1], [0], [0], [1], [0, 0, 1, 1], [], []>} : vector<8x128xf32>, vector<128x512xf32>, vector<8x512xf32> -> vector<8x512xf32>
    %176 = arith.addf %173, %175 : vector<8x512xf32>
    %c0_81 = arith.constant 0 : index
    %c0_82 = arith.constant 0 : index
    %177 = vector.load %arg8[%c0_81, %c0_82] : memref<1x512xf32, #tpu.memory_space<vmem>>, vector<1x512xf32>
    %178 = vector.broadcast %177 : vector<1x512xf32> to vector<8x512xf32>
    %179 = arith.addf %176, %178 : vector<8x512xf32>
    %180 = vector.extract_strided_slice %179 {offsets = [0, 0], sizes = [8, 128], strides = [1, 1]} : vector<8x512xf32> to vector<8x128xf32>
    %181 = arith.negf %180 : vector<8x128xf32>
    %182 = math.exp %181 : vector<8x128xf32>
    %cst_83 = arith.constant 1.000000e+00 : f32
    %183 = vector.broadcast %cst_83 : f32 to vector<8x128xf32>
    %184 = arith.addf %183, %182 : vector<8x128xf32>
    %185 = arith.divf %183, %184 : vector<8x128xf32>
    %186 = vector.extract_strided_slice %179 {offsets = [0, 128], sizes = [8, 128], strides = [1, 1]} : vector<8x512xf32> to vector<8x128xf32>
    %187 = arith.negf %186 : vector<8x128xf32>
    %188 = math.exp %187 : vector<8x128xf32>
    %cst_84 = arith.constant 1.000000e+00 : f32
    %189 = vector.broadcast %cst_84 : f32 to vector<8x128xf32>
    %190 = arith.addf %189, %188 : vector<8x128xf32>
    %191 = arith.divf %189, %190 : vector<8x128xf32>
    %192 = vector.extract_strided_slice %179 {offsets = [0, 256], sizes = [8, 128], strides = [1, 1]} : vector<8x512xf32> to vector<8x128xf32>
    %193 = math.tanh %192 : vector<8x128xf32>
    %194 = vector.extract_strided_slice %179 {offsets = [0, 384], sizes = [8, 128], strides = [1, 1]} : vector<8x512xf32> to vector<8x128xf32>
    %195 = arith.negf %194 : vector<8x128xf32>
    %196 = math.exp %195 : vector<8x128xf32>
    %cst_85 = arith.constant 1.000000e+00 : f32
    %197 = vector.broadcast %cst_85 : f32 to vector<8x128xf32>
    %198 = arith.addf %197, %196 : vector<8x128xf32>
    %199 = arith.divf %197, %198 : vector<8x128xf32>
    %200 = arith.mulf %191, %154 : vector<8x128xf32>
    %201 = arith.mulf %185, %193 : vector<8x128xf32>
    %202 = arith.addf %200, %201 : vector<8x128xf32>
    %203 = math.tanh %202 : vector<8x128xf32>
    %204 = arith.mulf %199, %203 : vector<8x128xf32>
    %205 = math.tanh %204 : vector<8x128xf32>
    %206 = vector.broadcast %162 : i32 to vector<8x128xi32>
    %207 = arith.cmpi eq, %12, %206 : vector<8x128xi32>
    %208 = arith.select %207, %205, %160 : vector<8x128xi1>, vector<8x128xf32>
    %c4_i32 = arith.constant 4 : i32
    %c8_i32_86 = arith.constant 8 : i32
    %209 = arith.muli %arg0, %c8_i32_86 : i32
    %210 = arith.addi %209, %c4_i32 : i32
    %c8_i32_87 = arith.constant 8 : i32
    %211 = arith.muli %c4_i32, %c8_i32_87 : i32
    %212 = tpu.assume_multiple %211, 8 : i32
    %213 = arith.index_cast %212 : i32 to index
    %c0_88 = arith.constant 0 : index
    %214 = vector.load %arg16[%213, %c0_88] : memref<64x128xf32, #tpu.memory_space<vmem>>, vector<8x128xf32>
    %c0_89 = arith.constant 0 : index
    %c0_90 = arith.constant 0 : index
    %215 = vector.load %arg5[%c0_89, %c0_90] : memref<128x128xf32, #tpu.memory_space<vmem>>, vector<128x128xf32>
    %cst_91 = arith.constant dense<0.000000e+00> : vector<8x128xf32>
    %216 = tpu.matmul %170, %215, %cst_91 {dimension_numbers = #tpu.dot_dimension_numbers<[1], [0], [0], [1], [0, 0, 1, 1], [], []>} : vector<8x128xf32>, vector<128x128xf32>, vector<8x128xf32> -> vector<8x128xf32>
    %217 = arith.addf %214, %216 : vector<8x128xf32>
    %218 = math.tanh %217 : vector<8x128xf32>
    %219 = math.tanh %218 : vector<8x128xf32>
    %c0_92 = arith.constant 0 : index
    %c0_93 = arith.constant 0 : index
    %220 = vector.load %arg6[%c0_92, %c0_93] : memref<128x512xf32, #tpu.memory_space<vmem>>, vector<128x512xf32>
    %cst_94 = arith.constant dense<0.000000e+00> : vector<8x512xf32>
    %221 = tpu.matmul %219, %220, %cst_94 {dimension_numbers = #tpu.dot_dimension_numbers<[1], [0], [0], [1], [0, 0, 1, 1], [], []>} : vector<8x128xf32>, vector<128x512xf32>, vector<8x512xf32> -> vector<8x512xf32>
    %c0_95 = arith.constant 0 : index
    %c0_96 = arith.constant 0 : index
    %222 = vector.load %arg7[%c0_95, %c0_96] : memref<128x512xf32, #tpu.memory_space<vmem>>, vector<128x512xf32>
    %cst_97 = arith.constant dense<0.000000e+00> : vector<8x512xf32>
    %223 = tpu.matmul %204, %222, %cst_97 {dimension_numbers = #tpu.dot_dimension_numbers<[1], [0], [0], [1], [0, 0, 1, 1], [], []>} : vector<8x128xf32>, vector<128x512xf32>, vector<8x512xf32> -> vector<8x512xf32>
    %224 = arith.addf %221, %223 : vector<8x512xf32>
    %c0_98 = arith.constant 0 : index
    %c0_99 = arith.constant 0 : index
    %225 = vector.load %arg8[%c0_98, %c0_99] : memref<1x512xf32, #tpu.memory_space<vmem>>, vector<1x512xf32>
    %226 = vector.broadcast %225 : vector<1x512xf32> to vector<8x512xf32>
    %227 = arith.addf %224, %226 : vector<8x512xf32>
    %228 = vector.extract_strided_slice %227 {offsets = [0, 0], sizes = [8, 128], strides = [1, 1]} : vector<8x512xf32> to vector<8x128xf32>
    %229 = arith.negf %228 : vector<8x128xf32>
    %230 = math.exp %229 : vector<8x128xf32>
    %cst_100 = arith.constant 1.000000e+00 : f32
    %231 = vector.broadcast %cst_100 : f32 to vector<8x128xf32>
    %232 = arith.addf %231, %230 : vector<8x128xf32>
    %233 = arith.divf %231, %232 : vector<8x128xf32>
    %234 = vector.extract_strided_slice %227 {offsets = [0, 128], sizes = [8, 128], strides = [1, 1]} : vector<8x512xf32> to vector<8x128xf32>
    %235 = arith.negf %234 : vector<8x128xf32>
    %236 = math.exp %235 : vector<8x128xf32>
    %cst_101 = arith.constant 1.000000e+00 : f32
    %237 = vector.broadcast %cst_101 : f32 to vector<8x128xf32>
    %238 = arith.addf %237, %236 : vector<8x128xf32>
    %239 = arith.divf %237, %238 : vector<8x128xf32>
    %240 = vector.extract_strided_slice %227 {offsets = [0, 256], sizes = [8, 128], strides = [1, 1]} : vector<8x512xf32> to vector<8x128xf32>
    %241 = math.tanh %240 : vector<8x128xf32>
    %242 = vector.extract_strided_slice %227 {offsets = [0, 384], sizes = [8, 128], strides = [1, 1]} : vector<8x512xf32> to vector<8x128xf32>
    %243 = arith.negf %242 : vector<8x128xf32>
    %244 = math.exp %243 : vector<8x128xf32>
    %cst_102 = arith.constant 1.000000e+00 : f32
    %245 = vector.broadcast %cst_102 : f32 to vector<8x128xf32>
    %246 = arith.addf %245, %244 : vector<8x128xf32>
    %247 = arith.divf %245, %246 : vector<8x128xf32>
    %248 = arith.mulf %239, %202 : vector<8x128xf32>
    %249 = arith.mulf %233, %241 : vector<8x128xf32>
    %250 = arith.addf %248, %249 : vector<8x128xf32>
    %251 = math.tanh %250 : vector<8x128xf32>
    %252 = arith.mulf %247, %251 : vector<8x128xf32>
    %253 = math.tanh %252 : vector<8x128xf32>
    %254 = vector.broadcast %210 : i32 to vector<8x128xi32>
    %255 = arith.cmpi eq, %12, %254 : vector<8x128xi32>
    %256 = arith.select %255, %253, %208 : vector<8x128xi1>, vector<8x128xf32>
    %c5_i32 = arith.constant 5 : i32
    %c8_i32_103 = arith.constant 8 : i32
    %257 = arith.muli %arg0, %c8_i32_103 : i32
    %258 = arith.addi %257, %c5_i32 : i32
    %c8_i32_104 = arith.constant 8 : i32
    %259 = arith.muli %c5_i32, %c8_i32_104 : i32
    %260 = tpu.assume_multiple %259, 8 : i32
    %261 = arith.index_cast %260 : i32 to index
    %c0_105 = arith.constant 0 : index
    %262 = vector.load %arg16[%261, %c0_105] : memref<64x128xf32, #tpu.memory_space<vmem>>, vector<8x128xf32>
    %c0_106 = arith.constant 0 : index
    %c0_107 = arith.constant 0 : index
    %263 = vector.load %arg5[%c0_106, %c0_107] : memref<128x128xf32, #tpu.memory_space<vmem>>, vector<128x128xf32>
    %cst_108 = arith.constant dense<0.000000e+00> : vector<8x128xf32>
    %264 = tpu.matmul %218, %263, %cst_108 {dimension_numbers = #tpu.dot_dimension_numbers<[1], [0], [0], [1], [0, 0, 1, 1], [], []>} : vector<8x128xf32>, vector<128x128xf32>, vector<8x128xf32> -> vector<8x128xf32>
    %265 = arith.addf %262, %264 : vector<8x128xf32>
    %266 = math.tanh %265 : vector<8x128xf32>
    %267 = math.tanh %266 : vector<8x128xf32>
    %c0_109 = arith.constant 0 : index
    %c0_110 = arith.constant 0 : index
    %268 = vector.load %arg6[%c0_109, %c0_110] : memref<128x512xf32, #tpu.memory_space<vmem>>, vector<128x512xf32>
    %cst_111 = arith.constant dense<0.000000e+00> : vector<8x512xf32>
    %269 = tpu.matmul %267, %268, %cst_111 {dimension_numbers = #tpu.dot_dimension_numbers<[1], [0], [0], [1], [0, 0, 1, 1], [], []>} : vector<8x128xf32>, vector<128x512xf32>, vector<8x512xf32> -> vector<8x512xf32>
    %c0_112 = arith.constant 0 : index
    %c0_113 = arith.constant 0 : index
    %270 = vector.load %arg7[%c0_112, %c0_113] : memref<128x512xf32, #tpu.memory_space<vmem>>, vector<128x512xf32>
    %cst_114 = arith.constant dense<0.000000e+00> : vector<8x512xf32>
    %271 = tpu.matmul %252, %270, %cst_114 {dimension_numbers = #tpu.dot_dimension_numbers<[1], [0], [0], [1], [0, 0, 1, 1], [], []>} : vector<8x128xf32>, vector<128x512xf32>, vector<8x512xf32> -> vector<8x512xf32>
    %272 = arith.addf %269, %271 : vector<8x512xf32>
    %c0_115 = arith.constant 0 : index
    %c0_116 = arith.constant 0 : index
    %273 = vector.load %arg8[%c0_115, %c0_116] : memref<1x512xf32, #tpu.memory_space<vmem>>, vector<1x512xf32>
    %274 = vector.broadcast %273 : vector<1x512xf32> to vector<8x512xf32>
    %275 = arith.addf %272, %274 : vector<8x512xf32>
    %276 = vector.extract_strided_slice %275 {offsets = [0, 0], sizes = [8, 128], strides = [1, 1]} : vector<8x512xf32> to vector<8x128xf32>
    %277 = arith.negf %276 : vector<8x128xf32>
    %278 = math.exp %277 : vector<8x128xf32>
    %cst_117 = arith.constant 1.000000e+00 : f32
    %279 = vector.broadcast %cst_117 : f32 to vector<8x128xf32>
    %280 = arith.addf %279, %278 : vector<8x128xf32>
    %281 = arith.divf %279, %280 : vector<8x128xf32>
    %282 = vector.extract_strided_slice %275 {offsets = [0, 128], sizes = [8, 128], strides = [1, 1]} : vector<8x512xf32> to vector<8x128xf32>
    %283 = arith.negf %282 : vector<8x128xf32>
    %284 = math.exp %283 : vector<8x128xf32>
    %cst_118 = arith.constant 1.000000e+00 : f32
    %285 = vector.broadcast %cst_118 : f32 to vector<8x128xf32>
    %286 = arith.addf %285, %284 : vector<8x128xf32>
    %287 = arith.divf %285, %286 : vector<8x128xf32>
    %288 = vector.extract_strided_slice %275 {offsets = [0, 256], sizes = [8, 128], strides = [1, 1]} : vector<8x512xf32> to vector<8x128xf32>
    %289 = math.tanh %288 : vector<8x128xf32>
    %290 = vector.extract_strided_slice %275 {offsets = [0, 384], sizes = [8, 128], strides = [1, 1]} : vector<8x512xf32> to vector<8x128xf32>
    %291 = arith.negf %290 : vector<8x128xf32>
    %292 = math.exp %291 : vector<8x128xf32>
    %cst_119 = arith.constant 1.000000e+00 : f32
    %293 = vector.broadcast %cst_119 : f32 to vector<8x128xf32>
    %294 = arith.addf %293, %292 : vector<8x128xf32>
    %295 = arith.divf %293, %294 : vector<8x128xf32>
    %296 = arith.mulf %287, %250 : vector<8x128xf32>
    %297 = arith.mulf %281, %289 : vector<8x128xf32>
    %298 = arith.addf %296, %297 : vector<8x128xf32>
    %299 = math.tanh %298 : vector<8x128xf32>
    %300 = arith.mulf %295, %299 : vector<8x128xf32>
    %301 = math.tanh %300 : vector<8x128xf32>
    %302 = vector.broadcast %258 : i32 to vector<8x128xi32>
    %303 = arith.cmpi eq, %12, %302 : vector<8x128xi32>
    %304 = arith.select %303, %301, %256 : vector<8x128xi1>, vector<8x128xf32>
    %c6_i32 = arith.constant 6 : i32
    %c8_i32_120 = arith.constant 8 : i32
    %305 = arith.muli %arg0, %c8_i32_120 : i32
    %306 = arith.addi %305, %c6_i32 : i32
    %c8_i32_121 = arith.constant 8 : i32
    %307 = arith.muli %c6_i32, %c8_i32_121 : i32
    %308 = tpu.assume_multiple %307, 8 : i32
    %309 = arith.index_cast %308 : i32 to index
    %c0_122 = arith.constant 0 : index
    %310 = vector.load %arg16[%309, %c0_122] : memref<64x128xf32, #tpu.memory_space<vmem>>, vector<8x128xf32>
    %c0_123 = arith.constant 0 : index
    %c0_124 = arith.constant 0 : index
    %311 = vector.load %arg5[%c0_123, %c0_124] : memref<128x128xf32, #tpu.memory_space<vmem>>, vector<128x128xf32>
    %cst_125 = arith.constant dense<0.000000e+00> : vector<8x128xf32>
    %312 = tpu.matmul %266, %311, %cst_125 {dimension_numbers = #tpu.dot_dimension_numbers<[1], [0], [0], [1], [0, 0, 1, 1], [], []>} : vector<8x128xf32>, vector<128x128xf32>, vector<8x128xf32> -> vector<8x128xf32>
    %313 = arith.addf %310, %312 : vector<8x128xf32>
    %314 = math.tanh %313 : vector<8x128xf32>
    %315 = math.tanh %314 : vector<8x128xf32>
    %c0_126 = arith.constant 0 : index
    %c0_127 = arith.constant 0 : index
    %316 = vector.load %arg6[%c0_126, %c0_127] : memref<128x512xf32, #tpu.memory_space<vmem>>, vector<128x512xf32>
    %cst_128 = arith.constant dense<0.000000e+00> : vector<8x512xf32>
    %317 = tpu.matmul %315, %316, %cst_128 {dimension_numbers = #tpu.dot_dimension_numbers<[1], [0], [0], [1], [0, 0, 1, 1], [], []>} : vector<8x128xf32>, vector<128x512xf32>, vector<8x512xf32> -> vector<8x512xf32>
    %c0_129 = arith.constant 0 : index
    %c0_130 = arith.constant 0 : index
    %318 = vector.load %arg7[%c0_129, %c0_130] : memref<128x512xf32, #tpu.memory_space<vmem>>, vector<128x512xf32>
    %cst_131 = arith.constant dense<0.000000e+00> : vector<8x512xf32>
    %319 = tpu.matmul %300, %318, %cst_131 {dimension_numbers = #tpu.dot_dimension_numbers<[1], [0], [0], [1], [0, 0, 1, 1], [], []>} : vector<8x128xf32>, vector<128x512xf32>, vector<8x512xf32> -> vector<8x512xf32>
    %320 = arith.addf %317, %319 : vector<8x512xf32>
    %c0_132 = arith.constant 0 : index
    %c0_133 = arith.constant 0 : index
    %321 = vector.load %arg8[%c0_132, %c0_133] : memref<1x512xf32, #tpu.memory_space<vmem>>, vector<1x512xf32>
    %322 = vector.broadcast %321 : vector<1x512xf32> to vector<8x512xf32>
    %323 = arith.addf %320, %322 : vector<8x512xf32>
    %324 = vector.extract_strided_slice %323 {offsets = [0, 0], sizes = [8, 128], strides = [1, 1]} : vector<8x512xf32> to vector<8x128xf32>
    %325 = arith.negf %324 : vector<8x128xf32>
    %326 = math.exp %325 : vector<8x128xf32>
    %cst_134 = arith.constant 1.000000e+00 : f32
    %327 = vector.broadcast %cst_134 : f32 to vector<8x128xf32>
    %328 = arith.addf %327, %326 : vector<8x128xf32>
    %329 = arith.divf %327, %328 : vector<8x128xf32>
    %330 = vector.extract_strided_slice %323 {offsets = [0, 128], sizes = [8, 128], strides = [1, 1]} : vector<8x512xf32> to vector<8x128xf32>
    %331 = arith.negf %330 : vector<8x128xf32>
    %332 = math.exp %331 : vector<8x128xf32>
    %cst_135 = arith.constant 1.000000e+00 : f32
    %333 = vector.broadcast %cst_135 : f32 to vector<8x128xf32>
    %334 = arith.addf %333, %332 : vector<8x128xf32>
    %335 = arith.divf %333, %334 : vector<8x128xf32>
    %336 = vector.extract_strided_slice %323 {offsets = [0, 256], sizes = [8, 128], strides = [1, 1]} : vector<8x512xf32> to vector<8x128xf32>
    %337 = math.tanh %336 : vector<8x128xf32>
    %338 = vector.extract_strided_slice %323 {offsets = [0, 384], sizes = [8, 128], strides = [1, 1]} : vector<8x512xf32> to vector<8x128xf32>
    %339 = arith.negf %338 : vector<8x128xf32>
    %340 = math.exp %339 : vector<8x128xf32>
    %cst_136 = arith.constant 1.000000e+00 : f32
    %341 = vector.broadcast %cst_136 : f32 to vector<8x128xf32>
    %342 = arith.addf %341, %340 : vector<8x128xf32>
    %343 = arith.divf %341, %342 : vector<8x128xf32>
    %344 = arith.mulf %335, %298 : vector<8x128xf32>
    %345 = arith.mulf %329, %337 : vector<8x128xf32>
    %346 = arith.addf %344, %345 : vector<8x128xf32>
    %347 = math.tanh %346 : vector<8x128xf32>
    %348 = arith.mulf %343, %347 : vector<8x128xf32>
    %349 = math.tanh %348 : vector<8x128xf32>
    %350 = vector.broadcast %306 : i32 to vector<8x128xi32>
    %351 = arith.cmpi eq, %12, %350 : vector<8x128xi32>
    %352 = arith.select %351, %349, %304 : vector<8x128xi1>, vector<8x128xf32>
    %c7_i32 = arith.constant 7 : i32
    %c8_i32_137 = arith.constant 8 : i32
    %353 = arith.muli %arg0, %c8_i32_137 : i32
    %354 = arith.addi %353, %c7_i32 : i32
    %c8_i32_138 = arith.constant 8 : i32
    %355 = arith.muli %c7_i32, %c8_i32_138 : i32
    %356 = tpu.assume_multiple %355, 8 : i32
    %357 = arith.index_cast %356 : i32 to index
    %c0_139 = arith.constant 0 : index
    %358 = vector.load %arg16[%357, %c0_139] : memref<64x128xf32, #tpu.memory_space<vmem>>, vector<8x128xf32>
    %c0_140 = arith.constant 0 : index
    %c0_141 = arith.constant 0 : index
    %359 = vector.load %arg5[%c0_140, %c0_141] : memref<128x128xf32, #tpu.memory_space<vmem>>, vector<128x128xf32>
    %cst_142 = arith.constant dense<0.000000e+00> : vector<8x128xf32>
    %360 = tpu.matmul %314, %359, %cst_142 {dimension_numbers = #tpu.dot_dimension_numbers<[1], [0], [0], [1], [0, 0, 1, 1], [], []>} : vector<8x128xf32>, vector<128x128xf32>, vector<8x128xf32> -> vector<8x128xf32>
    %361 = arith.addf %358, %360 : vector<8x128xf32>
    %362 = math.tanh %361 : vector<8x128xf32>
    %363 = math.tanh %362 : vector<8x128xf32>
    %c0_143 = arith.constant 0 : index
    %c0_144 = arith.constant 0 : index
    %364 = vector.load %arg6[%c0_143, %c0_144] : memref<128x512xf32, #tpu.memory_space<vmem>>, vector<128x512xf32>
    %cst_145 = arith.constant dense<0.000000e+00> : vector<8x512xf32>
    %365 = tpu.matmul %363, %364, %cst_145 {dimension_numbers = #tpu.dot_dimension_numbers<[1], [0], [0], [1], [0, 0, 1, 1], [], []>} : vector<8x128xf32>, vector<128x512xf32>, vector<8x512xf32> -> vector<8x512xf32>
    %c0_146 = arith.constant 0 : index
    %c0_147 = arith.constant 0 : index
    %366 = vector.load %arg7[%c0_146, %c0_147] : memref<128x512xf32, #tpu.memory_space<vmem>>, vector<128x512xf32>
    %cst_148 = arith.constant dense<0.000000e+00> : vector<8x512xf32>
    %367 = tpu.matmul %348, %366, %cst_148 {dimension_numbers = #tpu.dot_dimension_numbers<[1], [0], [0], [1], [0, 0, 1, 1], [], []>} : vector<8x128xf32>, vector<128x512xf32>, vector<8x512xf32> -> vector<8x512xf32>
    %368 = arith.addf %365, %367 : vector<8x512xf32>
    %c0_149 = arith.constant 0 : index
    %c0_150 = arith.constant 0 : index
    %369 = vector.load %arg8[%c0_149, %c0_150] : memref<1x512xf32, #tpu.memory_space<vmem>>, vector<1x512xf32>
    %370 = vector.broadcast %369 : vector<1x512xf32> to vector<8x512xf32>
    %371 = arith.addf %368, %370 : vector<8x512xf32>
    %372 = vector.extract_strided_slice %371 {offsets = [0, 0], sizes = [8, 128], strides = [1, 1]} : vector<8x512xf32> to vector<8x128xf32>
    %373 = arith.negf %372 : vector<8x128xf32>
    %374 = math.exp %373 : vector<8x128xf32>
    %cst_151 = arith.constant 1.000000e+00 : f32
    %375 = vector.broadcast %cst_151 : f32 to vector<8x128xf32>
    %376 = arith.addf %375, %374 : vector<8x128xf32>
    %377 = arith.divf %375, %376 : vector<8x128xf32>
    %378 = vector.extract_strided_slice %371 {offsets = [0, 128], sizes = [8, 128], strides = [1, 1]} : vector<8x512xf32> to vector<8x128xf32>
    %379 = arith.negf %378 : vector<8x128xf32>
    %380 = math.exp %379 : vector<8x128xf32>
    %cst_152 = arith.constant 1.000000e+00 : f32
    %381 = vector.broadcast %cst_152 : f32 to vector<8x128xf32>
    %382 = arith.addf %381, %380 : vector<8x128xf32>
    %383 = arith.divf %381, %382 : vector<8x128xf32>
    %384 = vector.extract_strided_slice %371 {offsets = [0, 256], sizes = [8, 128], strides = [1, 1]} : vector<8x512xf32> to vector<8x128xf32>
    %385 = math.tanh %384 : vector<8x128xf32>
    %386 = vector.extract_strided_slice %371 {offsets = [0, 384], sizes = [8, 128], strides = [1, 1]} : vector<8x512xf32> to vector<8x128xf32>
    %387 = arith.negf %386 : vector<8x128xf32>
    %388 = math.exp %387 : vector<8x128xf32>
    %cst_153 = arith.constant 1.000000e+00 : f32
    %389 = vector.broadcast %cst_153 : f32 to vector<8x128xf32>
    %390 = arith.addf %389, %388 : vector<8x128xf32>
    %391 = arith.divf %389, %390 : vector<8x128xf32>
    %392 = arith.mulf %383, %346 : vector<8x128xf32>
    %393 = arith.mulf %377, %385 : vector<8x128xf32>
    %394 = arith.addf %392, %393 : vector<8x128xf32>
    %395 = math.tanh %394 : vector<8x128xf32>
    %396 = arith.mulf %391, %395 : vector<8x128xf32>
    %397 = math.tanh %396 : vector<8x128xf32>
    %398 = vector.broadcast %354 : i32 to vector<8x128xi32>
    %399 = arith.cmpi eq, %12, %398 : vector<8x128xi32>
    %400 = arith.select %399, %397, %352 : vector<8x128xi1>, vector<8x128xf32>
    %c8_i32_154 = arith.constant 8 : i32
    %c0_155 = arith.constant 0 : index
    %c0_156 = arith.constant 0 : index
    %401 = vector.load %arg12[%c0_155, %c0_156] : memref<8x128xf32, #tpu.memory_space<vmem>>, vector<8x128xf32>
    tpu.vector_store %arg12[%c0_155, %c0_156], %362 {strides = array<i32>} : memref<8x128xf32, #tpu.memory_space<vmem>>, vector<8x128xf32>,
    %c0_157 = arith.constant 0 : index
    %c0_158 = arith.constant 0 : index
    %402 = vector.load %arg13[%c0_157, %c0_158] : memref<8x128xf32, #tpu.memory_space<vmem>>, vector<8x128xf32>
    tpu.vector_store %arg13[%c0_157, %c0_158], %396 {strides = array<i32>} : memref<8x128xf32, #tpu.memory_space<vmem>>, vector<8x128xf32>,
    %c0_159 = arith.constant 0 : index
    %c0_160 = arith.constant 0 : index
    %403 = vector.load %arg14[%c0_159, %c0_160] : memref<8x128xf32, #tpu.memory_space<vmem>>, vector<8x128xf32>
    tpu.vector_store %arg14[%c0_159, %c0_160], %394 {strides = array<i32>} : memref<8x128xf32, #tpu.memory_space<vmem>>, vector<8x128xf32>,
    %c0_161 = arith.constant 0 : index
    %c0_162 = arith.constant 0 : index
    %404 = vector.load %arg15[%c0_161, %c0_162] : memref<8x128xf32, #tpu.memory_space<vmem>>, vector<8x128xf32>
    tpu.vector_store %arg15[%c0_161, %c0_162], %400 {strides = array<i32>} : memref<8x128xf32, #tpu.memory_space<vmem>>, vector<8x128xf32>,
    %c2_i32_163 = arith.constant 2 : i32
    %405 = arith.cmpi eq, %arg0, %c2_i32_163 : i32
    %406 = arith.extui %405 : i1 to i32
    %c0_i32_164 = arith.constant 0 : i32
    %407 = arith.cmpi ne, %406, %c0_i32_164 : i32
    scf.if %407 {
      %c0_165 = arith.constant 0 : index
      %c0_166 = arith.constant 0 : index
      %408 = vector.load %arg15[%c0_165, %c0_166] : memref<8x128xf32, #tpu.memory_space<vmem>>, vector<8x128xf32>
      %c0_167 = arith.constant 0 : index
      %c0_168 = arith.constant 0 : index
      %409 = vector.load %arg9[%c0_167, %c0_168] : memref<128x128xf32, #tpu.memory_space<vmem>>, vector<128x128xf32>
      %cst_169 = arith.constant dense<0.000000e+00> : vector<8x128xf32>
      %410 = tpu.matmul %408, %409, %cst_169 {dimension_numbers = #tpu.dot_dimension_numbers<[1], [0], [0], [1], [0, 0, 1, 1], [], []>} : vector<8x128xf32>, vector<128x128xf32>, vector<8x128xf32> -> vector<8x128xf32>
      %c0_170 = arith.constant 0 : index
      %c0_171 = arith.constant 0 : index
      %411 = vector.load %arg10[%c0_170, %c0_171] : memref<1x128xf32, #tpu.memory_space<vmem>>, vector<1x128xf32>
      %412 = vector.broadcast %411 : vector<1x128xf32> to vector<8x128xf32>
      %413 = arith.addf %410, %412 : vector<8x128xf32>
      %414 = tpu.iota {dimensions = array<i32: 1>} : vector<8x128xi32>
      %c8_i32_172 = arith.constant 8 : i32
      %415 = vector.broadcast %c8_i32_172 : i32 to vector<8x128xi32>
      %416 = arith.cmpi slt, %414, %415 : vector<8x128xi32>
      %cst_173 = arith.constant -1.000000e+30 : f32
      %417 = vector.broadcast %cst_173 : f32 to vector<8x128xf32>
      %418 = arith.select %416, %413, %417 : vector<8x128xi1>, vector<8x128xf32>
      %cst_174 = arith.constant dense<0xFF800000> : vector<8xf32>
      %419 = vector.multi_reduction <maximumf>, %418, %cst_174 [1] : vector<8x128xf32> to vector<8xf32>
      %420 = vector.shape_cast %419 : vector<8xf32> to vector<8x1xf32>
      %421 = vector.broadcast %420 : vector<8x1xf32> to vector<8x128xf32>
      %422 = arith.subf %418, %421 : vector<8x128xf32>
      %423 = math.exp %422 : vector<8x128xf32>
      %cst_175 = arith.constant dense<0.000000e+00> : vector<8xf32>
      %424 = vector.multi_reduction <add>, %423, %cst_175 [1] : vector<8x128xf32> to vector<8xf32>
      %425 = vector.shape_cast %424 : vector<8xf32> to vector<8x1xf32>
      %426 = math.log %425 : vector<8x1xf32>
      %427 = arith.addf %420, %426 : vector<8x1xf32>
      %428 = vector.broadcast %427 : vector<8x1xf32> to vector<8x128xf32>
      %429 = arith.subf %418, %428 : vector<8x128xf32>
      %c0_176 = arith.constant 0 : index
      %c0_177 = arith.constant 0 : index
      %430 = vector.load %arg11[%c0_176, %c0_177] : memref<8x128xf32, #tpu.memory_space<vmem>>, vector<8x128xf32>
      tpu.vector_store %arg11[%c0_176, %c0_177], %429 {strides = array<i32>} : memref<8x128xf32, #tpu.memory_space<vmem>>, vector<8x128xf32>,
    } else {
    }
    return
  }
  func.func @transform_0(%arg0: i32) -> (i32, i32) {
    %c0_i32 = arith.constant 0 : i32
    %c0_i32_0 = arith.constant 0 : i32
    %c0_i32_1 = arith.constant 0 : i32
    return %c0_i32, %c0_i32_0 : i32, i32
  }
  func.func @transform_1(%arg0: i32) -> (i32, i32) {
    %c0_i32 = arith.constant 0 : i32
    %c0_i32_0 = arith.constant 0 : i32
    return %arg0, %c0_i32 : i32, i32
  }
  func.func @transform_2(%arg0: i32) -> (i32, i32) {
    %c0_i32 = arith.constant 0 : i32
    %c0_i32_0 = arith.constant 0 : i32
    %c0_i32_1 = arith.constant 0 : i32
    return %c0_i32, %c0_i32_0 : i32, i32
  }
  func.func @transform_3(%arg0: i32) -> (i32, i32) {
    %c0_i32 = arith.constant 0 : i32
    %c0_i32_0 = arith.constant 0 : i32
    %c0_i32_1 = arith.constant 0 : i32
    return %c0_i32, %c0_i32_0 : i32, i32
  }
  func.func @transform_4(%arg0: i32) -> (i32, i32) {
    %c0_i32 = arith.constant 0 : i32
    %c0_i32_0 = arith.constant 0 : i32
    %c0_i32_1 = arith.constant 0 : i32
    return %c0_i32, %c0_i32_0 : i32, i32
  }
  func.func @transform_5(%arg0: i32) -> (i32, i32) {
    %c0_i32 = arith.constant 0 : i32
    %c0_i32_0 = arith.constant 0 : i32
    %c0_i32_1 = arith.constant 0 : i32
    return %c0_i32, %c0_i32_0 : i32, i32
  }
  func.func @transform_6(%arg0: i32) -> (i32, i32) {
    %c0_i32 = arith.constant 0 : i32
    %c0_i32_0 = arith.constant 0 : i32
    %c0_i32_1 = arith.constant 0 : i32
    return %c0_i32, %c0_i32_0 : i32, i32
  }
  func.func @transform_7(%arg0: i32) -> (i32, i32) {
    %c0_i32 = arith.constant 0 : i32
    %c0_i32_0 = arith.constant 0 : i32
    %c0_i32_1 = arith.constant 0 : i32
    return %c0_i32, %c0_i32_0 : i32, i32
  }
  func.func @transform_8(%arg0: i32) -> (i32, i32) {
    %c0_i32 = arith.constant 0 : i32
    %c0_i32_0 = arith.constant 0 : i32
    %c0_i32_1 = arith.constant 0 : i32
    return %c0_i32, %c0_i32_0 : i32, i32
  }
  func.func @transform_9(%arg0: i32) -> (i32, i32) {
    %c0_i32 = arith.constant 0 : i32
    %c0_i32_0 = arith.constant 0 : i32
    %c0_i32_1 = arith.constant 0 : i32
    return %c0_i32, %c0_i32_0 : i32, i32
  }
  func.func @transform_10(%arg0: i32) -> (i32, i32) {
    %c0_i32 = arith.constant 0 : i32
    %c0_i32_0 = arith.constant 0 : i32
    %c0_i32_1 = arith.constant 0 : i32
    return %c0_i32, %c0_i32_0 : i32, i32
  }
}

</mosaic_0001>

<llo_original>
// kernel: tpu_custom_call.1
$region0: #{tpu_custom_call.1}
  #allocation0 [shape = 'u32[]', space=smem, size = 0x4, offset = 0x4, fixed_abs, tag = 'smem constant byte address 0x4 - core index']
  #allocation1 [shape = 'u32[144,128]{1,0:T(1,128)}', space=vmem, size = 0x12000, scoped, tag = 'internal scratch']
  #allocation2 [shape = 'f32[8,128]{1,0:T(8,128)}', space=vmem, size = 0x1000, scoped, tag = 'scratch operand']
  #allocation3 [shape = 'f32[8,128]{1,0:T(8,128)}', space=vmem, size = 0x1000, scoped, tag = 'scratch operand']
  #allocation4 [shape = 'f32[8,128]{1,0:T(8,128)}', space=vmem, size = 0x1000, scoped, tag = 'scratch operand']
  #allocation5 [shape = 'f32[8,128]{1,0:T(8,128)}', space=vmem, size = 0x1000, scoped, tag = 'scratch operand']
  #allocation6 [shape = 'f32[64,128]{1,0:T(8,128)}', space=vmem, size = 0x8000, scoped, tag = 'scratch operand']
  %s0 = inlined_call_operand.vmem [shape: s32[8,1], index: 0, kind: input, shape index: {}]
  %s1 = inlined_call_operand.vmem [shape: f32[192,16], index: 1, kind: input, shape index: {}]
  %s2 = inlined_call_operand.vmem [shape: f32[16,128], index: 2, kind: input, shape index: {}]
  %s3 = inlined_call_operand.vmem [shape: f32[1,128], index: 3, kind: input, shape index: {}]
  %s4 = inlined_call_operand.vmem [shape: f32[128,128], index: 4, kind: input, shape index: {}]
  %s5 = inlined_call_operand.hbm [shape: f32[128,512], index: 5, kind: input, shape index: {}]
  %s6 = inlined_call_operand.hbm [shape: f32[128,512], index: 6, kind: input, shape index: {}]
  %s7 = inlined_call_operand.vmem [shape: f32[1,512], index: 7, kind: input, shape index: {}]
  %s8 = inlined_call_operand.hbm [shape: f32[128,128], index: 8, kind: input, shape index: {}]
  %s9 = inlined_call_operand.vmem [shape: f32[1,128], index: 9, kind: input, shape index: {}]
  %s10 = inlined_call_operand.hbm [shape: f32[8,128], index: 10, kind: output, shape index: {}]
  %s11 = sld [smem:[#allocation0]]
  $region93: #{tpu_custom_call.1} parent=0
    _
  %s13 = ssub.s32 1, %s11
  %s14 = scalar_select 0, %s13, %s11
  $region1: #{tpu_custom_call.1} parent=0
    #allocation7 [shape = 'u8[262144]{0}', space=vmem, size = 0x40000, scoped, tag = 'input window, operand 5, single buffered']
    #allocation8 [shape = 's32[2]{0}', space=sflag, size = 0x8, scoped, tag = 'scoped memory for tpu_custom_call.1']
    #allocation9 [shape = 's32[2]{0}', space=sflag, size = 0x8, scoped, tag = 'scoped memory for tpu_custom_call.1']
    #allocation10 [shape = 'u8[262144]{0}', space=vmem, size = 0x40000, scoped, tag = 'input window, operand 6, single buffered']
    #allocation11 [shape = 's32[1]{0}', space=sflag, size = 0x4, scoped, tag = 'scoped memory for tpu_custom_call.1']
    #allocation12 [shape = 'u8[65536]{0}', space=vmem, size = 0x10000, scoped, tag = 'input window, operand 8, single buffered']
    #allocation13 [shape = 'u8[4096]{0}', space=vmem, size = 0x1000, scoped, tag = 'output window, operand 0, single buffered']
    %15 = vsyncpa [#allocation8], 0
    %16 = vsyncpa [#allocation11], 0
    %17 = vsyncpa [#allocation9], 0
    loop: start=0, step=1, limit=5
    $region2: #{tpu_custom_call.1} parent=1 // loop_pre_header
      _
    $region3: #{tpu_custom_call.1} parent=1 // loop_header
      %s19 = sphi 0, %s23
      %p20 = scmp.ge.s32.totalorder %s19, 5
      %s27 = sphi 0, %s27
      %s29 = sphi 0, %s27
      %s30 = sphi 0, %s29
      %s44 = sphi 0, %s30
      %s50 = sphi 0, %s52
      %s53 = sphi 0, %s50
      %s54 = sphi 0, %s53
      %s70 = sphi 0, %s54
      %s74 = sphi 0, %s74
      %s76 = sphi 0, %s74
      %s77 = sphi 0, %s76
      %s91 = sphi 0, %s77
      %s95 = sphi 0, %s95
      %s97 = sphi 0, %s95
      %s98 = sphi 0, %s97
      %s112 = sphi 0, %s98
      %s116 = sphi 0, %s116
      %s118 = sphi 0, %s116
      %s119 = sphi 0, %s118
      %s133 = sphi 0, %s119
      %s137 = sphi 0, %s137
      %s139 = sphi 0, %s137
      %s140 = sphi 0, %s139
      %s154 = sphi 0, %s140
      %s158 = sphi 0, %s158
      %s160 = sphi 0, %s158
      %s161 = sphi 0, %s160
      %s175 = sphi 0, %s161
      %s179 = sphi 0, %s179
      %s181 = sphi 0, %s179
      %s182 = sphi 0, %s181
      %s196 = sphi 0, %s182
      %s200 = sphi 0, %s200
      %s202 = sphi 0, %s200
      %s203 = sphi 0, %s202
      %s217 = sphi 0, %s203
      %s221 = sphi 0, %s221
      %s223 = sphi 0, %s221
      %s224 = sphi 0, %s223
      %s238 = sphi 0, %s224
      %s242 = sphi 0, %s242
      %s244 = sphi 0, %s242
      %s245 = sphi 0, %s244
      %s259 = sphi 0, %s245
    $region4: #{tpu_custom_call.1} parent=1 // loop_header_branch
      %22 = sbr.rel (%p20) target = $region8
    $region5: #{tpu_custom_call.1} parent=1 // loop_body
      %s24 = ssub.s32 %s19, 1
      %s25 = ssub.s32 %s19, 2
      %s26 = sadd.s32 %s19, 1
      %s28 = sadd.s32 %s27, 1
      %p31 = scmp.eq.s32.totalorder %s19, 2
      %p32 = scmp.ne.s32.totalorder %s27, %s29
      %p33 = scmp.eq.s32.totalorder %s19, 0
      %p34 = por %p32, %p33
      %p35 = scmp.ne.s32.totalorder %s27, %s29
      %p36 = scmp.eq.s32.totalorder %s24, 2
      %p37 = por %p35, %p36
      %p38 = scmp.ne.s32.totalorder %s29, %s30
      %p39 = scmp.eq.s32.totalorder %s24, 0
      %p40 = por %p38, %p39
      %p41 = scmp.ne.s32.totalorder %s29, %s30
      %p42 = scmp.eq.s32.totalorder %s25, 2
      %p43 = por %p41, %p42
      %p45 = scmp.ne.s32.totalorder %s30, %s44
      %p46 = scmp.eq.s32.totalorder %s25, 0
      %p47 = por %p45, %p46
      %s48 = ssub.s32 %s19, %s26
      %p49 = scmp.eq.s32.totalorder %s48, 0
      %s51 = sadd.s32 %s50, 1
      %s52 = scalar_select %p49, %s50, %s51
      %p55 = pneg %p49
      %p56 = scmp.eq.s32.totalorder %s19, 2
      %p57 = por %p55, %p56
      %p58 = scmp.ne.s32.totalorder %s50, %s53
      %p59 = scmp.eq.s32.totalorder %s19, 0
      %p60 = por %p58, %p59
      %p61 = scmp.ne.s32.totalorder %s50, %s53
      %p62 = scmp.eq.s32.totalorder %s24, 2
      %p63 = por %p61, %p62
      %p64 = scmp.ne.s32.totalorder %s53, %s54
      %p65 = scmp.eq.s32.totalorder %s24, 0
      %p66 = por %p64, %p65
      %p67 = scmp.ne.s32.totalorder %s53, %s54
      %p68 = scmp.eq.s32.totalorder %s25, 2
      %p69 = por %p67, %p68
      %p71 = scmp.ne.s32.totalorder %s54, %s70
      %p72 = scmp.eq.s32.totalorder %s25, 0
      %p73 = por %p71, %p72
      %s75 = sadd.s32 %s74, 1
      %p78 = scmp.eq.s32.totalorder %s19, 2
      %p79 = scmp.ne.s32.totalorder %s74, %s76
      %p80 = scmp.eq.s32.totalorder %s19, 0
      %p81 = por %p79, %p80
      %p82 = scmp.ne.s32.totalorder %s74, %s76
      %p83 = scmp.eq.s32.totalorder %s24, 2
      %p84 = por %p82, %p83
      %p85 = scmp.ne.s32.totalorder %s76, %s77
      %p86 = scmp.eq.s32.totalorder %s24, 0
      %p87 = por %p85, %p86
      %p88 = scmp.ne.s32.totalorder %s76, %s77
      %p89 = scmp.eq.s32.totalorder %s25, 2
      %p90 = por %p88, %p89
      %p92 = scmp.ne.s32.totalorder %s77, %s91
      %p93 = scmp.eq.s32.totalorder %s25, 0
      %p94 = por %p92, %p93
      %s96 = sadd.s32 %s95, 1
      %p99 = scmp.eq.s32.totalorder %s19, 2
      %p100 = scmp.ne.s32.totalorder %s95, %s97
      %p101 = scmp.eq.s32.totalorder %s19, 0
      %p102 = por %p100, %p101
      %p103 = scmp.ne.s32.totalorder %s95, %s97
      %p104 = scmp.eq.s32.totalorder %s24, 2
      %p105 = por %p103, %p104
      %p106 = scmp.ne.s32.totalorder %s97, %s98
      %p107 = scmp.eq.s32.totalorder %s24, 0
      %p108 = por %p106, %p107
      %p109 = scmp.ne.s32.totalorder %s97, %s98
      %p110 = scmp.eq.s32.totalorder %s25, 2
      %p111 = por %p109, %p110
      %p113 = scmp.ne.s32.totalorder %s98, %s112
      %p114 = scmp.eq.s32.totalorder %s25, 0
      %p115 = por %p113, %p114
      %s117 = sadd.s32 %s116, 1
      %p120 = scmp.eq.s32.totalorder %s19, 2
      %p121 = scmp.ne.s32.totalorder %s116, %s118
      %p122 = scmp.eq.s32.totalorder %s19, 0
      %p123 = por %p121, %p122
      %p124 = scmp.ne.s32.totalorder %s116, %s118
      %p125 = scmp.eq.s32.totalorder %s24, 2
      %p126 = por %p124, %p125
      %p127 = scmp.ne.s32.totalorder %s118, %s119
      %p128 = scmp.eq.s32.totalorder %s24, 0
      %p129 = por %p127, %p128
      %p130 = scmp.ne.s32.totalorder %s118, %s119
      %p131 = scmp.eq.s32.totalorder %s25, 2
      %p132 = por %p130, %p131
      %p134 = scmp.ne.s32.totalorder %s119, %s133
      %p135 = scmp.eq.s32.totalorder %s25, 0
      %p136 = por %p134, %p135
      %s138 = sadd.s32 %s137, 1
      %p141 = scmp.eq.s32.totalorder %s19, 2
      %p142 = scmp.ne.s32.totalorder %s137, %s139
      %p143 = scmp.eq.s32.totalorder %s19, 0
      %p144 = por %p142, %p143
      %p145 = scmp.ne.s32.totalorder %s137, %s139
      %p146 = scmp.eq.s32.totalorder %s24, 2
      %p147 = por %p145, %p146
      %p148 = scmp.ne.s32.totalorder %s139, %s140
      %p149 = scmp.eq.s32.totalorder %s24, 0
      %p150 = por %p148, %p149
      %p151 = scmp.ne.s32.totalorder %s139, %s140
      %p152 = scmp.eq.s32.totalorder %s25, 2
      %p153 = por %p151, %p152
      %p155 = scmp.ne.s32.totalorder %s140, %s154
      %p156 = scmp.eq.s32.totalorder %s25, 0
      %p157 = por %p155, %p156
      %s159 = sadd.s32 %s158, 1
      %p162 = scmp.eq.s32.totalorder %s19, 2
      %p163 = scmp.ne.s32.totalorder %s158, %s160
      %p164 = scmp.eq.s32.totalorder %s19, 0
      %p165 = por %p163, %p164
      %p166 = scmp.ne.s32.totalorder %s158, %s160
      %p167 = scmp.eq.s32.totalorder %s24, 2
      %p168 = por %p166, %p167
      %p169 = scmp.ne.s32.totalorder %s160, %s161
      %p170 = scmp.eq.s32.totalorder %s24, 0
      %p171 = por %p169, %p170
      %p172 = scmp.ne.s32.totalorder %s160, %s161
      %p173 = scmp.eq.s32.totalorder %s25, 2
      %p174 = por %p172, %p173
      %p176 = scmp.ne.s32.totalorder %s161, %s175
      %p177 = scmp.eq.s32.totalorder %s25, 0
      %p178 = por %p176, %p177
      %s180 = sadd.s32 %s179, 1
      %p183 = scmp.eq.s32.totalorder %s19, 2
      %p184 = scmp.ne.s32.totalorder %s179, %s181
      %p185 = scmp.eq.s32.totalorder %s19, 0
      %p186 = por %p184, %p185
      %p187 = scmp.ne.s32.totalorder %s179, %s181
      %p188 = scmp.eq.s32.totalorder %s24, 2
      %p189 = por %p187, %p188
      %p190 = scmp.ne.s32.totalorder %s181, %s182
      %p191 = scmp.eq.s32.totalorder %s24, 0
      %p192 = por %p190, %p191
      %p193 = scmp.ne.s32.totalorder %s181, %s182
      %p194 = scmp.eq.s32.totalorder %s25, 2
      %p195 = por %p193, %p194
      %p197 = scmp.ne.s32.totalorder %s182, %s196
      %p198 = scmp.eq.s32.totalorder %s25, 0
      %p199 = por %p197, %p198
      %s201 = sadd.s32 %s200, 1
      %p204 = scmp.eq.s32.totalorder %s19, 2
      %p205 = scmp.ne.s32.totalorder %s200, %s202
      %p206 = scmp.eq.s32.totalorder %s19, 0
      %p207 = por %p205, %p206
      %p208 = scmp.ne.s32.totalorder %s200, %s202
      %p209 = scmp.eq.s32.totalorder %s24, 2
      %p210 = por %p208, %p209
      %p211 = scmp.ne.s32.totalorder %s202, %s203
      %p212 = scmp.eq.s32.totalorder %s24, 0
      %p213 = por %p211, %p212
      %p214 = scmp.ne.s32.totalorder %s202, %s203
      %p215 = scmp.eq.s32.totalorder %s25, 2
      %p216 = por %p214, %p215
      %p218 = scmp.ne.s32.totalorder %s203, %s217
      %p219 = scmp.eq.s32.totalorder %s25, 0
      %p220 = por %p218, %p219
      %s222 = sadd.s32 %s221, 1
      %p225 = scmp.eq.s32.totalorder %s19, 2
      %p226 = scmp.ne.s32.totalorder %s221, %s223
      %p227 = scmp.eq.s32.totalorder %s19, 0
      %p228 = por %p226, %p227
      %p229 = scmp.ne.s32.totalorder %s221, %s223
      %p230 = scmp.eq.s32.totalorder %s24, 2
      %p231 = por %p229, %p230
      %p232 = scmp.ne.s32.totalorder %s223, %s224
      %p233 = scmp.eq.s32.totalorder %s24, 0
      %p234 = por %p232, %p233
      %p235 = scmp.ne.s32.totalorder %s223, %s224
      %p236 = scmp.eq.s32.totalorder %s25, 2
      %p237 = por %p235, %p236
      %p239 = scmp.ne.s32.totalorder %s224, %s238
      %p240 = scmp.eq.s32.totalorder %s25, 0
      %p241 = por %p239, %p240
      %s243 = sadd.s32 %s242, 1
      %p246 = scmp.eq.s32.totalorder %s19, 2
      %p247 = scmp.ne.s32.totalorder %s242, %s244
      %p248 = scmp.eq.s32.totalorder %s19, 0
      %p249 = por %p247, %p248
      %p250 = scmp.ne.s32.totalorder %s242, %s244
      %p251 = scmp.eq.s32.totalorder %s24, 2
      %p252 = por %p250, %p251
      %p253 = scmp.ne.s32.totalorder %s244, %s245
      %p254 = scmp.eq.s32.totalorder %s24, 0
      %p255 = por %p253, %p254
      %p256 = scmp.ne.s32.totalorder %s244, %s245
      %p257 = scmp.eq.s32.totalorder %s25, 2
      %p258 = por %p256, %p257
      %p260 = scmp.ne.s32.totalorder %s245, %s259
      %p261 = scmp.eq.s32.totalorder %s25, 0
      %p262 = por %p260, %p261
      %p263 = scmp.le.s32.totalorder 1, %s19
      %p264 = scmp.lt.s32.totalorder %s19, 4
      %p265 = pnand %p263, %p264
      %p266 = pneg %p265
      // Predicated region
      $region9: #{tpu_custom_call.1} parent=5 // pred_check
        _
      $region10: #{tpu_custom_call.1} parent=5 // pred_check_branch
        %268 = sbr.rel (%p265) target = $region12
      $region11: #{tpu_custom_call.1} parent=5 // pred_region
        %s269 = ssub.s32 %s19, 1
        // Predicated region
        $region13: #{tpu_custom_call.1} parent=11 // pred_check
          %p270 = pneg %p40
        $region14: #{tpu_custom_call.1} parent=11 // pred_check_branch
          %272 = sbr.rel (%p270) target = $region16
        $region15: #{tpu_custom_call.1} parent=11 // pred_region
          _
        $region16: #{tpu_custom_call.1} parent=11 // pred_fallthru
          _
        // Predicated region
        $region17: #{tpu_custom_call.1} parent=11 // pred_check
          %p273 = pneg %p87
        $region18: #{tpu_custom_call.1} parent=11 // pred_check_branch
          %275 = sbr.rel (%p273) target = $region20
        $region19: #{tpu_custom_call.1} parent=11 // pred_region
          _
        $region20: #{tpu_custom_call.1} parent=11 // pred_fallthru
          _
        // Predicated region
        $region21: #{tpu_custom_call.1} parent=11 // pred_check
          %p276 = pneg %p108
        $region22: #{tpu_custom_call.1} parent=11 // pred_check_branch
          %278 = sbr.rel (%p276) target = $region24
        $region23: #{tpu_custom_call.1} parent=11 // pred_region
          _
        $region24: #{tpu_custom_call.1} parent=11 // pred_fallthru
          _
        // Predicated region
        $region25: #{tpu_custom_call.1} parent=11 // pred_check
          %p279 = pneg %p129
        $region26: #{tpu_custom_call.1} parent=11 // pred_check_branch
          %281 = sbr.rel (%p279) target = $region28
        $region27: #{tpu_custom_call.1} parent=11 // pred_region
          _
        $region28: #{tpu_custom_call.1} parent=11 // pred_fallthru
          _
        // Predicated region
        $region29: #{tpu_custom_call.1} parent=11 // pred_check
          %p282 = pneg %p150
        $region30: #{tpu_custom_call.1} parent=11 // pred_check_branch
          %284 = sbr.rel (%p282) target = $region32
        $region31: #{tpu_custom_call.1} parent=11 // pred_region
          %s286 = ssub.s32 8192, 8192
          %287 = vsyncadd [#allocation8], %s286
          %s288 = sshll.u32 [#allocation7], 4
          %s289 = int_to_ptr.vmem [resolvable:$true] %s288
          %294 = dma.hbm_to_vmem [thread:$0]  %s5, 8192, %s289, [#allocation8], 512, 512, 32
        $region32: #{tpu_custom_call.1} parent=11 // pred_fallthru
          _
        // Predicated region
        $region33: #{tpu_custom_call.1} parent=11 // pred_check
          %p295 = pneg %p171
        $region34: #{tpu_custom_call.1} parent=11 // pred_check_branch
          %297 = sbr.rel (%p295) target = $region36
        $region35: #{tpu_custom_call.1} parent=11 // pred_region
          %s299 = ssub.s32 8192, 8192
          %300 = vsyncadd [#allocation11], %s299
          %s301 = sshll.u32 [#allocation10], 4
          %s302 = int_to_ptr.vmem [resolvable:$true] %s301
          %307 = dma.hbm_to_vmem [thread:$0]  %s6, 8192, %s302, [#allocation11], 512, 512, 32
        $region36: #{tpu_custom_call.1} parent=11 // pred_fallthru
          _
        // Predicated region
        $region37: #{tpu_custom_call.1} parent=11 // pred_check
          %p308 = pneg %p192
        $region38: #{tpu_custom_call.1} parent=11 // pred_check_branch
          %310 = sbr.rel (%p308) target = $region40
        $region39: #{tpu_custom_call.1} parent=11 // pred_region
          _
        $region40: #{tpu_custom_call.1} parent=11 // pred_fallthru
          _
        // Predicated region
        $region41: #{tpu_custom_call.1} parent=11 // pred_check
          %p311 = pneg %p213
        $region42: #{tpu_custom_call.1} parent=11 // pred_check_branch
          %313 = sbr.rel (%p311) target = $region44
        $region43: #{tpu_custom_call.1} parent=11 // pred_region
          %s315 = ssub.s32 2048, 2048
          %316 = vsyncadd [#allocation11], %s315
          %s317 = sshll.u32 [#allocation12], 4
          %s318 = int_to_ptr.vmem [resolvable:$true] %s317
          %323 = dma.hbm_to_vmem [thread:$0]  %s8, 2048, %s318, [#allocation11], 128, 128, 8
        $region44: #{tpu_custom_call.1} parent=11 // pred_fallthru
          _
        // Predicated region
        $region45: #{tpu_custom_call.1} parent=11 // pred_check
          %p324 = pneg %p234
        $region46: #{tpu_custom_call.1} parent=11 // pred_check_branch
          %326 = sbr.rel (%p324) target = $region48
        $region47: #{tpu_custom_call.1} parent=11 // pred_region
          _
        $region48: #{tpu_custom_call.1} parent=11 // pred_fallthru
          _
      $region12: #{tpu_custom_call.1} parent=5 // pred_fallthru
        _
      %p327 = scmp.lt.s32.totalorder %s19, 3
      // Predicated region
      $region49: #{tpu_custom_call.1} parent=5 // pred_check
        %p328 = pneg %p327
      $region50: #{tpu_custom_call.1} parent=5 // pred_check_branch
        %330 = sbr.rel (%p328) target = $region52
      $region51: #{tpu_custom_call.1} parent=5 // pred_region
        // Predicated region
        $region53: #{tpu_custom_call.1} parent=51 // pred_check
          %p331 = pneg %p60
        $region54: #{tpu_custom_call.1} parent=51 // pred_check_branch
          %333 = sbr.rel (%p331) target = $region56
        $region55: #{tpu_custom_call.1} parent=51 // pred_region
          %s334 = smul.u32 8, %s19
          %p335 = scmp.lt.s32.totalorder %s334, 23
          %s336 = scalar_select %p335, %s334, 23
          %s337 = smul.addr %s336, 8
          %s338 = scalar_lea.vmem %s1, %s337
          %s339 = smul.u32 8, %s19
        $region56: #{tpu_custom_call.1} parent=51 // pred_fallthru
          _
      $region52: #{tpu_custom_call.1} parent=5 // pred_fallthru
        _
      %p340 = scmp.le.s32.totalorder 1, %s19
      %p341 = scmp.lt.s32.totalorder %s19, 4
      %p342 = pnand %p340, %p341
      %p343 = pneg %p342
      // Predicated region
      $region57: #{tpu_custom_call.1} parent=5 // pred_check
        _
      $region58: #{tpu_custom_call.1} parent=5 // pred_check_branch
        %345 = sbr.rel (%p342) target = $region60
      $region59: #{tpu_custom_call.1} parent=5 // pred_region
        %s346 = ssub.s32 %s19, 1
        // Predicated region
        $region61: #{tpu_custom_call.1} parent=59 // pred_check
          %p347 = pneg %p150
        $region62: #{tpu_custom_call.1} parent=59 // pred_check_branch
          %349 = sbr.rel (%p347) target = $region64
        $region63: #{tpu_custom_call.1} parent=59 // pred_region
          %350 = dma.done [#allocation8], 8192
        $region64: #{tpu_custom_call.1} parent=59 // pred_fallthru
          _
        // Predicated region
        $region65: #{tpu_custom_call.1} parent=59 // pred_check
          %p351 = pneg %p171
        $region66: #{tpu_custom_call.1} parent=59 // pred_check_branch
          %353 = sbr.rel (%p351) target = $region68
        $region67: #{tpu_custom_call.1} parent=59 // pred_region
          %354 = dma.done [#allocation11], 8192
        $region68: #{tpu_custom_call.1} parent=59 // pred_fallthru
          _
        // Predicated region
        $region69: #{tpu_custom_call.1} parent=59 // pred_check
          %p355 = pneg %p213
        $region70: #{tpu_custom_call.1} parent=59 // pred_check_branch
          %357 = sbr.rel (%p355) target = $region72
        $region71: #{tpu_custom_call.1} parent=59 // pred_region
          %358 = dma.done [#allocation11], 2048
        $region72: #{tpu_custom_call.1} parent=59 // pred_fallthru
          _
        %p359 = pneg %p40
        %p360 = pneg %p37
        %s361 = smul.u32 8, %s24
        %p362 = scmp.lt.s32.totalorder %s361, 23
        %s363 = scalar_select %p362, %s361, 23
        %s364 = smul.addr %s363, 8
        %s365 = scalar_lea.vmem %s1, %s364
        %p366 = pneg %p66
        %p367 = pneg %p63
        %p368 = pneg %p87
        %p369 = pneg %p84
        %p370 = pneg %p108
        %p371 = pneg %p105
        %p372 = pneg %p129
        %p373 = pneg %p126
        %p374 = pneg %p150
        %p375 = pneg %p147
        %p376 = pneg %p171
        %p377 = pneg %p168
        %p378 = pneg %p192
        %p379 = pneg %p189
        %p380 = pneg %p213
        %p381 = pneg %p210
        %p382 = pneg %p234
        %p383 = pneg %p231
        %p384 = pneg %p255
        %p385 = pneg %p252
        %s386 = smul.u32 8, %s24
        %p387 = scmp.lt.s32.totalorder %s386, 23
        %s388 = scalar_select %p387, %s386, 23
        %s389 = smul.addr %s388, 8
        %s390 = scalar_lea.vmem %s1, %s389
        %s391 = smul.u32 8, %s24
        %p392 = scmp.eq.s32.totalorder %s24, 0
        // Predicated region
        $region73: #{tpu_custom_call.1} parent=59 // pred_check
          %p393 = pneg %p392
        $region74: #{tpu_custom_call.1} parent=59 // pred_check_branch
          %395 = sbr.rel (%p393) target = $region76
        $region75: #{tpu_custom_call.1} parent=59 // pred_region
          %396 = vst [vmem:[#allocation2] sm:$0xff] 0.0
          %397 = vst [vmem:[#allocation3] sm:$0xff] 0.0
          %398 = vst [vmem:[#allocation4] sm:$0xff] 0.0
          %399 = vst [vmem:[#allocation5] sm:$0xff] 0.0
        $region76: #{tpu_custom_call.1} parent=59 // pred_fallthru
          _
        %v400 = vld [vmem:[%s390] sm:$0xff]
        %v401 = vld [vmem:[%s390 + $0x8] sm:$0xff]
        %v402 = vld [vmem:[%s390 + $0x10] sm:$0xff]
        %v403 = vld [vmem:[%s390 + $0x18] sm:$0xff]
        %v404 = vld [vmem:[%s390 + $0x20] sm:$0xff]
        %v405 = vld [vmem:[%s390 + $0x28] sm:$0xff]
        %v406 = vld [vmem:[%s390 + $0x30] sm:$0xff]
        %v407 = vld [vmem:[%s390 + $0x38] sm:$0xff]
        %v408 = vld [vmem:[%s2] sm:$0xff]
        %v409 = vld [vmem:[%s2 + $0x8] sm:$0xff]
        %v410 = vld [vmem:[%s3] sm:$0x1]
        %v412 = vlaneseq
        %v413 = vshrl.u32 %v412, 7
        %v414 = vsub.s32 0, %v413
        %v415 = vrot.slane %v410, %v414
        %vm417 = vcmask 130048
        %v419 = vsel %vm417, %v400, 0
        %v422 = vsel %vm417, %v401, 0
        %v425 = vsel %vm417, %v402, 0
        %v428 = vsel %vm417, %v403, 0
        %v431 = vsel %vm417, %v404, 0
        %v434 = vsel %vm417, %v405, 0
        %v437 = vsel %vm417, %v406, 0
        %v440 = vsel %vm417, %v407, 0
        %442 = vmatprep.subr.mxu0 0.0
        %443 = vmatpush1.msra.mxu0 0.0
        %444 = vmatprep.subr.mxu0 0.0
        %445 = vmatpush1.msra.mxu0 0.0
        %446 = vmatprep.subr.mxu0 0.0
        %447 = vmatpush1.msra.mxu0 0.0
        %448 = vmatprep.subr.mxu0 0.0
        %449 = vmatpush1.msra.mxu0 0.0
        %450 = vmatprep.subr.mxu0 0.0
        %451 = vmatpush1.msra.mxu0 0.0
        %452 = vmatprep.subr.mxu0 0.0
        %453 = vmatpush1.msra.mxu0 0.0
        %454 = vmatprep.subr.mxu0 0.0
        %455 = vmatpush1.msra.mxu0 0.0
        %456 = vmatprep.subr.mxu0 0.0
        %457 = vmatpush1.msra.mxu0 0.0
        %458 = vmatprep.subr.mxu0 0.0
        %459 = vmatpush1.msra.mxu0 0.0
        %460 = vmatprep.subr.mxu0 0.0
        %461 = vmatpush1.msra.mxu0 0.0
        %462 = vmatprep.subr.mxu0 0.0
        %463 = vmatpush1.msra.mxu0 0.0
        %464 = vmatprep.subr.mxu0 0.0
        %465 = vmatpush1.msra.mxu0 0.0
        %466 = vmatprep.subr.mxu0 0.0
        %467 = vmatpush1.msra.mxu0 0.0
        %468 = vmatprep.subr.mxu0 0.0
        %469 = vmatpush1.msra.mxu0 0.0
        %470 = vmatprep.subr.mxu0 0.0
        %471 = vmatpush1.msra.mxu0 %v409
        %472 = vmatprep.subr.mxu0 0.0
        %473 = vmatpush1.msra.mxu0 %v408
        %474 = vmatprep.subr.mxu0 0.0
        %475 = vmatpush2.msra.mxu0 0.0
        %476 = vmatprep.subr.mxu0 0.0
        %477 = vmatpush2.msra.mxu0 0.0
        %478 = vmatprep.subr.mxu0 0.0
        %479 = vmatpush2.msra.mxu0 0.0
        %480 = vmatprep.subr.mxu0 0.0
        %481 = vmatpush2.msra.mxu0 0.0
        %482 = vmatprep.subr.mxu0 0.0
        %483 = vmatpush2.msra.mxu0 0.0
        %484 = vmatprep.subr.mxu0 0.0
        %485 = vmatpush2.msra.mxu0 0.0
        %486 = vmatprep.subr.mxu0 0.0
        %487 = vmatpush2.msra.mxu0 0.0
        %488 = vmatprep.subr.mxu0 0.0
        %489 = vmatpush2.msra.mxu0 0.0
        %490 = vmatprep.subr.mxu0 0.0
        %491 = vmatpush2.msra.mxu0 0.0
        %492 = vmatprep.subr.mxu0 0.0
        %493 = vmatpush2.msra.mxu0 0.0
        %494 = vmatprep.subr.mxu0 0.0
        %495 = vmatpush2.msra.mxu0 0.0
        %496 = vmatprep.subr.mxu0 0.0
        %497 = vmatpush2.msra.mxu0 0.0
        %498 = vmatprep.subr.mxu0 0.0
        %499 = vmatpush2.msra.mxu0 0.0
        %500 = vmatprep.subr.mxu0 0.0
        %501 = vmatpush2.msra.mxu0 0.0
        %502 = vmatprep.subr.mxu0 0.0
        %503 = vmatpush2.msra.mxu0 0.0
        %504 = vmatprep.subr.mxu0 0.0
        %505 = vmatpush2.msra.mxu0 0.0
        %506 = vmatprep.mubr.f32.mxu0 0.0
        %507 = vmatmul.mubr.f32.gmra.mxu0 %v419
        %v508 = vpop.f32.mrf.mxu0
        %v509 = vadd.f32 %v415, %v508
        %v510 = vpop.f32.mrf.mxu0
        %511 = vmatprep.mubr.f32.mxu0 0.0
        %512 = vmatmul.mubr.f32.gmra.mxu0 %v422
        %v513 = vpop.f32.mrf.mxu0
        %v514 = vadd.f32 %v415, %v513
        %v515 = vpop.f32.mrf.mxu0
        %516 = vmatprep.mubr.f32.mxu0 0.0
        %517 = vmatmul.mubr.f32.gmra.mxu0 %v425
        %v518 = vpop.f32.mrf.mxu0
        %v519 = vadd.f32 %v415, %v518
        %v520 = vpop.f32.mrf.mxu0
        %521 = vmatprep.mubr.f32.mxu0 0.0
        %522 = vmatmul.mubr.f32.gmra.mxu0 %v428
        %v523 = vpop.f32.mrf.mxu0
        %v524 = vadd.f32 %v415, %v523
        %v525 = vpop.f32.mrf.mxu0
        %526 = vmatprep.mubr.f32.mxu0 0.0
        %527 = vmatmul.mubr.f32.gmra.mxu0 %v431
        %v528 = vpop.f32.mrf.mxu0
        %v529 = vadd.f32 %v415, %v528
        %v530 = vpop.f32.mrf.mxu0
        %531 = vmatprep.mubr.f32.mxu0 0.0
        %532 = vmatmul.mubr.f32.gmra.mxu0 %v434
        %v533 = vpop.f32.mrf.mxu0
        %v534 = vadd.f32 %v415, %v533
        %v535 = vpop.f32.mrf.mxu0
        %536 = vmatprep.mubr.f32.mxu0 0.0
        %537 = vmatmul.mubr.f32.gmra.mxu0 %v437
        %v538 = vpop.f32.mrf.mxu0
        %v539 = vadd.f32 %v415, %v538
        %v540 = vpop.f32.mrf.mxu0
        %541 = vmatprep.mubr.f32.mxu0 0.0
        %542 = vmatmul.mubr.f32.gmra.mxu0 %v440
        %v543 = vpop.f32.mrf.mxu0
        %v544 = vadd.f32 %v415, %v543
        %v545 = vpop.f32.mrf.mxu0
        %546 = vdwg.mxu0
        %547 = vst [vmem:[#allocation6] sm:$0xff] %v509
        %548 = vst [vmem:[#allocation6 + $0x8] sm:$0xff] %v514
        %549 = vst [vmem:[#allocation6 + $0x10] sm:$0xff] %v519
        %550 = vst [vmem:[#allocation6 + $0x18] sm:$0xff] %v524
        %551 = vst [vmem:[#allocation6 + $0x20] sm:$0xff] %v529
        %552 = vst [vmem:[#allocation6 + $0x28] sm:$0xff] %v534
        %553 = vst [vmem:[#allocation6 + $0x30] sm:$0xff] %v539
        %554 = vst [vmem:[#allocation6 + $0x38] sm:$0xff] %v544
        %v555 = vld [vmem:[%s0] sm:$0xff]
        %556 = vset.pattern.permute.xlu0 0
        %557 = vperm.xlu0 %556, %v555
        %v558 = vpop.permute.xlu0 %557
        %v559 = vld [vmem:[#allocation2] sm:$0xff]
        %v560 = vld [vmem:[#allocation3] sm:$0xff]
        %v561 = vld [vmem:[#allocation4] sm:$0xff]
        %v562 = vld [vmem:[#allocation5] sm:$0xff]
        %s563 = smul.u32 %s24, 8
        %v564 = vld [vmem:[#allocation6] sm:$0xff]
        %v565 = vld [vmem:[%s4] sm:$0xff]
        %v566 = vld [vmem:[%s4 + $0x8] sm:$0xff]
        %v567 = vld [vmem:[%s4 + $0x10] sm:$0xff]
        %v568 = vld [vmem:[%s4 + $0x18] sm:$0xff]
        %v569 = vld [vmem:[%s4 + $0x20] sm:$0xff]
        %v570 = vld [vmem:[%s4 + $0x28] sm:$0xff]
        %v571 = vld [vmem:[%s4 + $0x30] sm:$0xff]
        %v572 = vld [vmem:[%s4 + $0x38] sm:$0xff]
        %v573 = vld [vmem:[%s4 + $0x40] sm:$0xff]
        %v574 = vld [vmem:[%s4 + $0x48] sm:$0xff]
        %v575 = vld [vmem:[%s4 + $0x50] sm:$0xff]
        %v576 = vld [vmem:[%s4 + $0x58] sm:$0xff]
        %v577 = vld [vmem:[%s4 + $0x60] sm:$0xff]
        %v578 = vld [vmem:[%s4 + $0x68] sm:$0xff]
        %v579 = vld [vmem:[%s4 + $0x70] sm:$0xff]
        %v580 = vld [vmem:[%s4 + $0x78] sm:$0xff]
        %581 = vmatprep.subr.mxu0 0.0
        %582 = vmatpush1.msra.mxu0 %v580
        %583 = vmatprep.subr.mxu0 0.0
        %584 = vmatpush1.msra.mxu0 %v579
        %585 = vmatprep.subr.mxu0 0.0
        %586 = vmatpush1.msra.mxu0 %v578
        %587 = vmatprep.subr.mxu0 0.0
        %588 = vmatpush1.msra.mxu0 %v577
        %589 = vmatprep.subr.mxu0 0.0
        %590 = vmatpush1.msra.mxu0 %v576
        %591 = vmatprep.subr.mxu0 0.0
        %592 = vmatpush1.msra.mxu0 %v575
        %593 = vmatprep.subr.mxu0 0.0
        %594 = vmatpush1.msra.mxu0 %v574
        %595 = vmatprep.subr.mxu0 0.0
        %596 = vmatpush1.msra.mxu0 %v573
        %597 = vmatprep.subr.mxu0 0.0
        %598 = vmatpush1.msra.mxu0 %v572
        %599 = vmatprep.subr.mxu0 0.0
        %600 = vmatpush1.msra.mxu0 %v571
        %601 = vmatprep.subr.mxu0 0.0
        %602 = vmatpush1.msra.mxu0 %v570
        %603 = vmatprep.subr.mxu0 0.0
        %604 = vmatpush1.msra.mxu0 %v569
        %605 = vmatprep.subr.mxu0 0.0
        %606 = vmatpush1.msra.mxu0 %v568
        %607 = vmatprep.subr.mxu0 0.0
        %608 = vmatpush1.msra.mxu0 %v567
        %609 = vmatprep.subr.mxu0 0.0
        %610 = vmatpush1.msra.mxu0 %v566
        %611 = vmatprep.subr.mxu0 0.0
        %612 = vmatpush1.msra.mxu0 %v565
        %613 = vmatprep.subr.mxu0 0.0
        %614 = vmatpush2.msra.mxu0 0.0
        %615 = vmatprep.subr.mxu0 0.0
        %616 = vmatpush2.msra.mxu0 0.0
        %617 = vmatprep.subr.mxu0 0.0
        %618 = vmatpush2.msra.mxu0 0.0
        %619 = vmatprep.subr.mxu0 0.0
        %620 = vmatpush2.msra.mxu0 0.0
        %621 = vmatprep.subr.mxu0 0.0
        %622 = vmatpush2.msra.mxu0 0.0
        %623 = vmatprep.subr.mxu0 0.0
        %624 = vmatpush2.msra.mxu0 0.0
        %625 = vmatprep.subr.mxu0 0.0
        %626 = vmatpush2.msra.mxu0 0.0
        %627 = vmatprep.subr.mxu0 0.0
        %628 = vmatpush2.msra.mxu0 0.0
        %629 = vmatprep.subr.mxu0 0.0
        %630 = vmatpush2.msra.mxu0 0.0
        %631 = vmatprep.subr.mxu0 0.0
        %632 = vmatpush2.msra.mxu0 0.0
        %633 = vmatprep.subr.mxu0 0.0
        %634 = vmatpush2.msra.mxu0 0.0
        %635 = vmatprep.subr.mxu0 0.0
        %636 = vmatpush2.msra.mxu0 0.0
        %637 = vmatprep.subr.mxu0 0.0
        %638 = vmatpush2.msra.mxu0 0.0
        %639 = vmatprep.subr.mxu0 0.0
        %640 = vmatpush2.msra.mxu0 0.0
        %641 = vmatprep.subr.mxu0 0.0
        %642 = vmatpush2.msra.mxu0 0.0
        %643 = vmatprep.subr.mxu0 0.0
        %644 = vmatpush2.msra.mxu0 0.0
        %645 = vmatprep.mubr.f32.mxu0 0.0
        %646 = vmatmul.mubr.f32.gmra.mxu0 %v559
        %v647 = vpop.f32.mrf.mxu0
        %v648 = vadd.f32 0.0, %v647
        %v649 = vpop.f32.mrf.mxu0
        %650 = vdwg.mxu0
        %v651 = vadd.f32 %v564, %v648
        %v652 = vtanh.pop %v651
        %v653 = vtanh.pop %v652
        %v654 = vld [vmem:[#allocation7] sm:$0xff]
        %v655 = vld [vmem:[#allocation7 + $0x8] sm:$0xff]
        %v656 = vld [vmem:[#allocation7 + $0x10] sm:$0xff]
        %v657 = vld [vmem:[#allocation7 + $0x18] sm:$0xff]
        %v658 = vld [vmem:[#allocation7 + $0x20] sm:$0xff]
        %v659 = vld [vmem:[#allocation7 + $0x28] sm:$0xff]
        %v660 = vld [vmem:[#allocation7 + $0x30] sm:$0xff]
        %v661 = vld [vmem:[#allocation7 + $0x38] sm:$0xff]
        %v662 = vld [vmem:[#allocation7 + $0x40] sm:$0xff]
        %v663 = vld [vmem:[#allocation7 + $0x48] sm:$0xff]
        %v664 = vld [vmem:[#allocation7 + $0x50] sm:$0xff]
        %v665 = vld [vmem:[#allocation7 + $0x58] sm:$0xff]
        %v666 = vld [vmem:[#allocation7 + $0x60] sm:$0xff]
        %v667 = vld [vmem:[#allocation7 + $0x68] sm:$0xff]
        %v668 = vld [vmem:[#allocation7 + $0x70] sm:$0xff]
        %v669 = vld [vmem:[#allocation7 + $0x78] sm:$0xff]
        %v670 = vld [vmem:[#allocation7 + $0x80] sm:$0xff]
        %v671 = vld [vmem:[#allocation7 + $0x88] sm:$0xff]
        %v672 = vld [vmem:[#allocation7 + $0x90] sm:$0xff]
        %v673 = vld [vmem:[#allocation7 + $0x98] sm:$0xff]
        %v674 = vld [vmem:[#allocation7 + $0xa0] sm:$0xff]
        %v675 = vld [vmem:[#allocation7 + $0xa8] sm:$0xff]
        %v676 = vld [vmem:[#allocation7 + $0xb0] sm:$0xff]
        %v677 = vld [vmem:[#allocation7 + $0xb8] sm:$0xff]
        %v678 = vld [vmem:[#allocation7 + $0xc0] sm:$0xff]
        %v679 = vld [vmem:[#allocation7 + $0xc8] sm:$0xff]
        %v680 = vld [vmem:[#allocation7 + $0xd0] sm:$0xff]
        %v681 = vld [vmem:[#allocation7 + $0xd8] sm:$0xff]
        %v682 = vld [vmem:[#allocation7 + $0xe0] sm:$0xff]
        %v683 = vld [vmem:[#allocation7 + $0xe8] sm:$0xff]
        %v684 = vld [vmem:[#allocation7 + $0xf0] sm:$0xff]
        %v685 = vld [vmem:[#allocation7 + $0xf8] sm:$0xff]
        %v686 = vld [vmem:[#allocation7 + $0x100] sm:$0xff]
        %v687 = vld [vmem:[#allocation7 + $0x108] sm:$0xff]
        %v688 = vld [vmem:[#allocation7 + $0x110] sm:$0xff]
        %v689 = vld [vmem:[#allocation7 + $0x118] sm:$0xff]
        %v690 = vld [vmem:[#allocation7 + $0x120] sm:$0xff]
        %v691 = vld [vmem:[#allocation7 + $0x128] sm:$0xff]
        %v692 = vld [vmem:[#allocation7 + $0x130] sm:$0xff]
        %v693 = vld [vmem:[#allocation7 + $0x138] sm:$0xff]
        %v694 = vld [vmem:[#allocation7 + $0x140] sm:$0xff]
        %v695 = vld [vmem:[#allocation7 + $0x148] sm:$0xff]
        %v696 = vld [vmem:[#allocation7 + $0x150] sm:$0xff]
        %v697 = vld [vmem:[#allocation7 + $0x158] sm:$0xff]
        %v698 = vld [vmem:[#allocation7 + $0x160] sm:$0xff]
        %v699 = vld [vmem:[#allocation7 + $0x168] sm:$0xff]
        %v700 = vld [vmem:[#allocation7 + $0x170] sm:$0xff]
        %v701 = vld [vmem:[#allocation7 + $0x178] sm:$0xff]
        %v702 = vld [vmem:[#allocation7 + $0x180] sm:$0xff]
        %v703 = vld [vmem:[#allocation7 + $0x188] sm:$0xff]
        %v704 = vld [vmem:[#allocation7 + $0x190] sm:$0xff]
        %v705 = vld [vmem:[#allocation7 + $0x198] sm:$0xff]
        %v706 = vld [vmem:[#allocation7 + $0x1a0] sm:$0xff]
        %v707 = vld [vmem:[#allocation7 + $0x1a8] sm:$0xff]
        %v708 = vld [vmem:[#allocation7 + $0x1b0] sm:$0xff]
        %v709 = vld [vmem:[#allocation7 + $0x1b8] sm:$0xff]
        %v710 = vld [vmem:[#allocation7 + $0x1c0] sm:$0xff]
        %v711 = vld [vmem:[#allocation7 + $0x1c8] sm:$0xff]
        %v712 = vld [vmem:[#allocation7 + $0x1d0] sm:$0xff]
        %v713 = vld [vmem:[#allocation7 + $0x1d8] sm:$0xff]
        %v714 = vld [vmem:[#allocation7 + $0x1e0] sm:$0xff]
        %v715 = vld [vmem:[#allocation7 + $0x1e8] sm:$0xff]
        %v716 = vld [vmem:[#allocation7 + $0x1f0] sm:$0xff]
        %v717 = vld [vmem:[#allocation7 + $0x1f8] sm:$0xff]
        %v718 = vld [vmem:[#allocation10] sm:$0xff]
        %v719 = vld [vmem:[#allocation10 + $0x8] sm:$0xff]
        %v720 = vld [vmem:[#allocation10 + $0x10] sm:$0xff]
        %v721 = vld [vmem:[#allocation10 + $0x18] sm:$0xff]
        %v722 = vld [vmem:[#allocation10 + $0x20] sm:$0xff]
        %v723 = vld [vmem:[#allocation10 + $0x28] sm:$0xff]
        %v724 = vld [vmem:[#allocation10 + $0x30] sm:$0xff]
        %v725 = vld [vmem:[#allocation10 + $0x38] sm:$0xff]
        %v726 = vld [vmem:[#allocation10 + $0x40] sm:$0xff]
        %v727 = vld [vmem:[#allocation10 + $0x48] sm:$0xff]
        %v728 = vld [vmem:[#allocation10 + $0x50] sm:$0xff]
        %v729 = vld [vmem:[#allocation10 + $0x58] sm:$0xff]
        %v730 = vld [vmem:[#allocation10 + $0x60] sm:$0xff]
        %v731 = vld [vmem:[#allocation10 + $0x68] sm:$0xff]
        %v732 = vld [vmem:[#allocation10 + $0x70] sm:$0xff]
        %v733 = vld [vmem:[#allocation10 + $0x78] sm:$0xff]
        %v734 = vld [vmem:[#allocation10 + $0x80] sm:$0xff]
        %v735 = vld [vmem:[#allocation10 + $0x88] sm:$0xff]
        %v736 = vld [vmem:[#allocation10 + $0x90] sm:$0xff]
        %v737 = vld [vmem:[#allocation10 + $0x98] sm:$0xff]
        %v738 = vld [vmem:[#allocation10 + $0xa0] sm:$0xff]
        %v739 = vld [vmem:[#allocation10 + $0xa8] sm:$0xff]
        %v740 = vld [vmem:[#allocation10 + $0xb0] sm:$0xff]
        %v741 = vld [vmem:[#allocation10 + $0xb8] sm:$0xff]
        %v742 = vld [vmem:[#allocation10 + $0xc0] sm:$0xff]
        %v743 = vld [vmem:[#allocation10 + $0xc8] sm:$0xff]
        %v744 = vld [vmem:[#allocation10 + $0xd0] sm:$0xff]
        %v745 = vld [vmem:[#allocation10 + $0xd8] sm:$0xff]
        %v746 = vld [vmem:[#allocation10 + $0xe0] sm:$0xff]
        %v747 = vld [vmem:[#allocation10 + $0xe8] sm:$0xff]
        %v748 = vld [vmem:[#allocation10 + $0xf0] sm:$0xff]
        %v749 = vld [vmem:[#allocation10 + $0xf8] sm:$0xff]
        %v750 = vld [vmem:[#allocation10 + $0x100] sm:$0xff]
        %v751 = vld [vmem:[#allocation10 + $0x108] sm:$0xff]
        %v752 = vld [vmem:[#allocation10 + $0x110] sm:$0xff]
        %v753 = vld [vmem:[#allocation10 + $0x118] sm:$0xff]
        %v754 = vld [vmem:[#allocation10 + $0x120] sm:$0xff]
        %v755 = vld [vmem:[#allocation10 + $0x128] sm:$0xff]
        %v756 = vld [vmem:[#allocation10 + $0x130] sm:$0xff]
        %v757 = vld [vmem:[#allocation10 + $0x138] sm:$0xff]
        %v758 = vld [vmem:[#allocation10 + $0x140] sm:$0xff]
        %v759 = vld [vmem:[#allocation10 + $0x148] sm:$0xff]
        %v760 = vld [vmem:[#allocation10 + $0x150] sm:$0xff]
        %v761 = vld [vmem:[#allocation10 + $0x158] sm:$0xff]
        %v762 = vld [vmem:[#allocation10 + $0x160] sm:$0xff]
        %v763 = vld [vmem:[#allocation10 + $0x168] sm:$0xff]
        %v764 = vld [vmem:[#allocation10 + $0x170] sm:$0xff]
        %v765 = vld [vmem:[#allocation10 + $0x178] sm:$0xff]
        %v766 = vld [vmem:[#allocation10 + $0x180] sm:$0xff]
        %v767 = vld [vmem:[#allocation10 + $0x188] sm:$0xff]
        %v768 = vld [vmem:[#allocation10 + $0x190] sm:$0xff]
        %v769 = vld [vmem:[#allocation10 + $0x198] sm:$0xff]
        %v770 = vld [vmem:[#allocation10 + $0x1a0] sm:$0xff]
        %v771 = vld [vmem:[#allocation10 + $0x1a8] sm:$0xff]
        %v772 = vld [vmem:[#allocation10 + $0x1b0] sm:$0xff]
        %v773 = vld [vmem:[#allocation10 + $0x1b8] sm:$0xff]
        %v774 = vld [vmem:[#allocation10 + $0x1c0] sm:$0xff]
        %v775 = vld [vmem:[#allocation10 + $0x1c8] sm:$0xff]
        %v776 = vld [vmem:[#allocation10 + $0x1d0] sm:$0xff]
        %v777 = vld [vmem:[#allocation10 + $0x1d8] sm:$0xff]
        %v778 = vld [vmem:[#allocation10 + $0x1e0] sm:$0xff]
        %v779 = vld [vmem:[#allocation10 + $0x1e8] sm:$0xff]
        %v780 = vld [vmem:[#allocation10 + $0x1f0] sm:$0xff]
        %v781 = vld [vmem:[#allocation10 + $0x1f8] sm:$0xff]
        %782 = vmatprep.subr.mxu0 %v779
        %783 = vmatpush1.msra.mxu0 %v778
        %784 = vmatprep.subr.mxu0 %v775
        %785 = vmatpush1.msra.mxu0 %v774
        %786 = vmatprep.subr.mxu0 %v771
        %787 = vmatpush1.msra.mxu0 %v770
        %788 = vmatprep.subr.mxu0 %v767
        %789 = vmatpush1.msra.mxu0 %v766
        %790 = vmatprep.subr.mxu0 %v763
        %791 = vmatpush1.msra.mxu0 %v762
        %792 = vmatprep.subr.mxu0 %v759
        %793 = vmatpush1.msra.mxu0 %v758
        %794 = vmatprep.subr.mxu0 %v755
        %795 = vmatpush1.msra.mxu0 %v754
        %796 = vmatprep.subr.mxu0 %v751
        %797 = vmatpush1.msra.mxu0 %v750
        %798 = vmatprep.subr.mxu0 %v747
        %799 = vmatpush1.msra.mxu0 %v746
        %800 = vmatprep.subr.mxu0 %v743
        %801 = vmatpush1.msra.mxu0 %v742
        %802 = vmatprep.subr.mxu0 %v739
        %803 = vmatpush1.msra.mxu0 %v738
        %804 = vmatprep.subr.mxu0 %v735
        %805 = vmatpush1.msra.mxu0 %v734
        %806 = vmatprep.subr.mxu0 %v731
        %807 = vmatpush1.msra.mxu0 %v730
        %808 = vmatprep.subr.mxu0 %v727
        %809 = vmatpush1.msra.mxu0 %v726
        %810 = vmatprep.subr.mxu0 %v723
        %811 = vmatpush1.msra.mxu0 %v722
        %812 = vmatprep.subr.mxu0 %v719
        %813 = vmatpush1.msra.mxu0 %v718
        %814 = vmatprep.subr.mxu0 0.0
        %815 = vmatpush2.msra.mxu0 0.0
        %816 = vmatprep.subr.mxu0 0.0
        %817 = vmatpush2.msra.mxu0 0.0
        %818 = vmatprep.subr.mxu0 0.0
        %819 = vmatpush2.msra.mxu0 0.0
        %820 = vmatprep.subr.mxu0 0.0
        %821 = vmatpush2.msra.mxu0 0.0
        %822 = vmatprep.subr.mxu0 0.0
        %823 = vmatpush2.msra.mxu0 0.0
        %824 = vmatprep.subr.mxu0 0.0
        %825 = vmatpush2.msra.mxu0 0.0
        %826 = vmatprep.subr.mxu0 0.0
        %827 = vmatpush2.msra.mxu0 0.0
        %828 = vmatprep.subr.mxu0 0.0
        %829 = vmatpush2.msra.mxu0 0.0
        %830 = vmatprep.subr.mxu0 0.0
        %831 = vmatpush2.msra.mxu0 0.0
        %832 = vmatprep.subr.mxu0 0.0
        %833 = vmatpush2.msra.mxu0 0.0
        %834 = vmatprep.subr.mxu0 0.0
        %835 = vmatpush2.msra.mxu0 0.0
        %836 = vmatprep.subr.mxu0 0.0
        %837 = vmatpush2.msra.mxu0 0.0
        %838 = vmatprep.subr.mxu0 0.0
        %839 = vmatpush2.msra.mxu0 0.0
        %840 = vmatprep.subr.mxu0 0.0
        %841 = vmatpush2.msra.mxu0 0.0
        %842 = vmatprep.subr.mxu0 0.0
        %843 = vmatpush2.msra.mxu0 0.0
        %844 = vmatprep.subr.mxu0 0.0
        %845 = vmatpush2.msra.mxu0 0.0
        %846 = vmatprep.mubr.f32.mxu0 0.0
        %847 = vmatmul.mubr.f32.gmra.mxu0 %v560
        %v848 = vpop.f32.mrf.mxu0
        %v849 = vadd.f32 0.0, %v848
        %v850 = vpop.f32.mrf.mxu0
        %v851 = vadd.f32 0.0, %v850
        %852 = vdwg.mxu0
        %853 = vmatprep.subr.mxu0 %v781
        %854 = vmatpush1.msra.mxu0 %v780
        %855 = vmatprep.subr.mxu0 %v777
        %856 = vmatpush1.msra.mxu0 %v776
        %857 = vmatprep.subr.mxu0 %v773
        %858 = vmatpush1.msra.mxu0 %v772
        %859 = vmatprep.subr.mxu0 %v769
        %860 = vmatpush1.msra.mxu0 %v768
        %861 = vmatprep.subr.mxu0 %v765
        %862 = vmatpush1.msra.mxu0 %v764
        %863 = vmatprep.subr.mxu0 %v761
        %864 = vmatpush1.msra.mxu0 %v760
        %865 = vmatprep.subr.mxu0 %v757
        %866 = vmatpush1.msra.mxu0 %v756
        %867 = vmatprep.subr.mxu0 %v753
        %868 = vmatpush1.msra.mxu0 %v752
        %869 = vmatprep.subr.mxu0 %v749
        %870 = vmatpush1.msra.mxu0 %v748
        %871 = vmatprep.subr.mxu0 %v745
        %872 = vmatpush1.msra.mxu0 %v744
        %873 = vmatprep.subr.mxu0 %v741
        %874 = vmatpush1.msra.mxu0 %v740
        %875 = vmatprep.subr.mxu0 %v737
        %876 = vmatpush1.msra.mxu0 %v736
        %877 = vmatprep.subr.mxu0 %v733
        %878 = vmatpush1.msra.mxu0 %v732
        %879 = vmatprep.subr.mxu0 %v729
        %880 = vmatpush1.msra.mxu0 %v728
        %881 = vmatprep.subr.mxu0 %v725
        %882 = vmatpush1.msra.mxu0 %v724
        %883 = vmatprep.subr.mxu0 %v721
        %884 = vmatpush1.msra.mxu0 %v720
        %885 = vmatprep.subr.mxu0 0.0
        %886 = vmatpush2.msra.mxu0 0.0
        %887 = vmatprep.subr.mxu0 0.0
        %888 = vmatpush2.msra.mxu0 0.0
        %889 = vmatprep.subr.mxu0 0.0
        %890 = vmatpush2.msra.mxu0 0.0
        %891 = vmatprep.subr.mxu0 0.0
        %892 = vmatpush2.msra.mxu0 0.0
        %893 = vmatprep.subr.mxu0 0.0
        %894 = vmatpush2.msra.mxu0 0.0
        %895 = vmatprep.subr.mxu0 0.0
        %896 = vmatpush2.msra.mxu0 0.0
        %897 = vmatprep.subr.mxu0 0.0
        %898 = vmatpush2.msra.mxu0 0.0
        %899 = vmatprep.subr.mxu0 0.0
        %900 = vmatpush2.msra.mxu0 0.0
        %901 = vmatprep.subr.mxu0 0.0
        %902 = vmatpush2.msra.mxu0 0.0
        %903 = vmatprep.subr.mxu0 0.0
        %904 = vmatpush2.msra.mxu0 0.0
        %905 = vmatprep.subr.mxu0 0.0
        %906 = vmatpush2.msra.mxu0 0.0
        %907 = vmatprep.subr.mxu0 0.0
        %908 = vmatpush2.msra.mxu0 0.0
        %909 = vmatprep.subr.mxu0 0.0
        %910 = vmatpush2.msra.mxu0 0.0
        %911 = vmatprep.subr.mxu0 0.0
        %912 = vmatpush2.msra.mxu0 0.0
        %913 = vmatprep.subr.mxu0 0.0
        %914 = vmatpush2.msra.mxu0 0.0
        %915 = vmatprep.subr.mxu0 0.0
        %916 = vmatpush2.msra.mxu0 0.0
        %917 = vmatprep.mubr.f32.mxu0 0.0
        %918 = vmatmul.mubr.f32.gmra.mxu0 %v560
        %v919 = vpop.f32.mrf.mxu0
        %v920 = vadd.f32 0.0, %v919
        %v921 = vpop.f32.mrf.mxu0
        %v922 = vadd.f32 0.0, %v921
        %923 = vdwg.mxu0
        %924 = vmatprep.subr.mxu0 %v715
        %925 = vmatpush1.msra.mxu0 %v714
        %926 = vmatprep.subr.mxu0 %v711
        %927 = vmatpush1.msra.mxu0 %v710
        %928 = vmatprep.subr.mxu0 %v707
        %929 = vmatpush1.msra.mxu0 %v706
        %930 = vmatprep.subr.mxu0 %v703
        %931 = vmatpush1.msra.mxu0 %v702
        %932 = vmatprep.subr.mxu0 %v699
        %933 = vmatpush1.msra.mxu0 %v698
        %934 = vmatprep.subr.mxu0 %v695
        %935 = vmatpush1.msra.mxu0 %v694
        %936 = vmatprep.subr.mxu0 %v691
        %937 = vmatpush1.msra.mxu0 %v690
        %938 = vmatprep.subr.mxu0 %v687
        %939 = vmatpush1.msra.mxu0 %v686
        %940 = vmatprep.subr.mxu0 %v683
        %941 = vmatpush1.msra.mxu0 %v682
        %942 = vmatprep.subr.mxu0 %v679
        %943 = vmatpush1.msra.mxu0 %v678
        %944 = vmatprep.subr.mxu0 %v675
        %945 = vmatpush1.msra.mxu0 %v674
        %946 = vmatprep.subr.mxu0 %v671
        %947 = vmatpush1.msra.mxu0 %v670
        %948 = vmatprep.subr.mxu0 %v667
        %949 = vmatpush1.msra.mxu0 %v666
        %950 = vmatprep.subr.mxu0 %v663
        %951 = vmatpush1.msra.mxu0 %v662
        %952 = vmatprep.subr.mxu0 %v659
        %953 = vmatpush1.msra.mxu0 %v658
        %954 = vmatprep.subr.mxu0 %v655
        %955 = vmatpush1.msra.mxu0 %v654
        %956 = vmatprep.subr.mxu0 0.0
        %957 = vmatpush2.msra.mxu0 0.0
        %958 = vmatprep.subr.mxu0 0.0
        %959 = vmatpush2.msra.mxu0 0.0
        %960 = vmatprep.subr.mxu0 0.0
        %961 = vmatpush2.msra.mxu0 0.0
        %962 = vmatprep.subr.mxu0 0.0
        %963 = vmatpush2.msra.mxu0 0.0
        %964 = vmatprep.subr.mxu0 0.0
        %965 = vmatpush2.msra.mxu0 0.0
        %966 = vmatprep.subr.mxu0 0.0
        %967 = vmatpush2.msra.mxu0 0.0
        %968 = vmatprep.subr.mxu0 0.0
        %969 = vmatpush2.msra.mxu0 0.0
        %970 = vmatprep.subr.mxu0 0.0
        %971 = vmatpush2.msra.mxu0 0.0
        %972 = vmatprep.subr.mxu0 0.0
        %973 = vmatpush2.msra.mxu0 0.0
        %974 = vmatprep.subr.mxu0 0.0
        %975 = vmatpush2.msra.mxu0 0.0
        %976 = vmatprep.subr.mxu0 0.0
        %977 = vmatpush2.msra.mxu0 0.0
        %978 = vmatprep.subr.mxu0 0.0
        %979 = vmatpush2.msra.mxu0 0.0
        %980 = vmatprep.subr.mxu0 0.0
        %981 = vmatpush2.msra.mxu0 0.0
        %982 = vmatprep.subr.mxu0 0.0
        %983 = vmatpush2.msra.mxu0 0.0
        %984 = vmatprep.subr.mxu0 0.0
        %985 = vmatpush2.msra.mxu0 0.0
        %986 = vmatprep.subr.mxu0 0.0
        %987 = vmatpush2.msra.mxu0 0.0
        %988 = vmatprep.mubr.f32.mxu0 0.0
        %989 = vmatmul.mubr.f32.gmra.mxu0 %v653
        %v990 = vpop.f32.mrf.mxu0
        %v991 = vadd.f32 %v849, %v990
        %v992 = vpop.f32.mrf.mxu0
        %v993 = vadd.f32 %v851, %v992
        %994 = vdwg.mxu0
        %995 = vmatprep.subr.mxu0 %v717
        %996 = vmatpush1.msra.mxu0 %v716
        %997 = vmatprep.subr.mxu0 %v713
        %998 = vmatpush1.msra.mxu0 %v712
        %999 = vmatprep.subr.mxu0 %v709
        %1000 = vmatpush1.msra.mxu0 %v708
        %1001 = vmatprep.subr.mxu0 %v705
        %1002 = vmatpush1.msra.mxu0 %v704
        %1003 = vmatprep.subr.mxu0 %v701
        %1004 = vmatpush1.msra.mxu0 %v700
        %1005 = vmatprep.subr.mxu0 %v697
        %1006 = vmatpush1.msra.mxu0 %v696
        %1007 = vmatprep.subr.mxu0 %v693
        %1008 = vmatpush1.msra.mxu0 %v692
        %1009 = vmatprep.subr.mxu0 %v689
        %1010 = vmatpush1.msra.mxu0 %v688
        %1011 = vmatprep.subr.mxu0 %v685
        %1012 = vmatpush1.msra.mxu0 %v684
        %1013 = vmatprep.subr.mxu0 %v681
        %1014 = vmatpush1.msra.mxu0 %v680
        %1015 = vmatprep.subr.mxu0 %v677
        %1016 = vmatpush1.msra.mxu0 %v676
        %1017 = vmatprep.subr.mxu0 %v673
        %1018 = vmatpush1.msra.mxu0 %v672
        %1019 = vmatprep.subr.mxu0 %v669
        %1020 = vmatpush1.msra.mxu0 %v668
        %1021 = vmatprep.subr.mxu0 %v665
        %1022 = vmatpush1.msra.mxu0 %v664
        %1023 = vmatprep.subr.mxu0 %v661
        %1024 = vmatpush1.msra.mxu0 %v660
        %1025 = vmatprep.subr.mxu0 %v657
        %1026 = vmatpush1.msra.mxu0 %v656
        %1027 = vmatprep.subr.mxu0 0.0
        %1028 = vmatpush2.msra.mxu0 0.0
        %1029 = vmatprep.subr.mxu0 0.0
        %1030 = vmatpush2.msra.mxu0 0.0
        %1031 = vmatprep.subr.mxu0 0.0
        %1032 = vmatpush2.msra.mxu0 0.0
        %1033 = vmatprep.subr.mxu0 0.0
        %1034 = vmatpush2.msra.mxu0 0.0
        %1035 = vmatprep.subr.mxu0 0.0
        %1036 = vmatpush2.msra.mxu0 0.0
        %1037 = vmatprep.subr.mxu0 0.0
        %1038 = vmatpush2.msra.mxu0 0.0
        %1039 = vmatprep.subr.mxu0 0.0
        %1040 = vmatpush2.msra.mxu0 0.0
        %1041 = vmatprep.subr.mxu0 0.0
        %1042 = vmatpush2.msra.mxu0 0.0
        %1043 = vmatprep.subr.mxu0 0.0
        %1044 = vmatpush2.msra.mxu0 0.0
        %1045 = vmatprep.subr.mxu0 0.0
        %1046 = vmatpush2.msra.mxu0 0.0
        %1047 = vmatprep.subr.mxu0 0.0
        %1048 = vmatpush2.msra.mxu0 0.0
        %1049 = vmatprep.subr.mxu0 0.0
        %1050 = vmatpush2.msra.mxu0 0.0
        %1051 = vmatprep.subr.mxu0 0.0
        %1052 = vmatpush2.msra.mxu0 0.0
        %1053 = vmatprep.subr.mxu0 0.0
        %1054 = vmatpush2.msra.mxu0 0.0
        %1055 = vmatprep.subr.mxu0 0.0
        %1056 = vmatpush2.msra.mxu0 0.0
        %1057 = vmatprep.subr.mxu0 0.0
        %1058 = vmatpush2.msra.mxu0 0.0
        %1059 = vmatprep.mubr.f32.mxu0 0.0
        %1060 = vmatmul.mubr.f32.gmra.mxu0 %v653
        %v1061 = vpop.f32.mrf.mxu0
        %v1062 = vadd.f32 %v920, %v1061
        %v1063 = vpop.f32.mrf.mxu0
        %v1064 = vadd.f32 %v922, %v1063
        %1065 = vdwg.mxu0
        %v1066 = vld [vmem:[%s7] sm:$0xf]
        %v1068 = vlaneseq
        %v1069 = vshrl.u32 %v1068, 7
        %v1070 = vsub.s32 0, %v1069
        %v1071 = vrot.slane %v1066, %v1070
        %v1072 = vlaneseq
        %v1073 = vshrl.u32 %v1072, 7
        %v1074 = vsub.s32 1, %v1073
        %v1075 = vrot.slane %v1066, %v1074
        %v1076 = vlaneseq
        %v1077 = vshrl.u32 %v1076, 7
        %v1078 = vsub.s32 2, %v1077
        %v1079 = vrot.slane %v1066, %v1078
        %v1080 = vlaneseq
        %v1081 = vshrl.u32 %v1080, 7
        %v1082 = vsub.s32 3, %v1081
        %v1083 = vrot.slane %v1066, %v1082
        %v1088 = vadd.f32 %v991, %v1071
        %v1089 = vadd.f32 %v993, %v1075
        %v1090 = vadd.f32 %v1062, %v1079
        %v1091 = vadd.f32 %v1064, %v1083
        %v1092 = vxor.u32 %v1088, 2147483648
        %v1093 = vmul.f32 %v1092, 1.442695
        %v1094 = vpow.pop %v1093
        %v1095 = vadd.f32 %v1094, 1.0
        %v1096 = vrcp.pop %v1095
        %v1097 = vmul.f32 1.0, %v1096
        %v1098 = vxor.u32 %v1089, 2147483648
        %v1099 = vmul.f32 %v1098, 1.442695
        %v1100 = vpow.pop %v1099
        %v1101 = vadd.f32 %v1100, 1.0
        %v1102 = vrcp.pop %v1101
        %v1103 = vmul.f32 1.0, %v1102
        %v1104 = vtanh.pop %v1090
        %v1105 = vxor.u32 %v1091, 2147483648
        %v1106 = vmul.f32 %v1105, 1.442695
        %v1107 = vpow.pop %v1106
        %v1108 = vadd.f32 %v1107, 1.0
        %v1109 = vrcp.pop %v1108
        %v1110 = vmul.f32 1.0, %v1109
        %v1111 = vmul.f32 %v1103, %v561
        %v1112 = vmul.f32 %v1097, %v1104
        %v1113 = vadd.f32 %v1111, %v1112
        %v1114 = vtanh.pop %v1113
        %v1115 = vmul.f32 %v1110, %v1114
        %v1116 = vtanh.pop %v1115
        %v1117 = vstv %s563
        %vm1118 = vcmp.eq.s32.totalorder %v558, %v1117
        %v1119 = vsel %vm1118, %v1116, %v562
        %s1120 = sadd.s32 %s563, 1
        %s1121 = scalar_lea.vmem [#allocation6], 8
        %v1122 = vld [vmem:[%s1121] sm:$0xff]
        %1123 = vmatprep.subr.mxu0 0.0
        %1124 = vmatpush1.msra.mxu0 %v580
        %1125 = vmatprep.subr.mxu0 0.0
        %1126 = vmatpush1.msra.mxu0 %v579
        %1127 = vmatprep.subr.mxu0 0.0
        %1128 = vmatpush1.msra.mxu0 %v578
        %1129 = vmatprep.subr.mxu0 0.0
        %1130 = vmatpush1.msra.mxu0 %v577
        %1131 = vmatprep.subr.mxu0 0.0
        %1132 = vmatpush1.msra.mxu0 %v576
        %1133 = vmatprep.subr.mxu0 0.0
        %1134 = vmatpush1.msra.mxu0 %v575
        %1135 = vmatprep.subr.mxu0 0.0
        %1136 = vmatpush1.msra.mxu0 %v574
        %1137 = vmatprep.subr.mxu0 0.0
        %1138 = vmatpush1.msra.mxu0 %v573
        %1139 = vmatprep.subr.mxu0 0.0
        %1140 = vmatpush1.msra.mxu0 %v572
        %1141 = vmatprep.subr.mxu0 0.0
        %1142 = vmatpush1.msra.mxu0 %v571
        %1143 = vmatprep.subr.mxu0 0.0
        %1144 = vmatpush1.msra.mxu0 %v570
        %1145 = vmatprep.subr.mxu0 0.0
        %1146 = vmatpush1.msra.mxu0 %v569
        %1147 = vmatprep.subr.mxu0 0.0
        %1148 = vmatpush1.msra.mxu0 %v568
        %1149 = vmatprep.subr.mxu0 0.0
        %1150 = vmatpush1.msra.mxu0 %v567
        %1151 = vmatprep.subr.mxu0 0.0
        %1152 = vmatpush1.msra.mxu0 %v566
        %1153 = vmatprep.subr.mxu0 0.0
        %1154 = vmatpush1.msra.mxu0 %v565
        %1155 = vmatprep.subr.mxu0 0.0
        %1156 = vmatpush2.msra.mxu0 0.0
        %1157 = vmatprep.subr.mxu0 0.0
        %1158 = vmatpush2.msra.mxu0 0.0
        %1159 = vmatprep.subr.mxu0 0.0
        %1160 = vmatpush2.msra.mxu0 0.0
        %1161 = vmatprep.subr.mxu0 0.0
        %1162 = vmatpush2.msra.mxu0 0.0
        %1163 = vmatprep.subr.mxu0 0.0
        %1164 = vmatpush2.msra.mxu0 0.0
        %1165 = vmatprep.subr.mxu0 0.0
        %1166 = vmatpush2.msra.mxu0 0.0
        %1167 = vmatprep.subr.mxu0 0.0
        %1168 = vmatpush2.msra.mxu0 0.0
        %1169 = vmatprep.subr.mxu0 0.0
        %1170 = vmatpush2.msra.mxu0 0.0
        %1171 = vmatprep.subr.mxu0 0.0
        %1172 = vmatpush2.msra.mxu0 0.0
        %1173 = vmatprep.subr.mxu0 0.0
        %1174 = vmatpush2.msra.mxu0 0.0
        %1175 = vmatprep.subr.mxu0 0.0
        %1176 = vmatpush2.msra.mxu0 0.0
        %1177 = vmatprep.subr.mxu0 0.0
        %1178 = vmatpush2.msra.mxu0 0.0
        %1179 = vmatprep.subr.mxu0 0.0
        %1180 = vmatpush2.msra.mxu0 0.0
        %1181 = vmatprep.subr.mxu0 0.0
        %1182 = vmatpush2.msra.mxu0 0.0
        %1183 = vmatprep.subr.mxu0 0.0
        %1184 = vmatpush2.msra.mxu0 0.0
        %1185 = vmatprep.subr.mxu0 0.0
        %1186 = vmatpush2.msra.mxu0 0.0
        %1187 = vmatprep.mubr.f32.mxu0 0.0
        %1188 = vmatmul.mubr.f32.gmra.mxu0 %v652
        %v1189 = vpop.f32.mrf.mxu0
        %v1190 = vadd.f32 0.0, %v1189
        %v1191 = vpop.f32.mrf.mxu0
        %1192 = vdwg.mxu0
        %v1193 = vadd.f32 %v1122, %v1190
        %v1194 = vtanh.pop %v1193
        %v1195 = vtanh.pop %v1194
        %1196 = vmatprep.subr.mxu0 %v779
        %1197 = vmatpush1.msra.mxu0 %v778
        %1198 = vmatprep.subr.mxu0 %v775
        %1199 = vmatpush1.msra.mxu0 %v774
        %1200 = vmatprep.subr.mxu0 %v771
        %1201 = vmatpush1.msra.mxu0 %v770
        %1202 = vmatprep.subr.mxu0 %v767
        %1203 = vmatpush1.msra.mxu0 %v766
        %1204 = vmatprep.subr.mxu0 %v763
        %1205 = vmatpush1.msra.mxu0 %v762
        %1206 = vmatprep.subr.mxu0 %v759
        %1207 = vmatpush1.msra.mxu0 %v758
        %1208 = vmatprep.subr.mxu0 %v755
        %1209 = vmatpush1.msra.mxu0 %v754
        %1210 = vmatprep.subr.mxu0 %v751
        %1211 = vmatpush1.msra.mxu0 %v750
        %1212 = vmatprep.subr.mxu0 %v747
        %1213 = vmatpush1.msra.mxu0 %v746
        %1214 = vmatprep.subr.mxu0 %v743
        %1215 = vmatpush1.msra.mxu0 %v742
        %1216 = vmatprep.subr.mxu0 %v739
        %1217 = vmatpush1.msra.mxu0 %v738
        %1218 = vmatprep.subr.mxu0 %v735
        %1219 = vmatpush1.msra.mxu0 %v734
        %1220 = vmatprep.subr.mxu0 %v731
        %1221 = vmatpush1.msra.mxu0 %v730
        %1222 = vmatprep.subr.mxu0 %v727
        %1223 = vmatpush1.msra.mxu0 %v726
        %1224 = vmatprep.subr.mxu0 %v723
        %1225 = vmatpush1.msra.mxu0 %v722
        %1226 = vmatprep.subr.mxu0 %v719
        %1227 = vmatpush1.msra.mxu0 %v718
        %1228 = vmatprep.subr.mxu0 0.0
        %1229 = vmatpush2.msra.mxu0 0.0
        %1230 = vmatprep.subr.mxu0 0.0
        %1231 = vmatpush2.msra.mxu0 0.0
        %1232 = vmatprep.subr.mxu0 0.0
        %1233 = vmatpush2.msra.mxu0 0.0
        %1234 = vmatprep.subr.mxu0 0.0
        %1235 = vmatpush2.msra.mxu0 0.0
        %1236 = vmatprep.subr.mxu0 0.0
        %1237 = vmatpush2.msra.mxu0 0.0
        %1238 = vmatprep.subr.mxu0 0.0
        %1239 = vmatpush2.msra.mxu0 0.0
        %1240 = vmatprep.subr.mxu0 0.0
        %1241 = vmatpush2.msra.mxu0 0.0
        %1242 = vmatprep.subr.mxu0 0.0
        %1243 = vmatpush2.msra.mxu0 0.0
        %1244 = vmatprep.subr.mxu0 0.0
        %1245 = vmatpush2.msra.mxu0 0.0
        %1246 = vmatprep.subr.mxu0 0.0
        %1247 = vmatpush2.msra.mxu0 0.0
        %1248 = vmatprep.subr.mxu0 0.0
        %1249 = vmatpush2.msra.mxu0 0.0
        %1250 = vmatprep.subr.mxu0 0.0
        %1251 = vmatpush2.msra.mxu0 0.0
        %1252 = vmatprep.subr.mxu0 0.0
        %1253 = vmatpush2.msra.mxu0 0.0
        %1254 = vmatprep.subr.mxu0 0.0
        %1255 = vmatpush2.msra.mxu0 0.0
        %1256 = vmatprep.subr.mxu0 0.0
        %1257 = vmatpush2.msra.mxu0 0.0
        %1258 = vmatprep.subr.mxu0 0.0
        %1259 = vmatpush2.msra.mxu0 0.0
        %1260 = vmatprep.mubr.f32.mxu0 0.0
        %1261 = vmatmul.mubr.f32.gmra.mxu0 %v1115
        %v1262 = vpop.f32.mrf.mxu0
        %v1263 = vadd.f32 0.0, %v1262
        %v1264 = vpop.f32.mrf.mxu0
        %v1265 = vadd.f32 0.0, %v1264
        %1266 = vdwg.mxu0
        %1267 = vmatprep.subr.mxu0 %v781
        %1268 = vmatpush1.msra.mxu0 %v780
        %1269 = vmatprep.subr.mxu0 %v777
        %1270 = vmatpush1.msra.mxu0 %v776
        %1271 = vmatprep.subr.mxu0 %v773
        %1272 = vmatpush1.msra.mxu0 %v772
        %1273 = vmatprep.subr.mxu0 %v769
        %1274 = vmatpush1.msra.mxu0 %v768
        %1275 = vmatprep.subr.mxu0 %v765
        %1276 = vmatpush1.msra.mxu0 %v764
        %1277 = vmatprep.subr.mxu0 %v761
        %1278 = vmatpush1.msra.mxu0 %v760
        %1279 = vmatprep.subr.mxu0 %v757
        %1280 = vmatpush1.msra.mxu0 %v756
        %1281 = vmatprep.subr.mxu0 %v753
        %1282 = vmatpush1.msra.mxu0 %v752
        %1283 = vmatprep.subr.mxu0 %v749
        %1284 = vmatpush1.msra.mxu0 %v748
        %1285 = vmatprep.subr.mxu0 %v745
        %1286 = vmatpush1.msra.mxu0 %v744
        %1287 = vmatprep.subr.mxu0 %v741
        %1288 = vmatpush1.msra.mxu0 %v740
        %1289 = vmatprep.subr.mxu0 %v737
        %1290 = vmatpush1.msra.mxu0 %v736
        %1291 = vmatprep.subr.mxu0 %v733
        %1292 = vmatpush1.msra.mxu0 %v732
        %1293 = vmatprep.subr.mxu0 %v729
        %1294 = vmatpush1.msra.mxu0 %v728
        %1295 = vmatprep.subr.mxu0 %v725
        %1296 = vmatpush1.msra.mxu0 %v724
        %1297 = vmatprep.subr.mxu0 %v721
        %1298 = vmatpush1.msra.mxu0 %v720
        %1299 = vmatprep.subr.mxu0 0.0
        %1300 = vmatpush2.msra.mxu0 0.0
        %1301 = vmatprep.subr.mxu0 0.0
        %1302 = vmatpush2.msra.mxu0 0.0
        %1303 = vmatprep.subr.mxu0 0.0
        %1304 = vmatpush2.msra.mxu0 0.0
        %1305 = vmatprep.subr.mxu0 0.0
        %1306 = vmatpush2.msra.mxu0 0.0
        %1307 = vmatprep.subr.mxu0 0.0
        %1308 = vmatpush2.msra.mxu0 0.0
        %1309 = vmatprep.subr.mxu0 0.0
        %1310 = vmatpush2.msra.mxu0 0.0
        %1311 = vmatprep.subr.mxu0 0.0
        %1312 = vmatpush2.msra.mxu0 0.0
        %1313 = vmatprep.subr.mxu0 0.0
        %1314 = vmatpush2.msra.mxu0 0.0
        %1315 = vmatprep.subr.mxu0 0.0
        %1316 = vmatpush2.msra.mxu0 0.0
        %1317 = vmatprep.subr.mxu0 0.0
        %1318 = vmatpush2.msra.mxu0 0.0
        %1319 = vmatprep.subr.mxu0 0.0
        %1320 = vmatpush2.msra.mxu0 0.0
        %1321 = vmatprep.subr.mxu0 0.0
        %1322 = vmatpush2.msra.mxu0 0.0
        %1323 = vmatprep.subr.mxu0 0.0
        %1324 = vmatpush2.msra.mxu0 0.0
        %1325 = vmatprep.subr.mxu0 0.0
        %1326 = vmatpush2.msra.mxu0 0.0
        %1327 = vmatprep.subr.mxu0 0.0
        %1328 = vmatpush2.msra.mxu0 0.0
        %1329 = vmatprep.subr.mxu0 0.0
        %1330 = vmatpush2.msra.mxu0 0.0
        %1331 = vmatprep.mubr.f32.mxu0 0.0
        %1332 = vmatmul.mubr.f32.gmra.mxu0 %v1115
        %v1333 = vpop.f32.mrf.mxu0
        %v1334 = vadd.f32 0.0, %v1333
        %v1335 = vpop.f32.mrf.mxu0
        %v1336 = vadd.f32 0.0, %v1335
        %1337 = vdwg.mxu0
        %1338 = vmatprep.subr.mxu0 %v715
        %1339 = vmatpush1.msra.mxu0 %v714
        %1340 = vmatprep.subr.mxu0 %v711
        %1341 = vmatpush1.msra.mxu0 %v710
        %1342 = vmatprep.subr.mxu0 %v707
        %1343 = vmatpush1.msra.mxu0 %v706
        %1344 = vmatprep.subr.mxu0 %v703
        %1345 = vmatpush1.msra.mxu0 %v702
        %1346 = vmatprep.subr.mxu0 %v699
        %1347 = vmatpush1.msra.mxu0 %v698
        %1348 = vmatprep.subr.mxu0 %v695
        %1349 = vmatpush1.msra.mxu0 %v694
        %1350 = vmatprep.subr.mxu0 %v691
        %1351 = vmatpush1.msra.mxu0 %v690
        %1352 = vmatprep.subr.mxu0 %v687
        %1353 = vmatpush1.msra.mxu0 %v686
        %1354 = vmatprep.subr.mxu0 %v683
        %1355 = vmatpush1.msra.mxu0 %v682
        %1356 = vmatprep.subr.mxu0 %v679
        %1357 = vmatpush1.msra.mxu0 %v678
        %1358 = vmatprep.subr.mxu0 %v675
        %1359 = vmatpush1.msra.mxu0 %v674
        %1360 = vmatprep.subr.mxu0 %v671
        %1361 = vmatpush1.msra.mxu0 %v670
        %1362 = vmatprep.subr.mxu0 %v667
        %1363 = vmatpush1.msra.mxu0 %v666
        %1364 = vmatprep.subr.mxu0 %v663
        %1365 = vmatpush1.msra.mxu0 %v662
        %1366 = vmatprep.subr.mxu0 %v659
        %1367 = vmatpush1.msra.mxu0 %v658
        %1368 = vmatprep.subr.mxu0 %v655
        %1369 = vmatpush1.msra.mxu0 %v654
        %1370 = vmatprep.subr.mxu0 0.0
        %1371 = vmatpush2.msra.mxu0 0.0
        %1372 = vmatprep.subr.mxu0 0.0
        %1373 = vmatpush2.msra.mxu0 0.0
        %1374 = vmatprep.subr.mxu0 0.0
        %1375 = vmatpush2.msra.mxu0 0.0
        %1376 = vmatprep.subr.mxu0 0.0
        %1377 = vmatpush2.msra.mxu0 0.0
        %1378 = vmatprep.subr.mxu0 0.0
        %1379 = vmatpush2.msra.mxu0 0.0
        %1380 = vmatprep.subr.mxu0 0.0
        %1381 = vmatpush2.msra.mxu0 0.0
        %1382 = vmatprep.subr.mxu0 0.0
        %1383 = vmatpush2.msra.mxu0 0.0
        %1384 = vmatprep.subr.mxu0 0.0
        %1385 = vmatpush2.msra.mxu0 0.0
        %1386 = vmatprep.subr.mxu0 0.0
        %1387 = vmatpush2.msra.mxu0 0.0
        %1388 = vmatprep.subr.mxu0 0.0
        %1389 = vmatpush2.msra.mxu0 0.0
        %1390 = vmatprep.subr.mxu0 0.0
        %1391 = vmatpush2.msra.mxu0 0.0
        %1392 = vmatprep.subr.mxu0 0.0
        %1393 = vmatpush2.msra.mxu0 0.0
        %1394 = vmatprep.subr.mxu0 0.0
        %1395 = vmatpush2.msra.mxu0 0.0
        %1396 = vmatprep.subr.mxu0 0.0
        %1397 = vmatpush2.msra.mxu0 0.0
        %1398 = vmatprep.subr.mxu0 0.0
        %1399 = vmatpush2.msra.mxu0 0.0
        %1400 = vmatprep.subr.mxu0 0.0
        %1401 = vmatpush2.msra.mxu0 0.0
        %1402 = vmatprep.mubr.f32.mxu0 0.0
        %1403 = vmatmul.mubr.f32.gmra.mxu0 %v1195
        %v1404 = vpop.f32.mrf.mxu0
        %v1405 = vadd.f32 %v1263, %v1404
        %v1406 = vpop.f32.mrf.mxu0
        %v1407 = vadd.f32 %v1265, %v1406
        %1408 = vdwg.mxu0
        %1409 = vmatprep.subr.mxu0 %v717
        %1410 = vmatpush1.msra.mxu0 %v716
        %1411 = vmatprep.subr.mxu0 %v713
        %1412 = vmatpush1.msra.mxu0 %v712
        %1413 = vmatprep.subr.mxu0 %v709
        %1414 = vmatpush1.msra.mxu0 %v708
        %1415 = vmatprep.subr.mxu0 %v705
        %1416 = vmatpush1.msra.mxu0 %v704
        %1417 = vmatprep.subr.mxu0 %v701
        %1418 = vmatpush1.msra.mxu0 %v700
        %1419 = vmatprep.subr.mxu0 %v697
        %1420 = vmatpush1.msra.mxu0 %v696
        %1421 = vmatprep.subr.mxu0 %v693
        %1422 = vmatpush1.msra.mxu0 %v692
        %1423 = vmatprep.subr.mxu0 %v689
        %1424 = vmatpush1.msra.mxu0 %v688
        %1425 = vmatprep.subr.mxu0 %v685
        %1426 = vmatpush1.msra.mxu0 %v684
        %1427 = vmatprep.subr.mxu0 %v681
        %1428 = vmatpush1.msra.mxu0 %v680
        %1429 = vmatprep.subr.mxu0 %v677
        %1430 = vmatpush1.msra.mxu0 %v676
        %1431 = vmatprep.subr.mxu0 %v673
        %1432 = vmatpush1.msra.mxu0 %v672
        %1433 = vmatprep.subr.mxu0 %v669
        %1434 = vmatpush1.msra.mxu0 %v668
        %1435 = vmatprep.subr.mxu0 %v665
        %1436 = vmatpush1.msra.mxu0 %v664
        %1437 = vmatprep.subr.mxu0 %v661
        %1438 = vmatpush1.msra.mxu0 %v660
        %1439 = vmatprep.subr.mxu0 %v657
        %1440 = vmatpush1.msra.mxu0 %v656
        %1441 = vmatprep.subr.mxu0 0.0
        %1442 = vmatpush2.msra.mxu0 0.0
        %1443 = vmatprep.subr.mxu0 0.0
        %1444 = vmatpush2.msra.mxu0 0.0
        %1445 = vmatprep.subr.mxu0 0.0
        %1446 = vmatpush2.msra.mxu0 0.0
        %1447 = vmatprep.subr.mxu0 0.0
        %1448 = vmatpush2.msra.mxu0 0.0
        %1449 = vmatprep.subr.mxu0 0.0
        %1450 = vmatpush2.msra.mxu0 0.0
        %1451 = vmatprep.subr.mxu0 0.0
        %1452 = vmatpush2.msra.mxu0 0.0
        %1453 = vmatprep.subr.mxu0 0.0
        %1454 = vmatpush2.msra.mxu0 0.0
        %1455 = vmatprep.subr.mxu0 0.0
        %1456 = vmatpush2.msra.mxu0 0.0
        %1457 = vmatprep.subr.mxu0 0.0
        %1458 = vmatpush2.msra.mxu0 0.0
        %1459 = vmatprep.subr.mxu0 0.0
        %1460 = vmatpush2.msra.mxu0 0.0
        %1461 = vmatprep.subr.mxu0 0.0
        %1462 = vmatpush2.msra.mxu0 0.0
        %1463 = vmatprep.subr.mxu0 0.0
        %1464 = vmatpush2.msra.mxu0 0.0
        %1465 = vmatprep.subr.mxu0 0.0
        %1466 = vmatpush2.msra.mxu0 0.0
        %1467 = vmatprep.subr.mxu0 0.0
        %1468 = vmatpush2.msra.mxu0 0.0
        %1469 = vmatprep.subr.mxu0 0.0
        %1470 = vmatpush2.msra.mxu0 0.0
        %1471 = vmatprep.subr.mxu0 0.0
        %1472 = vmatpush2.msra.mxu0 0.0
        %1473 = vmatprep.mubr.f32.mxu0 0.0
        %1474 = vmatmul.mubr.f32.gmra.mxu0 %v1195
        %v1475 = vpop.f32.mrf.mxu0
        %v1476 = vadd.f32 %v1334, %v1475
        %v1477 = vpop.f32.mrf.mxu0
        %v1478 = vadd.f32 %v1336, %v1477
        %1479 = vdwg.mxu0
        %v1480 = vadd.f32 %v1405, %v1071
        %v1481 = vadd.f32 %v1407, %v1075
        %v1482 = vadd.f32 %v1476, %v1079
        %v1483 = vadd.f32 %v1478, %v1083
        %v1484 = vxor.u32 %v1480, 2147483648
        %v1485 = vmul.f32 %v1484, 1.442695
        %v1486 = vpow.pop %v1485
        %v1487 = vadd.f32 %v1486, 1.0
        %v1488 = vrcp.pop %v1487
        %v1489 = vmul.f32 1.0, %v1488
        %v1490 = vxor.u32 %v1481, 2147483648
        %v1491 = vmul.f32 %v1490, 1.442695
        %v1492 = vpow.pop %v1491
        %v1493 = vadd.f32 %v1492, 1.0
        %v1494 = vrcp.pop %v1493
        %v1495 = vmul.f32 1.0, %v1494
        %v1496 = vtanh.pop %v1482
        %v1497 = vxor.u32 %v1483, 2147483648
        %v1498 = vmul.f32 %v1497, 1.442695
        %v1499 = vpow.pop %v1498
        %v1500 = vadd.f32 %v1499, 1.0
        %v1501 = vrcp.pop %v1500
        %v1502 = vmul.f32 1.0, %v1501
        %v1503 = vmul.f32 %v1495, %v1113
        %v1504 = vmul.f32 %v1489, %v1496
        %v1505 = vadd.f32 %v1503, %v1504
        %v1506 = vtanh.pop %v1505
        %v1507 = vmul.f32 %v1502, %v1506
        %v1508 = vtanh.pop %v1507
        %v1509 = vstv %s1120
        %vm1510 = vcmp.eq.s32.totalorder %v558, %v1509
        %v1511 = vsel %vm1510, %v1508, %v1119
        %s1512 = sadd.s32 %s563, 2
        %s1513 = scalar_lea.vmem [#allocation6], 16
        %v1514 = vld [vmem:[%s1513] sm:$0xff]
        %1515 = vmatprep.subr.mxu0 0.0
        %1516 = vmatpush1.msra.mxu0 %v580
        %1517 = vmatprep.subr.mxu0 0.0
        %1518 = vmatpush1.msra.mxu0 %v579
        %1519 = vmatprep.subr.mxu0 0.0
        %1520 = vmatpush1.msra.mxu0 %v578
        %1521 = vmatprep.subr.mxu0 0.0
        %1522 = vmatpush1.msra.mxu0 %v577
        %1523 = vmatprep.subr.mxu0 0.0
        %1524 = vmatpush1.msra.mxu0 %v576
        %1525 = vmatprep.subr.mxu0 0.0
        %1526 = vmatpush1.msra.mxu0 %v575
        %1527 = vmatprep.subr.mxu0 0.0
        %1528 = vmatpush1.msra.mxu0 %v574
        %1529 = vmatprep.subr.mxu0 0.0
        %1530 = vmatpush1.msra.mxu0 %v573
        %1531 = vmatprep.subr.mxu0 0.0
        %1532 = vmatpush1.msra.mxu0 %v572
        %1533 = vmatprep.subr.mxu0 0.0
        %1534 = vmatpush1.msra.mxu0 %v571
        %1535 = vmatprep.subr.mxu0 0.0
        %1536 = vmatpush1.msra.mxu0 %v570
        %1537 = vmatprep.subr.mxu0 0.0
        %1538 = vmatpush1.msra.mxu0 %v569
        %1539 = vmatprep.subr.mxu0 0.0
        %1540 = vmatpush1.msra.mxu0 %v568
        %1541 = vmatprep.subr.mxu0 0.0
        %1542 = vmatpush1.msra.mxu0 %v567
        %1543 = vmatprep.subr.mxu0 0.0
        %1544 = vmatpush1.msra.mxu0 %v566
        %1545 = vmatprep.subr.mxu0 0.0
        %1546 = vmatpush1.msra.mxu0 %v565
        %1547 = vmatprep.subr.mxu0 0.0
        %1548 = vmatpush2.msra.mxu0 0.0
        %1549 = vmatprep.subr.mxu0 0.0
        %1550 = vmatpush2.msra.mxu0 0.0
        %1551 = vmatprep.subr.mxu0 0.0
        %1552 = vmatpush2.msra.mxu0 0.0
        %1553 = vmatprep.subr.mxu0 0.0
        %1554 = vmatpush2.msra.mxu0 0.0
        %1555 = vmatprep.subr.mxu0 0.0
        %1556 = vmatpush2.msra.mxu0 0.0
        %1557 = vmatprep.subr.mxu0 0.0
        %1558 = vmatpush2.msra.mxu0 0.0
        %1559 = vmatprep.subr.mxu0 0.0
        %1560 = vmatpush2.msra.mxu0 0.0
        %1561 = vmatprep.subr.mxu0 0.0
        %1562 = vmatpush2.msra.mxu0 0.0
        %1563 = vmatprep.subr.mxu0 0.0
        %1564 = vmatpush2.msra.mxu0 0.0
        %1565 = vmatprep.subr.mxu0 0.0
        %1566 = vmatpush2.msra.mxu0 0.0
        %1567 = vmatprep.subr.mxu0 0.0
        %1568 = vmatpush2.msra.mxu0 0.0
        %1569 = vmatprep.subr.mxu0 0.0
        %1570 = vmatpush2.msra.mxu0 0.0
        %1571 = vmatprep.subr.mxu0 0.0
        %1572 = vmatpush2.msra.mxu0 0.0
        %1573 = vmatprep.subr.mxu0 0.0
        %1574 = vmatpush2.msra.mxu0 0.0
        %1575 = vmatprep.subr.mxu0 0.0
        %1576 = vmatpush2.msra.mxu0 0.0
        %1577 = vmatprep.subr.mxu0 0.0
        %1578 = vmatpush2.msra.mxu0 0.0
        %1579 = vmatprep.mubr.f32.mxu0 0.0
        %1580 = vmatmul.mubr.f32.gmra.mxu0 %v1194
        %v1581 = vpop.f32.mrf.mxu0
        %v1582 = vadd.f32 0.0, %v1581
        %v1583 = vpop.f32.mrf.mxu0
        %1584 = vdwg.mxu0
        %v1585 = vadd.f32 %v1514, %v1582
        %v1586 = vtanh.pop %v1585
        %v1587 = vtanh.pop %v1586
        %1588 = vmatprep.subr.mxu0 %v779
        %1589 = vmatpush1.msra.mxu0 %v778
        %1590 = vmatprep.subr.mxu0 %v775
        %1591 = vmatpush1.msra.mxu0 %v774
        %1592 = vmatprep.subr.mxu0 %v771
        %1593 = vmatpush1.msra.mxu0 %v770
        %1594 = vmatprep.subr.mxu0 %v767
        %1595 = vmatpush1.msra.mxu0 %v766
        %1596 = vmatprep.subr.mxu0 %v763
        %1597 = vmatpush1.msra.mxu0 %v762
        %1598 = vmatprep.subr.mxu0 %v759
        %1599 = vmatpush1.msra.mxu0 %v758
        %1600 = vmatprep.subr.mxu0 %v755
        %1601 = vmatpush1.msra.mxu0 %v754
        %1602 = vmatprep.subr.mxu0 %v751
        %1603 = vmatpush1.msra.mxu0 %v750
        %1604 = vmatprep.subr.mxu0 %v747
        %1605 = vmatpush1.msra.mxu0 %v746
        %1606 = vmatprep.subr.mxu0 %v743
        %1607 = vmatpush1.msra.mxu0 %v742
        %1608 = vmatprep.subr.mxu0 %v739
        %1609 = vmatpush1.msra.mxu0 %v738
        %1610 = vmatprep.subr.mxu0 %v735
        %1611 = vmatpush1.msra.mxu0 %v734
        %1612 = vmatprep.subr.mxu0 %v731
        %1613 = vmatpush1.msra.mxu0 %v730
        %1614 = vmatprep.subr.mxu0 %v727
        %1615 = vmatpush1.msra.mxu0 %v726
        %1616 = vmatprep.subr.mxu0 %v723
        %1617 = vmatpush1.msra.mxu0 %v722
        %1618 = vmatprep.subr.mxu0 %v719
        %1619 = vmatpush1.msra.mxu0 %v718
        %1620 = vmatprep.subr.mxu0 0.0
        %1621 = vmatpush2.msra.mxu0 0.0
        %1622 = vmatprep.subr.mxu0 0.0
        %1623 = vmatpush2.msra.mxu0 0.0
        %1624 = vmatprep.subr.mxu0 0.0
        %1625 = vmatpush2.msra.mxu0 0.0
        %1626 = vmatprep.subr.mxu0 0.0
        %1627 = vmatpush2.msra.mxu0 0.0
        %1628 = vmatprep.subr.mxu0 0.0
        %1629 = vmatpush2.msra.mxu0 0.0
        %1630 = vmatprep.subr.mxu0 0.0
        %1631 = vmatpush2.msra.mxu0 0.0
        %1632 = vmatprep.subr.mxu0 0.0
        %1633 = vmatpush2.msra.mxu0 0.0
        %1634 = vmatprep.subr.mxu0 0.0
        %1635 = vmatpush2.msra.mxu0 0.0
        %1636 = vmatprep.subr.mxu0 0.0
        %1637 = vmatpush2.msra.mxu0 0.0
        %1638 = vmatprep.subr.mxu0 0.0
        %1639 = vmatpush2.msra.mxu0 0.0
        %1640 = vmatprep.subr.mxu0 0.0
        %1641 = vmatpush2.msra.mxu0 0.0
        %1642 = vmatprep.subr.mxu0 0.0
        %1643 = vmatpush2.msra.mxu0 0.0
        %1644 = vmatprep.subr.mxu0 0.0
        %1645 = vmatpush2.msra.mxu0 0.0
        %1646 = vmatprep.subr.mxu0 0.0
        %1647 = vmatpush2.msra.mxu0 0.0
        %1648 = vmatprep.subr.mxu0 0.0
        %1649 = vmatpush2.msra.mxu0 0.0
        %1650 = vmatprep.subr.mxu0 0.0
        %1651 = vmatpush2.msra.mxu0 0.0
        %1652 = vmatprep.mubr.f32.mxu0 0.0
        %1653 = vmatmul.mubr.f32.gmra.mxu0 %v1507
        %v1654 = vpop.f32.mrf.mxu0
        %v1655 = vadd.f32 0.0, %v1654
        %v1656 = vpop.f32.mrf.mxu0
        %v1657 = vadd.f32 0.0, %v1656
        %1658 = vdwg.mxu0
        %1659 = vmatprep.subr.mxu0 %v781
        %1660 = vmatpush1.msra.mxu0 %v780
        %1661 = vmatprep.subr.mxu0 %v777
        %1662 = vmatpush1.msra.mxu0 %v776
        %1663 = vmatprep.subr.mxu0 %v773
        %1664 = vmatpush1.msra.mxu0 %v772
        %1665 = vmatprep.subr.mxu0 %v769
        %1666 = vmatpush1.msra.mxu0 %v768
        %1667 = vmatprep.subr.mxu0 %v765
        %1668 = vmatpush1.msra.mxu0 %v764
        %1669 = vmatprep.subr.mxu0 %v761
        %1670 = vmatpush1.msra.mxu0 %v760
        %1671 = vmatprep.subr.mxu0 %v757
        %1672 = vmatpush1.msra.mxu0 %v756
        %1673 = vmatprep.subr.mxu0 %v753
        %1674 = vmatpush1.msra.mxu0 %v752
        %1675 = vmatprep.subr.mxu0 %v749
        %1676 = vmatpush1.msra.mxu0 %v748
        %1677 = vmatprep.subr.mxu0 %v745
        %1678 = vmatpush1.msra.mxu0 %v744
        %1679 = vmatprep.subr.mxu0 %v741
        %1680 = vmatpush1.msra.mxu0 %v740
        %1681 = vmatprep.subr.mxu0 %v737
        %1682 = vmatpush1.msra.mxu0 %v736
        %1683 = vmatprep.subr.mxu0 %v733
        %1684 = vmatpush1.msra.mxu0 %v732
        %1685 = vmatprep.subr.mxu0 %v729
        %1686 = vmatpush1.msra.mxu0 %v728
        %1687 = vmatprep.subr.mxu0 %v725
        %1688 = vmatpush1.msra.mxu0 %v724
        %1689 = vmatprep.subr.mxu0 %v721
        %1690 = vmatpush1.msra.mxu0 %v720
        %1691 = vmatprep.subr.mxu0 0.0
        %1692 = vmatpush2.msra.mxu0 0.0
        %1693 = vmatprep.subr.mxu0 0.0
        %1694 = vmatpush2.msra.mxu0 0.0
        %1695 = vmatprep.subr.mxu0 0.0
        %1696 = vmatpush2.msra.mxu0 0.0
        %1697 = vmatprep.subr.mxu0 0.0
        %1698 = vmatpush2.msra.mxu0 0.0
        %1699 = vmatprep.subr.mxu0 0.0
        %1700 = vmatpush2.msra.mxu0 0.0
        %1701 = vmatprep.subr.mxu0 0.0
        %1702 = vmatpush2.msra.mxu0 0.0
        %1703 = vmatprep.subr.mxu0 0.0
        %1704 = vmatpush2.msra.mxu0 0.0
        %1705 = vmatprep.subr.mxu0 0.0
        %1706 = vmatpush2.msra.mxu0 0.0
        %1707 = vmatprep.subr.mxu0 0.0
        %1708 = vmatpush2.msra.mxu0 0.0
        %1709 = vmatprep.subr.mxu0 0.0
        %1710 = vmatpush2.msra.mxu0 0.0
        %1711 = vmatprep.subr.mxu0 0.0
        %1712 = vmatpush2.msra.mxu0 0.0
        %1713 = vmatprep.subr.mxu0 0.0
        %1714 = vmatpush2.msra.mxu0 0.0
        %1715 = vmatprep.subr.mxu0 0.0
        %1716 = vmatpush2.msra.mxu0 0.0
        %1717 = vmatprep.subr.mxu0 0.0
        %1718 = vmatpush2.msra.mxu0 0.0
        %1719 = vmatprep.subr.mxu0 0.0
        %1720 = vmatpush2.msra.mxu0 0.0
        %1721 = vmatprep.subr.mxu0 0.0
        %1722 = vmatpush2.msra.mxu0 0.0
        %1723 = vmatprep.mubr.f32.mxu0 0.0
        %1724 = vmatmul.mubr.f32.gmra.mxu0 %v1507
        %v1725 = vpop.f32.mrf.mxu0
        %v1726 = vadd.f32 0.0, %v1725
        %v1727 = vpop.f32.mrf.mxu0
        %v1728 = vadd.f32 0.0, %v1727
        %1729 = vdwg.mxu0
        %1730 = vmatprep.subr.mxu0 %v715
        %1731 = vmatpush1.msra.mxu0 %v714
        %1732 = vmatprep.subr.mxu0 %v711
        %1733 = vmatpush1.msra.mxu0 %v710
        %1734 = vmatprep.subr.mxu0 %v707
        %1735 = vmatpush1.msra.mxu0 %v706
        %1736 = vmatprep.subr.mxu0 %v703
        %1737 = vmatpush1.msra.mxu0 %v702
        %1738 = vmatprep.subr.mxu0 %v699
        %1739 = vmatpush1.msra.mxu0 %v698
        %1740 = vmatprep.subr.mxu0 %v695
        %1741 = vmatpush1.msra.mxu0 %v694
        %1742 = vmatprep.subr.mxu0 %v691
        %1743 = vmatpush1.msra.mxu0 %v690
        %1744 = vmatprep.subr.mxu0 %v687
        %1745 = vmatpush1.msra.mxu0 %v686
        %1746 = vmatprep.subr.mxu0 %v683
        %1747 = vmatpush1.msra.mxu0 %v682
        %1748 = vmatprep.subr.mxu0 %v679
        %1749 = vmatpush1.msra.mxu0 %v678
        %1750 = vmatprep.subr.mxu0 %v675
        %1751 = vmatpush1.msra.mxu0 %v674
        %1752 = vmatprep.subr.mxu0 %v671
        %1753 = vmatpush1.msra.mxu0 %v670
        %1754 = vmatprep.subr.mxu0 %v667
        %1755 = vmatpush1.msra.mxu0 %v666
        %1756 = vmatprep.subr.mxu0 %v663
        %1757 = vmatpush1.msra.mxu0 %v662
        %1758 = vmatprep.subr.mxu0 %v659
        %1759 = vmatpush1.msra.mxu0 %v658
        %1760 = vmatprep.subr.mxu0 %v655
        %1761 = vmatpush1.msra.mxu0 %v654
        %1762 = vmatprep.subr.mxu0 0.0
        %1763 = vmatpush2.msra.mxu0 0.0
        %1764 = vmatprep.subr.mxu0 0.0
        %1765 = vmatpush2.msra.mxu0 0.0
        %1766 = vmatprep.subr.mxu0 0.0
        %1767 = vmatpush2.msra.mxu0 0.0
        %1768 = vmatprep.subr.mxu0 0.0
        %1769 = vmatpush2.msra.mxu0 0.0
        %1770 = vmatprep.subr.mxu0 0.0
        %1771 = vmatpush2.msra.mxu0 0.0
        %1772 = vmatprep.subr.mxu0 0.0
        %1773 = vmatpush2.msra.mxu0 0.0
        %1774 = vmatprep.subr.mxu0 0.0
        %1775 = vmatpush2.msra.mxu0 0.0
        %1776 = vmatprep.subr.mxu0 0.0
        %1777 = vmatpush2.msra.mxu0 0.0
        %1778 = vmatprep.subr.mxu0 0.0
        %1779 = vmatpush2.msra.mxu0 0.0
        %1780 = vmatprep.subr.mxu0 0.0
        %1781 = vmatpush2.msra.mxu0 0.0
        %1782 = vmatprep.subr.mxu0 0.0
        %1783 = vmatpush2.msra.mxu0 0.0
        %1784 = vmatprep.subr.mxu0 0.0
        %1785 = vmatpush2.msra.mxu0 0.0
        %1786 = vmatprep.subr.mxu0 0.0
        %1787 = vmatpush2.msra.mxu0 0.0
        %1788 = vmatprep.subr.mxu0 0.0
        %1789 = vmatpush2.msra.mxu0 0.0
        %1790 = vmatprep.subr.mxu0 0.0
        %1791 = vmatpush2.msra.mxu0 0.0
        %1792 = vmatprep.subr.mxu0 0.0
        %1793 = vmatpush2.msra.mxu0 0.0
        %1794 = vmatprep.mubr.f32.mxu0 0.0
        %1795 = vmatmul.mubr.f32.gmra.mxu0 %v1587
        %v1796 = vpop.f32.mrf.mxu0
        %v1797 = vadd.f32 %v1655, %v1796
        %v1798 = vpop.f32.mrf.mxu0
        %v1799 = vadd.f32 %v1657, %v1798
        %1800 = vdwg.mxu0
        %1801 = vmatprep.subr.mxu0 %v717
        %1802 = vmatpush1.msra.mxu0 %v716
        %1803 = vmatprep.subr.mxu0 %v713
        %1804 = vmatpush1.msra.mxu0 %v712
        %1805 = vmatprep.subr.mxu0 %v709
        %1806 = vmatpush1.msra.mxu0 %v708
        %1807 = vmatprep.subr.mxu0 %v705
        %1808 = vmatpush1.msra.mxu0 %v704
        %1809 = vmatprep.subr.mxu0 %v701
        %1810 = vmatpush1.msra.mxu0 %v700
        %1811 = vmatprep.subr.mxu0 %v697
        %1812 = vmatpush1.msra.mxu0 %v696
        %1813 = vmatprep.subr.mxu0 %v693
        %1814 = vmatpush1.msra.mxu0 %v692
        %1815 = vmatprep.subr.mxu0 %v689
        %1816 = vmatpush1.msra.mxu0 %v688
        %1817 = vmatprep.subr.mxu0 %v685
        %1818 = vmatpush1.msra.mxu0 %v684
        %1819 = vmatprep.subr.mxu0 %v681
        %1820 = vmatpush1.msra.mxu0 %v680
        %1821 = vmatprep.subr.mxu0 %v677
        %1822 = vmatpush1.msra.mxu0 %v676
        %1823 = vmatprep.subr.mxu0 %v673
        %1824 = vmatpush1.msra.mxu0 %v672
        %1825 = vmatprep.subr.mxu0 %v669
        %1826 = vmatpush1.msra.mxu0 %v668
        %1827 = vmatprep.subr.mxu0 %v665
        %1828 = vmatpush1.msra.mxu0 %v664
        %1829 = vmatprep.subr.mxu0 %v661
        %1830 = vmatpush1.msra.mxu0 %v660
        %1831 = vmatprep.subr.mxu0 %v657
        %1832 = vmatpush1.msra.mxu0 %v656
        %1833 = vmatprep.subr.mxu0 0.0
        %1834 = vmatpush2.msra.mxu0 0.0
        %1835 = vmatprep.subr.mxu0 0.0
        %1836 = vmatpush2.msra.mxu0 0.0
        %1837 = vmatprep.subr.mxu0 0.0
        %1838 = vmatpush2.msra.mxu0 0.0
        %1839 = vmatprep.subr.mxu0 0.0
        %1840 = vmatpush2.msra.mxu0 0.0
        %1841 = vmatprep.subr.mxu0 0.0
        %1842 = vmatpush2.msra.mxu0 0.0
        %1843 = vmatprep.subr.mxu0 0.0
        %1844 = vmatpush2.msra.mxu0 0.0
        %1845 = vmatprep.subr.mxu0 0.0
        %1846 = vmatpush2.msra.mxu0 0.0
        %1847 = vmatprep.subr.mxu0 0.0
        %1848 = vmatpush2.msra.mxu0 0.0
        %1849 = vmatprep.subr.mxu0 0.0
        %1850 = vmatpush2.msra.mxu0 0.0
        %1851 = vmatprep.subr.mxu0 0.0
        %1852 = vmatpush2.msra.mxu0 0.0
        %1853 = vmatprep.subr.mxu0 0.0
        %1854 = vmatpush2.msra.mxu0 0.0
        %1855 = vmatprep.subr.mxu0 0.0
        %1856 = vmatpush2.msra.mxu0 0.0
        %1857 = vmatprep.subr.mxu0 0.0
        %1858 = vmatpush2.msra.mxu0 0.0
        %1859 = vmatprep.subr.mxu0 0.0
        %1860 = vmatpush2.msra.mxu0 0.0
        %1861 = vmatprep.subr.mxu0 0.0
        %1862 = vmatpush2.msra.mxu0 0.0
        %1863 = vmatprep.subr.mxu0 0.0
        %1864 = vmatpush2.msra.mxu0 0.0
        %1865 = vmatprep.mubr.f32.mxu0 0.0
        %1866 = vmatmul.mubr.f32.gmra.mxu0 %v1587
        %v1867 = vpop.f32.mrf.mxu0
        %v1868 = vadd.f32 %v1726, %v1867
        %v1869 = vpop.f32.mrf.mxu0
        %v1870 = vadd.f32 %v1728, %v1869
        %1871 = vdwg.mxu0
        %v1872 = vadd.f32 %v1797, %v1071
        %v1873 = vadd.f32 %v1799, %v1075
        %v1874 = vadd.f32 %v1868, %v1079
        %v1875 = vadd.f32 %v1870, %v1083
        %v1876 = vxor.u32 %v1872, 2147483648
        %v1877 = vmul.f32 %v1876, 1.442695
        %v1878 = vpow.pop %v1877
        %v1879 = vadd.f32 %v1878, 1.0
        %v1880 = vrcp.pop %v1879
        %v1881 = vmul.f32 1.0, %v1880
        %v1882 = vxor.u32 %v1873, 2147483648
        %v1883 = vmul.f32 %v1882, 1.442695
        %v1884 = vpow.pop %v1883
        %v1885 = vadd.f32 %v1884, 1.0
        %v1886 = vrcp.pop %v1885
        %v1887 = vmul.f32 1.0, %v1886
        %v1888 = vtanh.pop %v1874
        %v1889 = vxor.u32 %v1875, 2147483648
        %v1890 = vmul.f32 %v1889, 1.442695
        %v1891 = vpow.pop %v1890
        %v1892 = vadd.f32 %v1891, 1.0
        %v1893 = vrcp.pop %v1892
        %v1894 = vmul.f32 1.0, %v1893
        %v1895 = vmul.f32 %v1887, %v1505
        %v1896 = vmul.f32 %v1881, %v1888
        %v1897 = vadd.f32 %v1895, %v1896
        %v1898 = vtanh.pop %v1897
        %v1899 = vmul.f32 %v1894, %v1898
        %v1900 = vtanh.pop %v1899
        %v1901 = vstv %s1512
        %vm1902 = vcmp.eq.s32.totalorder %v558, %v1901
        %v1903 = vsel %vm1902, %v1900, %v1511
        %s1904 = sadd.s32 %s563, 3
        %s1905 = scalar_lea.vmem [#allocation6], 24
        %v1906 = vld [vmem:[%s1905] sm:$0xff]
        %1907 = vmatprep.subr.mxu0 0.0
        %1908 = vmatpush1.msra.mxu0 %v580
        %1909 = vmatprep.subr.mxu0 0.0
        %1910 = vmatpush1.msra.mxu0 %v579
        %1911 = vmatprep.subr.mxu0 0.0
        %1912 = vmatpush1.msra.mxu0 %v578
        %1913 = vmatprep.subr.mxu0 0.0
        %1914 = vmatpush1.msra.mxu0 %v577
        %1915 = vmatprep.subr.mxu0 0.0
        %1916 = vmatpush1.msra.mxu0 %v576
        %1917 = vmatprep.subr.mxu0 0.0
        %1918 = vmatpush1.msra.mxu0 %v575
        %1919 = vmatprep.subr.mxu0 0.0
        %1920 = vmatpush1.msra.mxu0 %v574
        %1921 = vmatprep.subr.mxu0 0.0
        %1922 = vmatpush1.msra.mxu0 %v573
        %1923 = vmatprep.subr.mxu0 0.0
        %1924 = vmatpush1.msra.mxu0 %v572
        %1925 = vmatprep.subr.mxu0 0.0
        %1926 = vmatpush1.msra.mxu0 %v571
        %1927 = vmatprep.subr.mxu0 0.0
        %1928 = vmatpush1.msra.mxu0 %v570
        %1929 = vmatprep.subr.mxu0 0.0
        %1930 = vmatpush1.msra.mxu0 %v569
        %1931 = vmatprep.subr.mxu0 0.0
        %1932 = vmatpush1.msra.mxu0 %v568
        %1933 = vmatprep.subr.mxu0 0.0
        %1934 = vmatpush1.msra.mxu0 %v567
        %1935 = vmatprep.subr.mxu0 0.0
        %1936 = vmatpush1.msra.mxu0 %v566
        %1937 = vmatprep.subr.mxu0 0.0
        %1938 = vmatpush1.msra.mxu0 %v565
        %1939 = vmatprep.subr.mxu0 0.0
        %1940 = vmatpush2.msra.mxu0 0.0
        %1941 = vmatprep.subr.mxu0 0.0
        %1942 = vmatpush2.msra.mxu0 0.0
        %1943 = vmatprep.subr.mxu0 0.0
        %1944 = vmatpush2.msra.mxu0 0.0
        %1945 = vmatprep.subr.mxu0 0.0
        %1946 = vmatpush2.msra.mxu0 0.0
        %1947 = vmatprep.subr.mxu0 0.0
        %1948 = vmatpush2.msra.mxu0 0.0
        %1949 = vmatprep.subr.mxu0 0.0
        %1950 = vmatpush2.msra.mxu0 0.0
        %1951 = vmatprep.subr.mxu0 0.0
        %1952 = vmatpush2.msra.mxu0 0.0
        %1953 = vmatprep.subr.mxu0 0.0
        %1954 = vmatpush2.msra.mxu0 0.0
        %1955 = vmatprep.subr.mxu0 0.0
        %1956 = vmatpush2.msra.mxu0 0.0
        %1957 = vmatprep.subr.mxu0 0.0
        %1958 = vmatpush2.msra.mxu0 0.0
        %1959 = vmatprep.subr.mxu0 0.0
        %1960 = vmatpush2.msra.mxu0 0.0
        %1961 = vmatprep.subr.mxu0 0.0
        %1962 = vmatpush2.msra.mxu0 0.0
        %1963 = vmatprep.subr.mxu0 0.0
        %1964 = vmatpush2.msra.mxu0 0.0
        %1965 = vmatprep.subr.mxu0 0.0
        %1966 = vmatpush2.msra.mxu0 0.0
        %1967 = vmatprep.subr.mxu0 0.0
        %1968 = vmatpush2.msra.mxu0 0.0
        %1969 = vmatprep.subr.mxu0 0.0
        %1970 = vmatpush2.msra.mxu0 0.0
        %1971 = vmatprep.mubr.f32.mxu0 0.0
        %1972 = vmatmul.mubr.f32.gmra.mxu0 %v1586
        %v1973 = vpop.f32.mrf.mxu0
        %v1974 = vadd.f32 0.0, %v1973
        %v1975 = vpop.f32.mrf.mxu0
        %1976 = vdwg.mxu0
        %v1977 = vadd.f32 %v1906, %v1974
        %v1978 = vtanh.pop %v1977
        %v1979 = vtanh.pop %v1978
        %1980 = vmatprep.subr.mxu0 %v779
        %1981 = vmatpush1.msra.mxu0 %v778
        %1982 = vmatprep.subr.mxu0 %v775
        %1983 = vmatpush1.msra.mxu0 %v774
        %1984 = vmatprep.subr.mxu0 %v771
        %1985 = vmatpush1.msra.mxu0 %v770
        %1986 = vmatprep.subr.mxu0 %v767
        %1987 = vmatpush1.msra.mxu0 %v766
        %1988 = vmatprep.subr.mxu0 %v763
        %1989 = vmatpush1.msra.mxu0 %v762
        %1990 = vmatprep.subr.mxu0 %v759
        %1991 = vmatpush1.msra.mxu0 %v758
        %1992 = vmatprep.subr.mxu0 %v755
        %1993 = vmatpush1.msra.mxu0 %v754
        %1994 = vmatprep.subr.mxu0 %v751
        %1995 = vmatpush1.msra.mxu0 %v750
        %1996 = vmatprep.subr.mxu0 %v747
        %1997 = vmatpush1.msra.mxu0 %v746
        %1998 = vmatprep.subr.mxu0 %v743
        %1999 = vmatpush1.msra.mxu0 %v742
        %2000 = vmatprep.subr.mxu0 %v739
        %2001 = vmatpush1.msra.mxu0 %v738
        %2002 = vmatprep.subr.mxu0 %v735
        %2003 = vmatpush1.msra.mxu0 %v734
        %2004 = vmatprep.subr.mxu0 %v731
        %2005 = vmatpush1.msra.mxu0 %v730
        %2006 = vmatprep.subr.mxu0 %v727
        %2007 = vmatpush1.msra.mxu0 %v726
        %2008 = vmatprep.subr.mxu0 %v723
        %2009 = vmatpush1.msra.mxu0 %v722
        %2010 = vmatprep.subr.mxu0 %v719
        %2011 = vmatpush1.msra.mxu0 %v718
        %2012 = vmatprep.subr.mxu0 0.0
        %2013 = vmatpush2.msra.mxu0 0.0
        %2014 = vmatprep.subr.mxu0 0.0
        %2015 = vmatpush2.msra.mxu0 0.0
        %2016 = vmatprep.subr.mxu0 0.0
        %2017 = vmatpush2.msra.mxu0 0.0
        %2018 = vmatprep.subr.mxu0 0.0
        %2019 = vmatpush2.msra.mxu0 0.0
        %2020 = vmatprep.subr.mxu0 0.0
        %2021 = vmatpush2.msra.mxu0 0.0
        %2022 = vmatprep.subr.mxu0 0.0
        %2023 = vmatpush2.msra.mxu0 0.0
        %2024 = vmatprep.subr.mxu0 0.0
        %2025 = vmatpush2.msra.mxu0 0.0
        %2026 = vmatprep.subr.mxu0 0.0
        %2027 = vmatpush2.msra.mxu0 0.0
        %2028 = vmatprep.subr.mxu0 0.0
        %2029 = vmatpush2.msra.mxu0 0.0
        %2030 = vmatprep.subr.mxu0 0.0
        %2031 = vmatpush2.msra.mxu0 0.0
        %2032 = vmatprep.subr.mxu0 0.0
        %2033 = vmatpush2.msra.mxu0 0.0
        %2034 = vmatprep.subr.mxu0 0.0
        %2035 = vmatpush2.msra.mxu0 0.0
        %2036 = vmatprep.subr.mxu0 0.0
        %2037 = vmatpush2.msra.mxu0 0.0
        %2038 = vmatprep.subr.mxu0 0.0
        %2039 = vmatpush2.msra.mxu0 0.0
        %2040 = vmatprep.subr.mxu0 0.0
        %2041 = vmatpush2.msra.mxu0 0.0
        %2042 = vmatprep.subr.mxu0 0.0
        %2043 = vmatpush2.msra.mxu0 0.0
        %2044 = vmatprep.mubr.f32.mxu0 0.0
        %2045 = vmatmul.mubr.f32.gmra.mxu0 %v1899
        %v2046 = vpop.f32.mrf.mxu0
        %v2047 = vadd.f32 0.0, %v2046
        %v2048 = vpop.f32.mrf.mxu0
        %v2049 = vadd.f32 0.0, %v2048
        %2050 = vdwg.mxu0
        %2051 = vmatprep.subr.mxu0 %v781
        %2052 = vmatpush1.msra.mxu0 %v780
        %2053 = vmatprep.subr.mxu0 %v777
        %2054 = vmatpush1.msra.mxu0 %v776
        %2055 = vmatprep.subr.mxu0 %v773
        %2056 = vmatpush1.msra.mxu0 %v772
        %2057 = vmatprep.subr.mxu0 %v769
        %2058 = vmatpush1.msra.mxu0 %v768
        %2059 = vmatprep.subr.mxu0 %v765
        %2060 = vmatpush1.msra.mxu0 %v764
        %2061 = vmatprep.subr.mxu0 %v761
        %2062 = vmatpush1.msra.mxu0 %v760
        %2063 = vmatprep.subr.mxu0 %v757
        %2064 = vmatpush1.msra.mxu0 %v756
        %2065 = vmatprep.subr.mxu0 %v753
        %2066 = vmatpush1.msra.mxu0 %v752
        %2067 = vmatprep.subr.mxu0 %v749
        %2068 = vmatpush1.msra.mxu0 %v748
        %2069 = vmatprep.subr.mxu0 %v745
        %2070 = vmatpush1.msra.mxu0 %v744
        %2071 = vmatprep.subr.mxu0 %v741
        %2072 = vmatpush1.msra.mxu0 %v740
        %2073 = vmatprep.subr.mxu0 %v737
        %2074 = vmatpush1.msra.mxu0 %v736
        %2075 = vmatprep.subr.mxu0 %v733
        %2076 = vmatpush1.msra.mxu0 %v732
        %2077 = vmatprep.subr.mxu0 %v729
        %2078 = vmatpush1.msra.mxu0 %v728
        %2079 = vmatprep.subr.mxu0 %v725
        %2080 = vmatpush1.msra.mxu0 %v724
        %2081 = vmatprep.subr.mxu0 %v721
        %2082 = vmatpush1.msra.mxu0 %v720
        %2083 = vmatprep.subr.mxu0 0.0
        %2084 = vmatpush2.msra.mxu0 0.0
        %2085 = vmatprep.subr.mxu0 0.0
        %2086 = vmatpush2.msra.mxu0 0.0
        %2087 = vmatprep.subr.mxu0 0.0
        %2088 = vmatpush2.msra.mxu0 0.0
        %2089 = vmatprep.subr.mxu0 0.0
        %2090 = vmatpush2.msra.mxu0 0.0
        %2091 = vmatprep.subr.mxu0 0.0
        %2092 = vmatpush2.msra.mxu0 0.0
        %2093 = vmatprep.subr.mxu0 0.0
        %2094 = vmatpush2.msra.mxu0 0.0
        %2095 = vmatprep.subr.mxu0 0.0
        %2096 = vmatpush2.msra.mxu0 0.0
        %2097 = vmatprep.subr.mxu0 0.0
        %2098 = vmatpush2.msra.mxu0 0.0
        %2099 = vmatprep.subr.mxu0 0.0
        %2100 = vmatpush2.msra.mxu0 0.0
        %2101 = vmatprep.subr.mxu0 0.0
        %2102 = vmatpush2.msra.mxu0 0.0
        %2103 = vmatprep.subr.mxu0 0.0
        %2104 = vmatpush2.msra.mxu0 0.0
        %2105 = vmatprep.subr.mxu0 0.0
        %2106 = vmatpush2.msra.mxu0 0.0
        %2107 = vmatprep.subr.mxu0 0.0
        %2108 = vmatpush2.msra.mxu0 0.0
        %2109 = vmatprep.subr.mxu0 0.0
        %2110 = vmatpush2.msra.mxu0 0.0
        %2111 = vmatprep.subr.mxu0 0.0
        %2112 = vmatpush2.msra.mxu0 0.0
        %2113 = vmatprep.subr.mxu0 0.0
        %2114 = vmatpush2.msra.mxu0 0.0
        %2115 = vmatprep.mubr.f32.mxu0 0.0
        %2116 = vmatmul.mubr.f32.gmra.mxu0 %v1899
        %v2117 = vpop.f32.mrf.mxu0
        %v2118 = vadd.f32 0.0, %v2117
        %v2119 = vpop.f32.mrf.mxu0
        %v2120 = vadd.f32 0.0, %v2119
        %2121 = vdwg.mxu0
        %2122 = vmatprep.subr.mxu0 %v715
        %2123 = vmatpush1.msra.mxu0 %v714
        %2124 = vmatprep.subr.mxu0 %v711
        %2125 = vmatpush1.msra.mxu0 %v710
        %2126 = vmatprep.subr.mxu0 %v707
        %2127 = vmatpush1.msra.mxu0 %v706
        %2128 = vmatprep.subr.mxu0 %v703
        %2129 = vmatpush1.msra.mxu0 %v702
        %2130 = vmatprep.subr.mxu0 %v699
        %2131 = vmatpush1.msra.mxu0 %v698
        %2132 = vmatprep.subr.mxu0 %v695
        %2133 = vmatpush1.msra.mxu0 %v694
        %2134 = vmatprep.subr.mxu0 %v691
        %2135 = vmatpush1.msra.mxu0 %v690
        %2136 = vmatprep.subr.mxu0 %v687
        %2137 = vmatpush1.msra.mxu0 %v686
        %2138 = vmatprep.subr.mxu0 %v683
        %2139 = vmatpush1.msra.mxu0 %v682
        %2140 = vmatprep.subr.mxu0 %v679
        %2141 = vmatpush1.msra.mxu0 %v678
        %2142 = vmatprep.subr.mxu0 %v675
        %2143 = vmatpush1.msra.mxu0 %v674
        %2144 = vmatprep.subr.mxu0 %v671
        %2145 = vmatpush1.msra.mxu0 %v670
        %2146 = vmatprep.subr.mxu0 %v667
        %2147 = vmatpush1.msra.mxu0 %v666
        %2148 = vmatprep.subr.mxu0 %v663
        %2149 = vmatpush1.msra.mxu0 %v662
        %2150 = vmatprep.subr.mxu0 %v659
        %2151 = vmatpush1.msra.mxu0 %v658
        %2152 = vmatprep.subr.mxu0 %v655
        %2153 = vmatpush1.msra.mxu0 %v654
        %2154 = vmatprep.subr.mxu0 0.0
        %2155 = vmatpush2.msra.mxu0 0.0
        %2156 = vmatprep.subr.mxu0 0.0
        %2157 = vmatpush2.msra.mxu0 0.0
        %2158 = vmatprep.subr.mxu0 0.0
        %2159 = vmatpush2.msra.mxu0 0.0
        %2160 = vmatprep.subr.mxu0 0.0
        %2161 = vmatpush2.msra.mxu0 0.0
        %2162 = vmatprep.subr.mxu0 0.0
        %2163 = vmatpush2.msra.mxu0 0.0
        %2164 = vmatprep.subr.mxu0 0.0
        %2165 = vmatpush2.msra.mxu0 0.0
        %2166 = vmatprep.subr.mxu0 0.0
        %2167 = vmatpush2.msra.mxu0 0.0
        %2168 = vmatprep.subr.mxu0 0.0
        %2169 = vmatpush2.msra.mxu0 0.0
        %2170 = vmatprep.subr.mxu0 0.0
        %2171 = vmatpush2.msra.mxu0 0.0
        %2172 = vmatprep.subr.mxu0 0.0
        %2173 = vmatpush2.msra.mxu0 0.0
        %2174 = vmatprep.subr.mxu0 0.0
        %2175 = vmatpush2.msra.mxu0 0.0
        %2176 = vmatprep.subr.mxu0 0.0
        %2177 = vmatpush2.msra.mxu0 0.0
        %2178 = vmatprep.subr.mxu0 0.0
        %2179 = vmatpush2.msra.mxu0 0.0
        %2180 = vmatprep.subr.mxu0 0.0
        %2181 = vmatpush2.msra.mxu0 0.0
        %2182 = vmatprep.subr.mxu0 0.0
        %2183 = vmatpush2.msra.mxu0 0.0
        %2184 = vmatprep.subr.mxu0 0.0
        %2185 = vmatpush2.msra.mxu0 0.0
        %2186 = vmatprep.mubr.f32.mxu0 0.0
        %2187 = vmatmul.mubr.f32.gmra.mxu0 %v1979
        %v2188 = vpop.f32.mrf.mxu0
        %v2189 = vadd.f32 %v2047, %v2188
        %v2190 = vpop.f32.mrf.mxu0
        %v2191 = vadd.f32 %v2049, %v2190
        %2192 = vdwg.mxu0
        %2193 = vmatprep.subr.mxu0 %v717
        %2194 = vmatpush1.msra.mxu0 %v716
        %2195 = vmatprep.subr.mxu0 %v713
        %2196 = vmatpush1.msra.mxu0 %v712
        %2197 = vmatprep.subr.mxu0 %v709
        %2198 = vmatpush1.msra.mxu0 %v708
        %2199 = vmatprep.subr.mxu0 %v705
        %2200 = vmatpush1.msra.mxu0 %v704
        %2201 = vmatprep.subr.mxu0 %v701
        %2202 = vmatpush1.msra.mxu0 %v700
        %2203 = vmatprep.subr.mxu0 %v697
        %2204 = vmatpush1.msra.mxu0 %v696
        %2205 = vmatprep.subr.mxu0 %v693
        %2206 = vmatpush1.msra.mxu0 %v692
        %2207 = vmatprep.subr.mxu0 %v689
        %2208 = vmatpush1.msra.mxu0 %v688
        %2209 = vmatprep.subr.mxu0 %v685
        %2210 = vmatpush1.msra.mxu0 %v684
        %2211 = vmatprep.subr.mxu0 %v681
        %2212 = vmatpush1.msra.mxu0 %v680
        %2213 = vmatprep.subr.mxu0 %v677
        %2214 = vmatpush1.msra.mxu0 %v676
        %2215 = vmatprep.subr.mxu0 %v673
        %2216 = vmatpush1.msra.mxu0 %v672
        %2217 = vmatprep.subr.mxu0 %v669
        %2218 = vmatpush1.msra.mxu0 %v668
        %2219 = vmatprep.subr.mxu0 %v665
        %2220 = vmatpush1.msra.mxu0 %v664
        %2221 = vmatprep.subr.mxu0 %v661
        %2222 = vmatpush1.msra.mxu0 %v660
        %2223 = vmatprep.subr.mxu0 %v657
        %2224 = vmatpush1.msra.mxu0 %v656
        %2225 = vmatprep.subr.mxu0 0.0
        %2226 = vmatpush2.msra.mxu0 0.0
        %2227 = vmatprep.subr.mxu0 0.0
        %2228 = vmatpush2.msra.mxu0 0.0
        %2229 = vmatprep.subr.mxu0 0.0
        %2230 = vmatpush2.msra.mxu0 0.0
        %2231 = vmatprep.subr.mxu0 0.0
        %2232 = vmatpush2.msra.mxu0 0.0
        %2233 = vmatprep.subr.mxu0 0.0
        %2234 = vmatpush2.msra.mxu0 0.0
        %2235 = vmatprep.subr.mxu0 0.0
        %2236 = vmatpush2.msra.mxu0 0.0
        %2237 = vmatprep.subr.mxu0 0.0
        %2238 = vmatpush2.msra.mxu0 0.0
        %2239 = vmatprep.subr.mxu0 0.0
        %2240 = vmatpush2.msra.mxu0 0.0
        %2241 = vmatprep.subr.mxu0 0.0
        %2242 = vmatpush2.msra.mxu0 0.0
        %2243 = vmatprep.subr.mxu0 0.0
        %2244 = vmatpush2.msra.mxu0 0.0
        %2245 = vmatprep.subr.mxu0 0.0
        %2246 = vmatpush2.msra.mxu0 0.0
        %2247 = vmatprep.subr.mxu0 0.0
        %2248 = vmatpush2.msra.mxu0 0.0
        %2249 = vmatprep.subr.mxu0 0.0
        %2250 = vmatpush2.msra.mxu0 0.0
        %2251 = vmatprep.subr.mxu0 0.0
        %2252 = vmatpush2.msra.mxu0 0.0
        %2253 = vmatprep.subr.mxu0 0.0
        %2254 = vmatpush2.msra.mxu0 0.0
        %2255 = vmatprep.subr.mxu0 0.0
        %2256 = vmatpush2.msra.mxu0 0.0
        %2257 = vmatprep.mubr.f32.mxu0 0.0
        %2258 = vmatmul.mubr.f32.gmra.mxu0 %v1979
        %v2259 = vpop.f32.mrf.mxu0
        %v2260 = vadd.f32 %v2118, %v2259
        %v2261 = vpop.f32.mrf.mxu0
        %v2262 = vadd.f32 %v2120, %v2261
        %2263 = vdwg.mxu0
        %v2264 = vadd.f32 %v2189, %v1071
        %v2265 = vadd.f32 %v2191, %v1075
        %v2266 = vadd.f32 %v2260, %v1079
        %v2267 = vadd.f32 %v2262, %v1083
        %v2268 = vxor.u32 %v2264, 2147483648
        %v2269 = vmul.f32 %v2268, 1.442695
        %v2270 = vpow.pop %v2269
        %v2271 = vadd.f32 %v2270, 1.0
        %v2272 = vrcp.pop %v2271
        %v2273 = vmul.f32 1.0, %v2272
        %v2274 = vxor.u32 %v2265, 2147483648
        %v2275 = vmul.f32 %v2274, 1.442695
        %v2276 = vpow.pop %v2275
        %v2277 = vadd.f32 %v2276, 1.0
        %v2278 = vrcp.pop %v2277
        %v2279 = vmul.f32 1.0, %v2278
        %v2280 = vtanh.pop %v2266
        %v2281 = vxor.u32 %v2267, 2147483648
        %v2282 = vmul.f32 %v2281, 1.442695
        %v2283 = vpow.pop %v2282
        %v2284 = vadd.f32 %v2283, 1.0
        %v2285 = vrcp.pop %v2284
        %v2286 = vmul.f32 1.0, %v2285
        %v2287 = vmul.f32 %v2279, %v1897
        %v2288 = vmul.f32 %v2273, %v2280
        %v2289 = vadd.f32 %v2287, %v2288
        %v2290 = vtanh.pop %v2289
        %v2291 = vmul.f32 %v2286, %v2290
        %v2292 = vtanh.pop %v2291
        %v2293 = vstv %s1904
        %vm2294 = vcmp.eq.s32.totalorder %v558, %v2293
        %v2295 = vsel %vm2294, %v2292, %v1903
        %s2296 = sadd.s32 %s563, 4
        %s2297 = scalar_lea.vmem [#allocation6], 32
        %v2298 = vld [vmem:[%s2297] sm:$0xff]
        %2299 = vmatprep.subr.mxu0 0.0
        %2300 = vmatpush1.msra.mxu0 %v580
        %2301 = vmatprep.subr.mxu0 0.0
        %2302 = vmatpush1.msra.mxu0 %v579
        %2303 = vmatprep.subr.mxu0 0.0
        %2304 = vmatpush1.msra.mxu0 %v578
        %2305 = vmatprep.subr.mxu0 0.0
        %2306 = vmatpush1.msra.mxu0 %v577
        %2307 = vmatprep.subr.mxu0 0.0
        %2308 = vmatpush1.msra.mxu0 %v576
        %2309 = vmatprep.subr.mxu0 0.0
        %2310 = vmatpush1.msra.mxu0 %v575
        %2311 = vmatprep.subr.mxu0 0.0
        %2312 = vmatpush1.msra.mxu0 %v574
        %2313 = vmatprep.subr.mxu0 0.0
        %2314 = vmatpush1.msra.mxu0 %v573
        %2315 = vmatprep.subr.mxu0 0.0
        %2316 = vmatpush1.msra.mxu0 %v572
        %2317 = vmatprep.subr.mxu0 0.0
        %2318 = vmatpush1.msra.mxu0 %v571
        %2319 = vmatprep.subr.mxu0 0.0
        %2320 = vmatpush1.msra.mxu0 %v570
        %2321 = vmatprep.subr.mxu0 0.0
        %2322 = vmatpush1.msra.mxu0 %v569
        %2323 = vmatprep.subr.mxu0 0.0
        %2324 = vmatpush1.msra.mxu0 %v568
        %2325 = vmatprep.subr.mxu0 0.0
        %2326 = vmatpush1.msra.mxu0 %v567
        %2327 = vmatprep.subr.mxu0 0.0
        %2328 = vmatpush1.msra.mxu0 %v566
        %2329 = vmatprep.subr.mxu0 0.0
        %2330 = vmatpush1.msra.mxu0 %v565
        %2331 = vmatprep.subr.mxu0 0.0
        %2332 = vmatpush2.msra.mxu0 0.0
        %2333 = vmatprep.subr.mxu0 0.0
        %2334 = vmatpush2.msra.mxu0 0.0
        %2335 = vmatprep.subr.mxu0 0.0
        %2336 = vmatpush2.msra.mxu0 0.0
        %2337 = vmatprep.subr.mxu0 0.0
        %2338 = vmatpush2.msra.mxu0 0.0
        %2339 = vmatprep.subr.mxu0 0.0
        %2340 = vmatpush2.msra.mxu0 0.0
        %2341 = vmatprep.subr.mxu0 0.0
        %2342 = vmatpush2.msra.mxu0 0.0
        %2343 = vmatprep.subr.mxu0 0.0
        %2344 = vmatpush2.msra.mxu0 0.0
        %2345 = vmatprep.subr.mxu0 0.0
        %2346 = vmatpush2.msra.mxu0 0.0
        %2347 = vmatprep.subr.mxu0 0.0
        %2348 = vmatpush2.msra.mxu0 0.0
        %2349 = vmatprep.subr.mxu0 0.0
        %2350 = vmatpush2.msra.mxu0 0.0
        %2351 = vmatprep.subr.mxu0 0.0
        %2352 = vmatpush2.msra.mxu0 0.0
        %2353 = vmatprep.subr.mxu0 0.0
        %2354 = vmatpush2.msra.mxu0 0.0
        %2355 = vmatprep.subr.mxu0 0.0
        %2356 = vmatpush2.msra.mxu0 0.0
        %2357 = vmatprep.subr.mxu0 0.0
        %2358 = vmatpush2.msra.mxu0 0.0
        %2359 = vmatprep.subr.mxu0 0.0
        %2360 = vmatpush2.msra.mxu0 0.0
        %2361 = vmatprep.subr.mxu0 0.0
        %2362 = vmatpush2.msra.mxu0 0.0
        %2363 = vmatprep.mubr.f32.mxu0 0.0
        %2364 = vmatmul.mubr.f32.gmra.mxu0 %v1978
        %v2365 = vpop.f32.mrf.mxu0
        %v2366 = vadd.f32 0.0, %v2365
        %v2367 = vpop.f32.mrf.mxu0
        %2368 = vdwg.mxu0
        %v2369 = vadd.f32 %v2298, %v2366
        %v2370 = vtanh.pop %v2369
        %v2371 = vtanh.pop %v2370
        %2372 = vmatprep.subr.mxu0 %v779
        %2373 = vmatpush1.msra.mxu0 %v778
        %2374 = vmatprep.subr.mxu0 %v775
        %2375 = vmatpush1.msra.mxu0 %v774
        %2376 = vmatprep.subr.mxu0 %v771
        %2377 = vmatpush1.msra.mxu0 %v770
        %2378 = vmatprep.subr.mxu0 %v767
        %2379 = vmatpush1.msra.mxu0 %v766
        %2380 = vmatprep.subr.mxu0 %v763
        %2381 = vmatpush1.msra.mxu0 %v762
        %2382 = vmatprep.subr.mxu0 %v759
        %2383 = vmatpush1.msra.mxu0 %v758
        %2384 = vmatprep.subr.mxu0 %v755
        %2385 = vmatpush1.msra.mxu0 %v754
        %2386 = vmatprep.subr.mxu0 %v751
        %2387 = vmatpush1.msra.mxu0 %v750
        %2388 = vmatprep.subr.mxu0 %v747
        %2389 = vmatpush1.msra.mxu0 %v746
        %2390 = vmatprep.subr.mxu0 %v743
        %2391 = vmatpush1.msra.mxu0 %v742
        %2392 = vmatprep.subr.mxu0 %v739
        %2393 = vmatpush1.msra.mxu0 %v738
        %2394 = vmatprep.subr.mxu0 %v735
        %2395 = vmatpush1.msra.mxu0 %v734
        %2396 = vmatprep.subr.mxu0 %v731
        %2397 = vmatpush1.msra.mxu0 %v730
        %2398 = vmatprep.subr.mxu0 %v727
        %2399 = vmatpush1.msra.mxu0 %v726
        %2400 = vmatprep.subr.mxu0 %v723
        %2401 = vmatpush1.msra.mxu0 %v722
        %2402 = vmatprep.subr.mxu0 %v719
        %2403 = vmatpush1.msra.mxu0 %v718
        %2404 = vmatprep.subr.mxu0 0.0
        %2405 = vmatpush2.msra.mxu0 0.0
        %2406 = vmatprep.subr.mxu0 0.0
        %2407 = vmatpush2.msra.mxu0 0.0
        %2408 = vmatprep.subr.mxu0 0.0
        %2409 = vmatpush2.msra.mxu0 0.0
        %2410 = vmatprep.subr.mxu0 0.0
        %2411 = vmatpush2.msra.mxu0 0.0
        %2412 = vmatprep.subr.mxu0 0.0
        %2413 = vmatpush2.msra.mxu0 0.0
        %2414 = vmatprep.subr.mxu0 0.0
        %2415 = vmatpush2.msra.mxu0 0.0
        %2416 = vmatprep.subr.mxu0 0.0
        %2417 = vmatpush2.msra.mxu0 0.0
        %2418 = vmatprep.subr.mxu0 0.0
        %2419 = vmatpush2.msra.mxu0 0.0
        %2420 = vmatprep.subr.mxu0 0.0
        %2421 = vmatpush2.msra.mxu0 0.0
        %2422 = vmatprep.subr.mxu0 0.0
        %2423 = vmatpush2.msra.mxu0 0.0
        %2424 = vmatprep.subr.mxu0 0.0
        %2425 = vmatpush2.msra.mxu0 0.0
        %2426 = vmatprep.subr.mxu0 0.0
        %2427 = vmatpush2.msra.mxu0 0.0
        %2428 = vmatprep.subr.mxu0 0.0
        %2429 = vmatpush2.msra.mxu0 0.0
        %2430 = vmatprep.subr.mxu0 0.0
        %2431 = vmatpush2.msra.mxu0 0.0
        %2432 = vmatprep.subr.mxu0 0.0
        %2433 = vmatpush2.msra.mxu0 0.0
        %2434 = vmatprep.subr.mxu0 0.0
        %2435 = vmatpush2.msra.mxu0 0.0
        %2436 = vmatprep.mubr.f32.mxu0 0.0
        %2437 = vmatmul.mubr.f32.gmra.mxu0 %v2291
        %v2438 = vpop.f32.mrf.mxu0
        %v2439 = vadd.f32 0.0, %v2438
        %v2440 = vpop.f32.mrf.mxu0
        %v2441 = vadd.f32 0.0, %v2440
        %2442 = vdwg.mxu0
        %2443 = vmatprep.subr.mxu0 %v781
        %2444 = vmatpush1.msra.mxu0 %v780
        %2445 = vmatprep.subr.mxu0 %v777
        %2446 = vmatpush1.msra.mxu0 %v776
        %2447 = vmatprep.subr.mxu0 %v773
        %2448 = vmatpush1.msra.mxu0 %v772
        %2449 = vmatprep.subr.mxu0 %v769
        %2450 = vmatpush1.msra.mxu0 %v768
        %2451 = vmatprep.subr.mxu0 %v765
        %2452 = vmatpush1.msra.mxu0 %v764
        %2453 = vmatprep.subr.mxu0 %v761
        %2454 = vmatpush1.msra.mxu0 %v760
        %2455 = vmatprep.subr.mxu0 %v757
        %2456 = vmatpush1.msra.mxu0 %v756
        %2457 = vmatprep.subr.mxu0 %v753
        %2458 = vmatpush1.msra.mxu0 %v752
        %2459 = vmatprep.subr.mxu0 %v749
        %2460 = vmatpush1.msra.mxu0 %v748
        %2461 = vmatprep.subr.mxu0 %v745
        %2462 = vmatpush1.msra.mxu0 %v744
        %2463 = vmatprep.subr.mxu0 %v741
        %2464 = vmatpush1.msra.mxu0 %v740
        %2465 = vmatprep.subr.mxu0 %v737
        %2466 = vmatpush1.msra.mxu0 %v736
        %2467 = vmatprep.subr.mxu0 %v733
        %2468 = vmatpush1.msra.mxu0 %v732
        %2469 = vmatprep.subr.mxu0 %v729
        %2470 = vmatpush1.msra.mxu0 %v728
        %2471 = vmatprep.subr.mxu0 %v725
        %2472 = vmatpush1.msra.mxu0 %v724
        %2473 = vmatprep.subr.mxu0 %v721
        %2474 = vmatpush1.msra.mxu0 %v720
        %2475 = vmatprep.subr.mxu0 0.0
        %2476 = vmatpush2.msra.mxu0 0.0
        %2477 = vmatprep.subr.mxu0 0.0
        %2478 = vmatpush2.msra.mxu0 0.0
        %2479 = vmatprep.subr.mxu0 0.0
        %2480 = vmatpush2.msra.mxu0 0.0
        %2481 = vmatprep.subr.mxu0 0.0
        %2482 = vmatpush2.msra.mxu0 0.0
        %2483 = vmatprep.subr.mxu0 0.0
        %2484 = vmatpush2.msra.mxu0 0.0
        %2485 = vmatprep.subr.mxu0 0.0
        %2486 = vmatpush2.msra.mxu0 0.0
        %2487 = vmatprep.subr.mxu0 0.0
        %2488 = vmatpush2.msra.mxu0 0.0
        %2489 = vmatprep.subr.mxu0 0.0
        %2490 = vmatpush2.msra.mxu0 0.0
        %2491 = vmatprep.subr.mxu0 0.0
        %2492 = vmatpush2.msra.mxu0 0.0
        %2493 = vmatprep.subr.mxu0 0.0
        %2494 = vmatpush2.msra.mxu0 0.0
        %2495 = vmatprep.subr.mxu0 0.0
        %2496 = vmatpush2.msra.mxu0 0.0
        %2497 = vmatprep.subr.mxu0 0.0
        %2498 = vmatpush2.msra.mxu0 0.0
        %2499 = vmatprep.subr.mxu0 0.0
        %2500 = vmatpush2.msra.mxu0 0.0
        %2501 = vmatprep.subr.mxu0 0.0
        %2502 = vmatpush2.msra.mxu0 0.0
        %2503 = vmatprep.subr.mxu0 0.0
        %2504 = vmatpush2.msra.mxu0 0.0
        %2505 = vmatprep.subr.mxu0 0.0
        %2506 = vmatpush2.msra.mxu0 0.0
        %2507 = vmatprep.mubr.f32.mxu0 0.0
        %2508 = vmatmul.mubr.f32.gmra.mxu0 %v2291
        %v2509 = vpop.f32.mrf.mxu0
        %v2510 = vadd.f32 0.0, %v2509
        %v2511 = vpop.f32.mrf.mxu0
        %v2512 = vadd.f32 0.0, %v2511
        %2513 = vdwg.mxu0
        %2514 = vmatprep.subr.mxu0 %v715
        %2515 = vmatpush1.msra.mxu0 %v714
        %2516 = vmatprep.subr.mxu0 %v711
        %2517 = vmatpush1.msra.mxu0 %v710
        %2518 = vmatprep.subr.mxu0 %v707
        %2519 = vmatpush1.msra.mxu0 %v706
        %2520 = vmatprep.subr.mxu0 %v703
        %2521 = vmatpush1.msra.mxu0 %v702
        %2522 = vmatprep.subr.mxu0 %v699
        %2523 = vmatpush1.msra.mxu0 %v698
        %2524 = vmatprep.subr.mxu0 %v695
        %2525 = vmatpush1.msra.mxu0 %v694
        %2526 = vmatprep.subr.mxu0 %v691
        %2527 = vmatpush1.msra.mxu0 %v690
        %2528 = vmatprep.subr.mxu0 %v687
        %2529 = vmatpush1.msra.mxu0 %v686
        %2530 = vmatprep.subr.mxu0 %v683
        %2531 = vmatpush1.msra.mxu0 %v682
        %2532 = vmatprep.subr.mxu0 %v679
        %2533 = vmatpush1.msra.mxu0 %v678
        %2534 = vmatprep.subr.mxu0 %v675
        %2535 = vmatpush1.msra.mxu0 %v674
        %2536 = vmatprep.subr.mxu0 %v671
        %2537 = vmatpush1.msra.mxu0 %v670
        %2538 = vmatprep.subr.mxu0 %v667
        %2539 = vmatpush1.msra.mxu0 %v666
        %2540 = vmatprep.subr.mxu0 %v663
        %2541 = vmatpush1.msra.mxu0 %v662
        %2542 = vmatprep.subr.mxu0 %v659
        %2543 = vmatpush1.msra.mxu0 %v658
        %2544 = vmatprep.subr.mxu0 %v655
        %2545 = vmatpush1.msra.mxu0 %v654
        %2546 = vmatprep.subr.mxu0 0.0
        %2547 = vmatpush2.msra.mxu0 0.0
        %2548 = vmatprep.subr.mxu0 0.0
        %2549 = vmatpush2.msra.mxu0 0.0
        %2550 = vmatprep.subr.mxu0 0.0
        %2551 = vmatpush2.msra.mxu0 0.0
        %2552 = vmatprep.subr.mxu0 0.0
        %2553 = vmatpush2.msra.mxu0 0.0
        %2554 = vmatprep.subr.mxu0 0.0
        %2555 = vmatpush2.msra.mxu0 0.0
        %2556 = vmatprep.subr.mxu0 0.0
        %2557 = vmatpush2.msra.mxu0 0.0
        %2558 = vmatprep.subr.mxu0 0.0
        %2559 = vmatpush2.msra.mxu0 0.0
        %2560 = vmatprep.subr.mxu0 0.0
        %2561 = vmatpush2.msra.mxu0 0.0
        %2562 = vmatprep.subr.mxu0 0.0
        %2563 = vmatpush2.msra.mxu0 0.0
        %2564 = vmatprep.subr.mxu0 0.0
        %2565 = vmatpush2.msra.mxu0 0.0
        %2566 = vmatprep.subr.mxu0 0.0
        %2567 = vmatpush2.msra.mxu0 0.0
        %2568 = vmatprep.subr.mxu0 0.0
        %2569 = vmatpush2.msra.mxu0 0.0
        %2570 = vmatprep.subr.mxu0 0.0
        %2571 = vmatpush2.msra.mxu0 0.0
        %2572 = vmatprep.subr.mxu0 0.0
        %2573 = vmatpush2.msra.mxu0 0.0
        %2574 = vmatprep.subr.mxu0 0.0
        %2575 = vmatpush2.msra.mxu0 0.0
        %2576 = vmatprep.subr.mxu0 0.0
        %2577 = vmatpush2.msra.mxu0 0.0
        %2578 = vmatprep.mubr.f32.mxu0 0.0
        %2579 = vmatmul.mubr.f32.gmra.mxu0 %v2371
        %v2580 = vpop.f32.mrf.mxu0
        %v2581 = vadd.f32 %v2439, %v2580
        %v2582 = vpop.f32.mrf.mxu0
        %v2583 = vadd.f32 %v2441, %v2582
        %2584 = vdwg.mxu0
        %2585 = vmatprep.subr.mxu0 %v717
        %2586 = vmatpush1.msra.mxu0 %v716
        %2587 = vmatprep.subr.mxu0 %v713
        %2588 = vmatpush1.msra.mxu0 %v712
        %2589 = vmatprep.subr.mxu0 %v709
        %2590 = vmatpush1.msra.mxu0 %v708
        %2591 = vmatprep.subr.mxu0 %v705
        %2592 = vmatpush1.msra.mxu0 %v704
        %2593 = vmatprep.subr.mxu0 %v701
        %2594 = vmatpush1.msra.mxu0 %v700
        %2595 = vmatprep.subr.mxu0 %v697
        %2596 = vmatpush1.msra.mxu0 %v696
        %2597 = vmatprep.subr.mxu0 %v693
        %2598 = vmatpush1.msra.mxu0 %v692
        %2599 = vmatprep.subr.mxu0 %v689
        %2600 = vmatpush1.msra.mxu0 %v688
        %2601 = vmatprep.subr.mxu0 %v685
        %2602 = vmatpush1.msra.mxu0 %v684
        %2603 = vmatprep.subr.mxu0 %v681
        %2604 = vmatpush1.msra.mxu0 %v680
        %2605 = vmatprep.subr.mxu0 %v677
        %2606 = vmatpush1.msra.mxu0 %v676
        %2607 = vmatprep.subr.mxu0 %v673
        %2608 = vmatpush1.msra.mxu0 %v672
        %2609 = vmatprep.subr.mxu0 %v669
        %2610 = vmatpush1.msra.mxu0 %v668
        %2611 = vmatprep.subr.mxu0 %v665
        %2612 = vmatpush1.msra.mxu0 %v664
        %2613 = vmatprep.subr.mxu0 %v661
        %2614 = vmatpush1.msra.mxu0 %v660
        %2615 = vmatprep.subr.mxu0 %v657
        %2616 = vmatpush1.msra.mxu0 %v656
        %2617 = vmatprep.subr.mxu0 0.0
        %2618 = vmatpush2.msra.mxu0 0.0
        %2619 = vmatprep.subr.mxu0 0.0
        %2620 = vmatpush2.msra.mxu0 0.0
        %2621 = vmatprep.subr.mxu0 0.0
        %2622 = vmatpush2.msra.mxu0 0.0
        %2623 = vmatprep.subr.mxu0 0.0
        %2624 = vmatpush2.msra.mxu0 0.0
        %2625 = vmatprep.subr.mxu0 0.0
        %2626 = vmatpush2.msra.mxu0 0.0
        %2627 = vmatprep.subr.mxu0 0.0
        %2628 = vmatpush2.msra.mxu0 0.0
        %2629 = vmatprep.subr.mxu0 0.0
        %2630 = vmatpush2.msra.mxu0 0.0
        %2631 = vmatprep.subr.mxu0 0.0
        %2632 = vmatpush2.msra.mxu0 0.0
        %2633 = vmatprep.subr.mxu0 0.0
        %2634 = vmatpush2.msra.mxu0 0.0
        %2635 = vmatprep.subr.mxu0 0.0
        %2636 = vmatpush2.msra.mxu0 0.0
        %2637 = vmatprep.subr.mxu0 0.0
        %2638 = vmatpush2.msra.mxu0 0.0
        %2639 = vmatprep.subr.mxu0 0.0
        %2640 = vmatpush2.msra.mxu0 0.0
        %2641 = vmatprep.subr.mxu0 0.0
        %2642 = vmatpush2.msra.mxu0 0.0
        %2643 = vmatprep.subr.mxu0 0.0
        %2644 = vmatpush2.msra.mxu0 0.0
        %2645 = vmatprep.subr.mxu0 0.0
        %2646 = vmatpush2.msra.mxu0 0.0
        %2647 = vmatprep.subr.mxu0 0.0
        %2648 = vmatpush2.msra.mxu0 0.0
        %2649 = vmatprep.mubr.f32.mxu0 0.0
        %2650 = vmatmul.mubr.f32.gmra.mxu0 %v2371
        %v2651 = vpop.f32.mrf.mxu0
        %v2652 = vadd.f32 %v2510, %v2651
        %v2653 = vpop.f32.mrf.mxu0
        %v2654 = vadd.f32 %v2512, %v2653
        %2655 = vdwg.mxu0
        %v2656 = vadd.f32 %v2581, %v1071
        %v2657 = vadd.f32 %v2583, %v1075
        %v2658 = vadd.f32 %v2652, %v1079
        %v2659 = vadd.f32 %v2654, %v1083
        %v2660 = vxor.u32 %v2656, 2147483648
        %v2661 = vmul.f32 %v2660, 1.442695
        %v2662 = vpow.pop %v2661
        %v2663 = vadd.f32 %v2662, 1.0
        %v2664 = vrcp.pop %v2663
        %v2665 = vmul.f32 1.0, %v2664
        %v2666 = vxor.u32 %v2657, 2147483648
        %v2667 = vmul.f32 %v2666, 1.442695
        %v2668 = vpow.pop %v2667
        %v2669 = vadd.f32 %v2668, 1.0
        %v2670 = vrcp.pop %v2669
        %v2671 = vmul.f32 1.0, %v2670
        %v2672 = vtanh.pop %v2658
        %v2673 = vxor.u32 %v2659, 2147483648
        %v2674 = vmul.f32 %v2673, 1.442695
        %v2675 = vpow.pop %v2674
        %v2676 = vadd.f32 %v2675, 1.0
        %v2677 = vrcp.pop %v2676
        %v2678 = vmul.f32 1.0, %v2677
        %v2679 = vmul.f32 %v2671, %v2289
        %v2680 = vmul.f32 %v2665, %v2672
        %v2681 = vadd.f32 %v2679, %v2680
        %v2682 = vtanh.pop %v2681
        %v2683 = vmul.f32 %v2678, %v2682
        %v2684 = vtanh.pop %v2683
        %v2685 = vstv %s2296
        %vm2686 = vcmp.eq.s32.totalorder %v558, %v2685
        %v2687 = vsel %vm2686, %v2684, %v2295
        %s2688 = sadd.s32 %s563, 5
        %s2689 = scalar_lea.vmem [#allocation6], 40
        %v2690 = vld [vmem:[%s2689] sm:$0xff]
        %2691 = vmatprep.subr.mxu0 0.0
        %2692 = vmatpush1.msra.mxu0 %v580
        %2693 = vmatprep.subr.mxu0 0.0
        %2694 = vmatpush1.msra.mxu0 %v579
        %2695 = vmatprep.subr.mxu0 0.0
        %2696 = vmatpush1.msra.mxu0 %v578
        %2697 = vmatprep.subr.mxu0 0.0
        %2698 = vmatpush1.msra.mxu0 %v577
        %2699 = vmatprep.subr.mxu0 0.0
        %2700 = vmatpush1.msra.mxu0 %v576
        %2701 = vmatprep.subr.mxu0 0.0
        %2702 = vmatpush1.msra.mxu0 %v575
        %2703 = vmatprep.subr.mxu0 0.0
        %2704 = vmatpush1.msra.mxu0 %v574
        %2705 = vmatprep.subr.mxu0 0.0
        %2706 = vmatpush1.msra.mxu0 %v573
        %2707 = vmatprep.subr.mxu0 0.0
        %2708 = vmatpush1.msra.mxu0 %v572
        %2709 = vmatprep.subr.mxu0 0.0
        %2710 = vmatpush1.msra.mxu0 %v571
        %2711 = vmatprep.subr.mxu0 0.0
        %2712 = vmatpush1.msra.mxu0 %v570
        %2713 = vmatprep.subr.mxu0 0.0
        %2714 = vmatpush1.msra.mxu0 %v569
        %2715 = vmatprep.subr.mxu0 0.0
        %2716 = vmatpush1.msra.mxu0 %v568
        %2717 = vmatprep.subr.mxu0 0.0
        %2718 = vmatpush1.msra.mxu0 %v567
        %2719 = vmatprep.subr.mxu0 0.0
        %2720 = vmatpush1.msra.mxu0 %v566
        %2721 = vmatprep.subr.mxu0 0.0
        %2722 = vmatpush1.msra.mxu0 %v565
        %2723 = vmatprep.subr.mxu0 0.0
        %2724 = vmatpush2.msra.mxu0 0.0
        %2725 = vmatprep.subr.mxu0 0.0
        %2726 = vmatpush2.msra.mxu0 0.0
        %2727 = vmatprep.subr.mxu0 0.0
        %2728 = vmatpush2.msra.mxu0 0.0
        %2729 = vmatprep.subr.mxu0 0.0
        %2730 = vmatpush2.msra.mxu0 0.0
        %2731 = vmatprep.subr.mxu0 0.0
        %2732 = vmatpush2.msra.mxu0 0.0
        %2733 = vmatprep.subr.mxu0 0.0
        %2734 = vmatpush2.msra.mxu0 0.0
        %2735 = vmatprep.subr.mxu0 0.0
        %2736 = vmatpush2.msra.mxu0 0.0
        %2737 = vmatprep.subr.mxu0 0.0
        %2738 = vmatpush2.msra.mxu0 0.0
        %2739 = vmatprep.subr.mxu0 0.0
        %2740 = vmatpush2.msra.mxu0 0.0
        %2741 = vmatprep.subr.mxu0 0.0
        %2742 = vmatpush2.msra.mxu0 0.0
        %2743 = vmatprep.subr.mxu0 0.0
        %2744 = vmatpush2.msra.mxu0 0.0
        %2745 = vmatprep.subr.mxu0 0.0
        %2746 = vmatpush2.msra.mxu0 0.0
        %2747 = vmatprep.subr.mxu0 0.0
        %2748 = vmatpush2.msra.mxu0 0.0
        %2749 = vmatprep.subr.mxu0 0.0
        %2750 = vmatpush2.msra.mxu0 0.0
        %2751 = vmatprep.subr.mxu0 0.0
        %2752 = vmatpush2.msra.mxu0 0.0
        %2753 = vmatprep.subr.mxu0 0.0
        %2754 = vmatpush2.msra.mxu0 0.0
        %2755 = vmatprep.mubr.f32.mxu0 0.0
        %2756 = vmatmul.mubr.f32.gmra.mxu0 %v2370
        %v2757 = vpop.f32.mrf.mxu0
        %v2758 = vadd.f32 0.0, %v2757
        %v2759 = vpop.f32.mrf.mxu0
        %2760 = vdwg.mxu0
        %v2761 = vadd.f32 %v2690, %v2758
        %v2762 = vtanh.pop %v2761
        %v2763 = vtanh.pop %v2762
        %2764 = vmatprep.subr.mxu0 %v779
        %2765 = vmatpush1.msra.mxu0 %v778
        %2766 = vmatprep.subr.mxu0 %v775
        %2767 = vmatpush1.msra.mxu0 %v774
        %2768 = vmatprep.subr.mxu0 %v771
        %2769 = vmatpush1.msra.mxu0 %v770
        %2770 = vmatprep.subr.mxu0 %v767
        %2771 = vmatpush1.msra.mxu0 %v766
        %2772 = vmatprep.subr.mxu0 %v763
        %2773 = vmatpush1.msra.mxu0 %v762
        %2774 = vmatprep.subr.mxu0 %v759
        %2775 = vmatpush1.msra.mxu0 %v758
        %2776 = vmatprep.subr.mxu0 %v755
        %2777 = vmatpush1.msra.mxu0 %v754
        %2778 = vmatprep.subr.mxu0 %v751
        %2779 = vmatpush1.msra.mxu0 %v750
        %2780 = vmatprep.subr.mxu0 %v747
        %2781 = vmatpush1.msra.mxu0 %v746
        %2782 = vmatprep.subr.mxu0 %v743
        %2783 = vmatpush1.msra.mxu0 %v742
        %2784 = vmatprep.subr.mxu0 %v739
        %2785 = vmatpush1.msra.mxu0 %v738
        %2786 = vmatprep.subr.mxu0 %v735
        %2787 = vmatpush1.msra.mxu0 %v734
        %2788 = vmatprep.subr.mxu0 %v731
        %2789 = vmatpush1.msra.mxu0 %v730
        %2790 = vmatprep.subr.mxu0 %v727
        %2791 = vmatpush1.msra.mxu0 %v726
        %2792 = vmatprep.subr.mxu0 %v723
        %2793 = vmatpush1.msra.mxu0 %v722
        %2794 = vmatprep.subr.mxu0 %v719
        %2795 = vmatpush1.msra.mxu0 %v718
        %2796 = vmatprep.subr.mxu0 0.0
        %2797 = vmatpush2.msra.mxu0 0.0
        %2798 = vmatprep.subr.mxu0 0.0
        %2799 = vmatpush2.msra.mxu0 0.0
        %2800 = vmatprep.subr.mxu0 0.0
        %2801 = vmatpush2.msra.mxu0 0.0
        %2802 = vmatprep.subr.mxu0 0.0
        %2803 = vmatpush2.msra.mxu0 0.0
        %2804 = vmatprep.subr.mxu0 0.0
        %2805 = vmatpush2.msra.mxu0 0.0
        %2806 = vmatprep.subr.mxu0 0.0
        %2807 = vmatpush2.msra.mxu0 0.0
        %2808 = vmatprep.subr.mxu0 0.0
        %2809 = vmatpush2.msra.mxu0 0.0
        %2810 = vmatprep.subr.mxu0 0.0
        %2811 = vmatpush2.msra.mxu0 0.0
        %2812 = vmatprep.subr.mxu0 0.0
        %2813 = vmatpush2.msra.mxu0 0.0
        %2814 = vmatprep.subr.mxu0 0.0
        %2815 = vmatpush2.msra.mxu0 0.0
        %2816 = vmatprep.subr.mxu0 0.0
        %2817 = vmatpush2.msra.mxu0 0.0
        %2818 = vmatprep.subr.mxu0 0.0
        %2819 = vmatpush2.msra.mxu0 0.0
        %2820 = vmatprep.subr.mxu0 0.0
        %2821 = vmatpush2.msra.mxu0 0.0
        %2822 = vmatprep.subr.mxu0 0.0
        %2823 = vmatpush2.msra.mxu0 0.0
        %2824 = vmatprep.subr.mxu0 0.0
        %2825 = vmatpush2.msra.mxu0 0.0
        %2826 = vmatprep.subr.mxu0 0.0
        %2827 = vmatpush2.msra.mxu0 0.0
        %2828 = vmatprep.mubr.f32.mxu0 0.0
        %2829 = vmatmul.mubr.f32.gmra.mxu0 %v2683
        %v2830 = vpop.f32.mrf.mxu0
        %v2831 = vadd.f32 0.0, %v2830
        %v2832 = vpop.f32.mrf.mxu0
        %v2833 = vadd.f32 0.0, %v2832
        %2834 = vdwg.mxu0
        %2835 = vmatprep.subr.mxu0 %v781
        %2836 = vmatpush1.msra.mxu0 %v780
        %2837 = vmatprep.subr.mxu0 %v777
        %2838 = vmatpush1.msra.mxu0 %v776
        %2839 = vmatprep.subr.mxu0 %v773
        %2840 = vmatpush1.msra.mxu0 %v772
        %2841 = vmatprep.subr.mxu0 %v769
        %2842 = vmatpush1.msra.mxu0 %v768
        %2843 = vmatprep.subr.mxu0 %v765
        %2844 = vmatpush1.msra.mxu0 %v764
        %2845 = vmatprep.subr.mxu0 %v761
        %2846 = vmatpush1.msra.mxu0 %v760
        %2847 = vmatprep.subr.mxu0 %v757
        %2848 = vmatpush1.msra.mxu0 %v756
        %2849 = vmatprep.subr.mxu0 %v753
        %2850 = vmatpush1.msra.mxu0 %v752
        %2851 = vmatprep.subr.mxu0 %v749
        %2852 = vmatpush1.msra.mxu0 %v748
        %2853 = vmatprep.subr.mxu0 %v745
        %2854 = vmatpush1.msra.mxu0 %v744
        %2855 = vmatprep.subr.mxu0 %v741
        %2856 = vmatpush1.msra.mxu0 %v740
        %2857 = vmatprep.subr.mxu0 %v737
        %2858 = vmatpush1.msra.mxu0 %v736
        %2859 = vmatprep.subr.mxu0 %v733
        %2860 = vmatpush1.msra.mxu0 %v732
        %2861 = vmatprep.subr.mxu0 %v729
        %2862 = vmatpush1.msra.mxu0 %v728
        %2863 = vmatprep.subr.mxu0 %v725
        %2864 = vmatpush1.msra.mxu0 %v724
        %2865 = vmatprep.subr.mxu0 %v721
        %2866 = vmatpush1.msra.mxu0 %v720
        %2867 = vmatprep.subr.mxu0 0.0
        %2868 = vmatpush2.msra.mxu0 0.0
        %2869 = vmatprep.subr.mxu0 0.0
        %2870 = vmatpush2.msra.mxu0 0.0
        %2871 = vmatprep.subr.mxu0 0.0
        %2872 = vmatpush2.msra.mxu0 0.0
        %2873 = vmatprep.subr.mxu0 0.0
        %2874 = vmatpush2.msra.mxu0 0.0
        %2875 = vmatprep.subr.mxu0 0.0
        %2876 = vmatpush2.msra.mxu0 0.0
        %2877 = vmatprep.subr.mxu0 0.0
        %2878 = vmatpush2.msra.mxu0 0.0
        %2879 = vmatprep.subr.mxu0 0.0
        %2880 = vmatpush2.msra.mxu0 0.0
        %2881 = vmatprep.subr.mxu0 0.0
        %2882 = vmatpush2.msra.mxu0 0.0
        %2883 = vmatprep.subr.mxu0 0.0
        %2884 = vmatpush2.msra.mxu0 0.0
        %2885 = vmatprep.subr.mxu0 0.0
        %2886 = vmatpush2.msra.mxu0 0.0
        %2887 = vmatprep.subr.mxu0 0.0
        %2888 = vmatpush2.msra.mxu0 0.0
        %2889 = vmatprep.subr.mxu0 0.0
        %2890 = vmatpush2.msra.mxu0 0.0
        %2891 = vmatprep.subr.mxu0 0.0
        %2892 = vmatpush2.msra.mxu0 0.0
        %2893 = vmatprep.subr.mxu0 0.0
        %2894 = vmatpush2.msra.mxu0 0.0
        %2895 = vmatprep.subr.mxu0 0.0
        %2896 = vmatpush2.msra.mxu0 0.0
        %2897 = vmatprep.subr.mxu0 0.0
        %2898 = vmatpush2.msra.mxu0 0.0
        %2899 = vmatprep.mubr.f32.mxu0 0.0
        %2900 = vmatmul.mubr.f32.gmra.mxu0 %v2683
        %v2901 = vpop.f32.mrf.mxu0
        %v2902 = vadd.f32 0.0, %v2901
        %v2903 = vpop.f32.mrf.mxu0
        %v2904 = vadd.f32 0.0, %v2903
        %2905 = vdwg.mxu0
        %2906 = vmatprep.subr.mxu0 %v715
        %2907 = vmatpush1.msra.mxu0 %v714
        %2908 = vmatprep.subr.mxu0 %v711
        %2909 = vmatpush1.msra.mxu0 %v710
        %2910 = vmatprep.subr.mxu0 %v707
        %2911 = vmatpush1.msra.mxu0 %v706
        %2912 = vmatprep.subr.mxu0 %v703
        %2913 = vmatpush1.msra.mxu0 %v702
        %2914 = vmatprep.subr.mxu0 %v699
        %2915 = vmatpush1.msra.mxu0 %v698
        %2916 = vmatprep.subr.mxu0 %v695
        %2917 = vmatpush1.msra.mxu0 %v694
        %2918 = vmatprep.subr.mxu0 %v691
        %2919 = vmatpush1.msra.mxu0 %v690
        %2920 = vmatprep.subr.mxu0 %v687
        %2921 = vmatpush1.msra.mxu0 %v686
        %2922 = vmatprep.subr.mxu0 %v683
        %2923 = vmatpush1.msra.mxu0 %v682
        %2924 = vmatprep.subr.mxu0 %v679
        %2925 = vmatpush1.msra.mxu0 %v678
        %2926 = vmatprep.subr.mxu0 %v675
        %2927 = vmatpush1.msra.mxu0 %v674
        %2928 = vmatprep.subr.mxu0 %v671
        %2929 = vmatpush1.msra.mxu0 %v670
        %2930 = vmatprep.subr.mxu0 %v667
        %2931 = vmatpush1.msra.mxu0 %v666
        %2932 = vmatprep.subr.mxu0 %v663
        %2933 = vmatpush1.msra.mxu0 %v662
        %2934 = vmatprep.subr.mxu0 %v659
        %2935 = vmatpush1.msra.mxu0 %v658
        %2936 = vmatprep.subr.mxu0 %v655
        %2937 = vmatpush1.msra.mxu0 %v654
        %2938 = vmatprep.subr.mxu0 0.0
        %2939 = vmatpush2.msra.mxu0 0.0
        %2940 = vmatprep.subr.mxu0 0.0
        %2941 = vmatpush2.msra.mxu0 0.0
        %2942 = vmatprep.subr.mxu0 0.0
        %2943 = vmatpush2.msra.mxu0 0.0
        %2944 = vmatprep.subr.mxu0 0.0
        %2945 = vmatpush2.msra.mxu0 0.0
        %2946 = vmatprep.subr.mxu0 0.0
        %2947 = vmatpush2.msra.mxu0 0.0
        %2948 = vmatprep.subr.mxu0 0.0
        %2949 = vmatpush2.msra.mxu0 0.0
        %2950 = vmatprep.subr.mxu0 0.0
        %2951 = vmatpush2.msra.mxu0 0.0
        %2952 = vmatprep.subr.mxu0 0.0
        %2953 = vmatpush2.msra.mxu0 0.0
        %2954 = vmatprep.subr.mxu0 0.0
        %2955 = vmatpush2.msra.mxu0 0.0
        %2956 = vmatprep.subr.mxu0 0.0
        %2957 = vmatpush2.msra.mxu0 0.0
        %2958 = vmatprep.subr.mxu0 0.0
        %2959 = vmatpush2.msra.mxu0 0.0
        %2960 = vmatprep.subr.mxu0 0.0
        %2961 = vmatpush2.msra.mxu0 0.0
        %2962 = vmatprep.subr.mxu0 0.0
        %2963 = vmatpush2.msra.mxu0 0.0
        %2964 = vmatprep.subr.mxu0 0.0
        %2965 = vmatpush2.msra.mxu0 0.0
        %2966 = vmatprep.subr.mxu0 0.0
        %2967 = vmatpush2.msra.mxu0 0.0
        %2968 = vmatprep.subr.mxu0 0.0
        %2969 = vmatpush2.msra.mxu0 0.0
        %2970 = vmatprep.mubr.f32.mxu0 0.0
        %2971 = vmatmul.mubr.f32.gmra.mxu0 %v2763
        %v2972 = vpop.f32.mrf.mxu0
        %v2973 = vadd.f32 %v2831, %v2972
        %v2974 = vpop.f32.mrf.mxu0
        %v2975 = vadd.f32 %v2833, %v2974
        %2976 = vdwg.mxu0
        %2977 = vmatprep.subr.mxu0 %v717
        %2978 = vmatpush1.msra.mxu0 %v716
        %2979 = vmatprep.subr.mxu0 %v713
        %2980 = vmatpush1.msra.mxu0 %v712
        %2981 = vmatprep.subr.mxu0 %v709
        %2982 = vmatpush1.msra.mxu0 %v708
        %2983 = vmatprep.subr.mxu0 %v705
        %2984 = vmatpush1.msra.mxu0 %v704
        %2985 = vmatprep.subr.mxu0 %v701
        %2986 = vmatpush1.msra.mxu0 %v700
        %2987 = vmatprep.subr.mxu0 %v697
        %2988 = vmatpush1.msra.mxu0 %v696
        %2989 = vmatprep.subr.mxu0 %v693
        %2990 = vmatpush1.msra.mxu0 %v692
        %2991 = vmatprep.subr.mxu0 %v689
        %2992 = vmatpush1.msra.mxu0 %v688
        %2993 = vmatprep.subr.mxu0 %v685
        %2994 = vmatpush1.msra.mxu0 %v684
        %2995 = vmatprep.subr.mxu0 %v681
        %2996 = vmatpush1.msra.mxu0 %v680
        %2997 = vmatprep.subr.mxu0 %v677
        %2998 = vmatpush1.msra.mxu0 %v676
        %2999 = vmatprep.subr.mxu0 %v673
        %3000 = vmatpush1.msra.mxu0 %v672
        %3001 = vmatprep.subr.mxu0 %v669
        %3002 = vmatpush1.msra.mxu0 %v668
        %3003 = vmatprep.subr.mxu0 %v665
        %3004 = vmatpush1.msra.mxu0 %v664
        %3005 = vmatprep.subr.mxu0 %v661
        %3006 = vmatpush1.msra.mxu0 %v660
        %3007 = vmatprep.subr.mxu0 %v657
        %3008 = vmatpush1.msra.mxu0 %v656
        %3009 = vmatprep.subr.mxu0 0.0
        %3010 = vmatpush2.msra.mxu0 0.0
        %3011 = vmatprep.subr.mxu0 0.0
        %3012 = vmatpush2.msra.mxu0 0.0
        %3013 = vmatprep.subr.mxu0 0.0
        %3014 = vmatpush2.msra.mxu0 0.0
        %3015 = vmatprep.subr.mxu0 0.0
        %3016 = vmatpush2.msra.mxu0 0.0
        %3017 = vmatprep.subr.mxu0 0.0
        %3018 = vmatpush2.msra.mxu0 0.0
        %3019 = vmatprep.subr.mxu0 0.0
        %3020 = vmatpush2.msra.mxu0 0.0
        %3021 = vmatprep.subr.mxu0 0.0
        %3022 = vmatpush2.msra.mxu0 0.0
        %3023 = vmatprep.subr.mxu0 0.0
        %3024 = vmatpush2.msra.mxu0 0.0
        %3025 = vmatprep.subr.mxu0 0.0
        %3026 = vmatpush2.msra.mxu0 0.0
        %3027 = vmatprep.subr.mxu0 0.0
        %3028 = vmatpush2.msra.mxu0 0.0
        %3029 = vmatprep.subr.mxu0 0.0
        %3030 = vmatpush2.msra.mxu0 0.0
        %3031 = vmatprep.subr.mxu0 0.0
        %3032 = vmatpush2.msra.mxu0 0.0
        %3033 = vmatprep.subr.mxu0 0.0
        %3034 = vmatpush2.msra.mxu0 0.0
        %3035 = vmatprep.subr.mxu0 0.0
        %3036 = vmatpush2.msra.mxu0 0.0
        %3037 = vmatprep.subr.mxu0 0.0
        %3038 = vmatpush2.msra.mxu0 0.0
        %3039 = vmatprep.subr.mxu0 0.0
        %3040 = vmatpush2.msra.mxu0 0.0
        %3041 = vmatprep.mubr.f32.mxu0 0.0
        %3042 = vmatmul.mubr.f32.gmra.mxu0 %v2763
        %v3043 = vpop.f32.mrf.mxu0
        %v3044 = vadd.f32 %v2902, %v3043
        %v3045 = vpop.f32.mrf.mxu0
        %v3046 = vadd.f32 %v2904, %v3045
        %3047 = vdwg.mxu0
        %v3048 = vadd.f32 %v2973, %v1071
        %v3049 = vadd.f32 %v2975, %v1075
        %v3050 = vadd.f32 %v3044, %v1079
        %v3051 = vadd.f32 %v3046, %v1083
        %v3052 = vxor.u32 %v3048, 2147483648
        %v3053 = vmul.f32 %v3052, 1.442695
        %v3054 = vpow.pop %v3053
        %v3055 = vadd.f32 %v3054, 1.0
        %v3056 = vrcp.pop %v3055
        %v3057 = vmul.f32 1.0, %v3056
        %v3058 = vxor.u32 %v3049, 2147483648
        %v3059 = vmul.f32 %v3058, 1.442695
        %v3060 = vpow.pop %v3059
        %v3061 = vadd.f32 %v3060, 1.0
        %v3062 = vrcp.pop %v3061
        %v3063 = vmul.f32 1.0, %v3062
        %v3064 = vtanh.pop %v3050
        %v3065 = vxor.u32 %v3051, 2147483648
        %v3066 = vmul.f32 %v3065, 1.442695
        %v3067 = vpow.pop %v3066
        %v3068 = vadd.f32 %v3067, 1.0
        %v3069 = vrcp.pop %v3068
        %v3070 = vmul.f32 1.0, %v3069
        %v3071 = vmul.f32 %v3063, %v2681
        %v3072 = vmul.f32 %v3057, %v3064
        %v3073 = vadd.f32 %v3071, %v3072
        %v3074 = vtanh.pop %v3073
        %v3075 = vmul.f32 %v3070, %v3074
        %v3076 = vtanh.pop %v3075
        %v3077 = vstv %s2688
        %vm3078 = vcmp.eq.s32.totalorder %v558, %v3077
        %v3079 = vsel %vm3078, %v3076, %v2687
        %s3080 = sadd.s32 %s563, 6
        %s3081 = scalar_lea.vmem [#allocation6], 48
        %v3082 = vld [vmem:[%s3081] sm:$0xff]
        %3083 = vmatprep.subr.mxu0 0.0
        %3084 = vmatpush1.msra.mxu0 %v580
        %3085 = vmatprep.subr.mxu0 0.0
        %3086 = vmatpush1.msra.mxu0 %v579
        %3087 = vmatprep.subr.mxu0 0.0
        %3088 = vmatpush1.msra.mxu0 %v578
        %3089 = vmatprep.subr.mxu0 0.0
        %3090 = vmatpush1.msra.mxu0 %v577
        %3091 = vmatprep.subr.mxu0 0.0
        %3092 = vmatpush1.msra.mxu0 %v576
        %3093 = vmatprep.subr.mxu0 0.0
        %3094 = vmatpush1.msra.mxu0 %v575
        %3095 = vmatprep.subr.mxu0 0.0
        %3096 = vmatpush1.msra.mxu0 %v574
        %3097 = vmatprep.subr.mxu0 0.0
        %3098 = vmatpush1.msra.mxu0 %v573
        %3099 = vmatprep.subr.mxu0 0.0
        %3100 = vmatpush1.msra.mxu0 %v572
        %3101 = vmatprep.subr.mxu0 0.0
        %3102 = vmatpush1.msra.mxu0 %v571
        %3103 = vmatprep.subr.mxu0 0.0
        %3104 = vmatpush1.msra.mxu0 %v570
        %3105 = vmatprep.subr.mxu0 0.0
        %3106 = vmatpush1.msra.mxu0 %v569
        %3107 = vmatprep.subr.mxu0 0.0
        %3108 = vmatpush1.msra.mxu0 %v568
        %3109 = vmatprep.subr.mxu0 0.0
        %3110 = vmatpush1.msra.mxu0 %v567
        %3111 = vmatprep.subr.mxu0 0.0
        %3112 = vmatpush1.msra.mxu0 %v566
        %3113 = vmatprep.subr.mxu0 0.0
        %3114 = vmatpush1.msra.mxu0 %v565
        %3115 = vmatprep.subr.mxu0 0.0
        %3116 = vmatpush2.msra.mxu0 0.0
        %3117 = vmatprep.subr.mxu0 0.0
        %3118 = vmatpush2.msra.mxu0 0.0
        %3119 = vmatprep.subr.mxu0 0.0
        %3120 = vmatpush2.msra.mxu0 0.0
        %3121 = vmatprep.subr.mxu0 0.0
        %3122 = vmatpush2.msra.mxu0 0.0
        %3123 = vmatprep.subr.mxu0 0.0
        %3124 = vmatpush2.msra.mxu0 0.0
        %3125 = vmatprep.subr.mxu0 0.0
        %3126 = vmatpush2.msra.mxu0 0.0
        %3127 = vmatprep.subr.mxu0 0.0
        %3128 = vmatpush2.msra.mxu0 0.0
        %3129 = vmatprep.subr.mxu0 0.0
        %3130 = vmatpush2.msra.mxu0 0.0
        %3131 = vmatprep.subr.mxu0 0.0
        %3132 = vmatpush2.msra.mxu0 0.0
        %3133 = vmatprep.subr.mxu0 0.0
        %3134 = vmatpush2.msra.mxu0 0.0
        %3135 = vmatprep.subr.mxu0 0.0
        %3136 = vmatpush2.msra.mxu0 0.0
        %3137 = vmatprep.subr.mxu0 0.0
        %3138 = vmatpush2.msra.mxu0 0.0
        %3139 = vmatprep.subr.mxu0 0.0
        %3140 = vmatpush2.msra.mxu0 0.0
        %3141 = vmatprep.subr.mxu0 0.0
        %3142 = vmatpush2.msra.mxu0 0.0
        %3143 = vmatprep.subr.mxu0 0.0
        %3144 = vmatpush2.msra.mxu0 0.0
        %3145 = vmatprep.subr.mxu0 0.0
        %3146 = vmatpush2.msra.mxu0 0.0
        %3147 = vmatprep.mubr.f32.mxu0 0.0
        %3148 = vmatmul.mubr.f32.gmra.mxu0 %v2762
        %v3149 = vpop.f32.mrf.mxu0
        %v3150 = vadd.f32 0.0, %v3149
        %v3151 = vpop.f32.mrf.mxu0
        %3152 = vdwg.mxu0
        %v3153 = vadd.f32 %v3082, %v3150
        %v3154 = vtanh.pop %v3153
        %v3155 = vtanh.pop %v3154
        %3156 = vmatprep.subr.mxu0 %v779
        %3157 = vmatpush1.msra.mxu0 %v778
        %3158 = vmatprep.subr.mxu0 %v775
        %3159 = vmatpush1.msra.mxu0 %v774
        %3160 = vmatprep.subr.mxu0 %v771
        %3161 = vmatpush1.msra.mxu0 %v770
        %3162 = vmatprep.subr.mxu0 %v767
        %3163 = vmatpush1.msra.mxu0 %v766
        %3164 = vmatprep.subr.mxu0 %v763
        %3165 = vmatpush1.msra.mxu0 %v762
        %3166 = vmatprep.subr.mxu0 %v759
        %3167 = vmatpush1.msra.mxu0 %v758
        %3168 = vmatprep.subr.mxu0 %v755
        %3169 = vmatpush1.msra.mxu0 %v754
        %3170 = vmatprep.subr.mxu0 %v751
        %3171 = vmatpush1.msra.mxu0 %v750
        %3172 = vmatprep.subr.mxu0 %v747
        %3173 = vmatpush1.msra.mxu0 %v746
        %3174 = vmatprep.subr.mxu0 %v743
        %3175 = vmatpush1.msra.mxu0 %v742
        %3176 = vmatprep.subr.mxu0 %v739
        %3177 = vmatpush1.msra.mxu0 %v738
        %3178 = vmatprep.subr.mxu0 %v735
        %3179 = vmatpush1.msra.mxu0 %v734
        %3180 = vmatprep.subr.mxu0 %v731
        %3181 = vmatpush1.msra.mxu0 %v730
        %3182 = vmatprep.subr.mxu0 %v727
        %3183 = vmatpush1.msra.mxu0 %v726
        %3184 = vmatprep.subr.mxu0 %v723
        %3185 = vmatpush1.msra.mxu0 %v722
        %3186 = vmatprep.subr.mxu0 %v719
        %3187 = vmatpush1.msra.mxu0 %v718
        %3188 = vmatprep.subr.mxu0 0.0
        %3189 = vmatpush2.msra.mxu0 0.0
        %3190 = vmatprep.subr.mxu0 0.0
        %3191 = vmatpush2.msra.mxu0 0.0
        %3192 = vmatprep.subr.mxu0 0.0
        %3193 = vmatpush2.msra.mxu0 0.0
        %3194 = vmatprep.subr.mxu0 0.0
        %3195 = vmatpush2.msra.mxu0 0.0
        %3196 = vmatprep.subr.mxu0 0.0
        %3197 = vmatpush2.msra.mxu0 0.0
        %3198 = vmatprep.subr.mxu0 0.0
        %3199 = vmatpush2.msra.mxu0 0.0
        %3200 = vmatprep.subr.mxu0 0.0
        %3201 = vmatpush2.msra.mxu0 0.0
        %3202 = vmatprep.subr.mxu0 0.0
        %3203 = vmatpush2.msra.mxu0 0.0
        %3204 = vmatprep.subr.mxu0 0.0
        %3205 = vmatpush2.msra.mxu0 0.0
        %3206 = vmatprep.subr.mxu0 0.0
        %3207 = vmatpush2.msra.mxu0 0.0
        %3208 = vmatprep.subr.mxu0 0.0
        %3209 = vmatpush2.msra.mxu0 0.0
        %3210 = vmatprep.subr.mxu0 0.0
        %3211 = vmatpush2.msra.mxu0 0.0
        %3212 = vmatprep.subr.mxu0 0.0
        %3213 = vmatpush2.msra.mxu0 0.0
        %3214 = vmatprep.subr.mxu0 0.0
        %3215 = vmatpush2.msra.mxu0 0.0
        %3216 = vmatprep.subr.mxu0 0.0
        %3217 = vmatpush2.msra.mxu0 0.0
        %3218 = vmatprep.subr.mxu0 0.0
        %3219 = vmatpush2.msra.mxu0 0.0
        %3220 = vmatprep.mubr.f32.mxu0 0.0
        %3221 = vmatmul.mubr.f32.gmra.mxu0 %v3075
        %v3222 = vpop.f32.mrf.mxu0
        %v3223 = vadd.f32 0.0, %v3222
        %v3224 = vpop.f32.mrf.mxu0
        %v3225 = vadd.f32 0.0, %v3224
        %3226 = vdwg.mxu0
        %3227 = vmatprep.subr.mxu0 %v781
        %3228 = vmatpush1.msra.mxu0 %v780
        %3229 = vmatprep.subr.mxu0 %v777
        %3230 = vmatpush1.msra.mxu0 %v776
        %3231 = vmatprep.subr.mxu0 %v773
        %3232 = vmatpush1.msra.mxu0 %v772
        %3233 = vmatprep.subr.mxu0 %v769
        %3234 = vmatpush1.msra.mxu0 %v768
        %3235 = vmatprep.subr.mxu0 %v765
        %3236 = vmatpush1.msra.mxu0 %v764
        %3237 = vmatprep.subr.mxu0 %v761
        %3238 = vmatpush1.msra.mxu0 %v760
        %3239 = vmatprep.subr.mxu0 %v757
        %3240 = vmatpush1.msra.mxu0 %v756
        %3241 = vmatprep.subr.mxu0 %v753
        %3242 = vmatpush1.msra.mxu0 %v752
        %3243 = vmatprep.subr.mxu0 %v749
        %3244 = vmatpush1.msra.mxu0 %v748
        %3245 = vmatprep.subr.mxu0 %v745
        %3246 = vmatpush1.msra.mxu0 %v744
        %3247 = vmatprep.subr.mxu0 %v741
        %3248 = vmatpush1.msra.mxu0 %v740
        %3249 = vmatprep.subr.mxu0 %v737
        %3250 = vmatpush1.msra.mxu0 %v736
        %3251 = vmatprep.subr.mxu0 %v733
        %3252 = vmatpush1.msra.mxu0 %v732
        %3253 = vmatprep.subr.mxu0 %v729
        %3254 = vmatpush1.msra.mxu0 %v728
        %3255 = vmatprep.subr.mxu0 %v725
        %3256 = vmatpush1.msra.mxu0 %v724
        %3257 = vmatprep.subr.mxu0 %v721
        %3258 = vmatpush1.msra.mxu0 %v720
        %3259 = vmatprep.subr.mxu0 0.0
        %3260 = vmatpush2.msra.mxu0 0.0
        %3261 = vmatprep.subr.mxu0 0.0
        %3262 = vmatpush2.msra.mxu0 0.0
        %3263 = vmatprep.subr.mxu0 0.0
        %3264 = vmatpush2.msra.mxu0 0.0
        %3265 = vmatprep.subr.mxu0 0.0
        %3266 = vmatpush2.msra.mxu0 0.0
        %3267 = vmatprep.subr.mxu0 0.0
        %3268 = vmatpush2.msra.mxu0 0.0
        %3269 = vmatprep.subr.mxu0 0.0
        %3270 = vmatpush2.msra.mxu0 0.0
        %3271 = vmatprep.subr.mxu0 0.0
        %3272 = vmatpush2.msra.mxu0 0.0
        %3273 = vmatprep.subr.mxu0 0.0
        %3274 = vmatpush2.msra.mxu0 0.0
        %3275 = vmatprep.subr.mxu0 0.0
        %3276 = vmatpush2.msra.mxu0 0.0
        %3277 = vmatprep.subr.mxu0 0.0
        %3278 = vmatpush2.msra.mxu0 0.0
        %3279 = vmatprep.subr.mxu0 0.0
        %3280 = vmatpush2.msra.mxu0 0.0
        %3281 = vmatprep.subr.mxu0 0.0
        %3282 = vmatpush2.msra.mxu0 0.0
        %3283 = vmatprep.subr.mxu0 0.0
        %3284 = vmatpush2.msra.mxu0 0.0
        %3285 = vmatprep.subr.mxu0 0.0
        %3286 = vmatpush2.msra.mxu0 0.0
        %3287 = vmatprep.subr.mxu0 0.0
        %3288 = vmatpush2.msra.mxu0 0.0
        %3289 = vmatprep.subr.mxu0 0.0
        %3290 = vmatpush2.msra.mxu0 0.0
        %3291 = vmatprep.mubr.f32.mxu0 0.0
        %3292 = vmatmul.mubr.f32.gmra.mxu0 %v3075
        %v3293 = vpop.f32.mrf.mxu0
        %v3294 = vadd.f32 0.0, %v3293
        %v3295 = vpop.f32.mrf.mxu0
        %v3296 = vadd.f32 0.0, %v3295
        %3297 = vdwg.mxu0
        %3298 = vmatprep.subr.mxu0 %v715
        %3299 = vmatpush1.msra.mxu0 %v714
        %3300 = vmatprep.subr.mxu0 %v711
        %3301 = vmatpush1.msra.mxu0 %v710
        %3302 = vmatprep.subr.mxu0 %v707
        %3303 = vmatpush1.msra.mxu0 %v706
        %3304 = vmatprep.subr.mxu0 %v703
        %3305 = vmatpush1.msra.mxu0 %v702
        %3306 = vmatprep.subr.mxu0 %v699
        %3307 = vmatpush1.msra.mxu0 %v698
        %3308 = vmatprep.subr.mxu0 %v695
        %3309 = vmatpush1.msra.mxu0 %v694
        %3310 = vmatprep.subr.mxu0 %v691
        %3311 = vmatpush1.msra.mxu0 %v690
        %3312 = vmatprep.subr.mxu0 %v687
        %3313 = vmatpush1.msra.mxu0 %v686
        %3314 = vmatprep.subr.mxu0 %v683
        %3315 = vmatpush1.msra.mxu0 %v682
        %3316 = vmatprep.subr.mxu0 %v679
        %3317 = vmatpush1.msra.mxu0 %v678
        %3318 = vmatprep.subr.mxu0 %v675
        %3319 = vmatpush1.msra.mxu0 %v674
        %3320 = vmatprep.subr.mxu0 %v671
        %3321 = vmatpush1.msra.mxu0 %v670
        %3322 = vmatprep.subr.mxu0 %v667
        %3323 = vmatpush1.msra.mxu0 %v666
        %3324 = vmatprep.subr.mxu0 %v663
        %3325 = vmatpush1.msra.mxu0 %v662
        %3326 = vmatprep.subr.mxu0 %v659
        %3327 = vmatpush1.msra.mxu0 %v658
        %3328 = vmatprep.subr.mxu0 %v655
        %3329 = vmatpush1.msra.mxu0 %v654
        %3330 = vmatprep.subr.mxu0 0.0
        %3331 = vmatpush2.msra.mxu0 0.0
        %3332 = vmatprep.subr.mxu0 0.0
        %3333 = vmatpush2.msra.mxu0 0.0
        %3334 = vmatprep.subr.mxu0 0.0
        %3335 = vmatpush2.msra.mxu0 0.0
        %3336 = vmatprep.subr.mxu0 0.0
        %3337 = vmatpush2.msra.mxu0 0.0
        %3338 = vmatprep.subr.mxu0 0.0
        %3339 = vmatpush2.msra.mxu0 0.0
        %3340 = vmatprep.subr.mxu0 0.0
        %3341 = vmatpush2.msra.mxu0 0.0
        %3342 = vmatprep.subr.mxu0 0.0
        %3343 = vmatpush2.msra.mxu0 0.0
        %3344 = vmatprep.subr.mxu0 0.0
        %3345 = vmatpush2.msra.mxu0 0.0
        %3346 = vmatprep.subr.mxu0 0.0
        %3347 = vmatpush2.msra.mxu0 0.0
        %3348 = vmatprep.subr.mxu0 0.0
        %3349 = vmatpush2.msra.mxu0 0.0
        %3350 = vmatprep.subr.mxu0 0.0
        %3351 = vmatpush2.msra.mxu0 0.0
        %3352 = vmatprep.subr.mxu0 0.0
        %3353 = vmatpush2.msra.mxu0 0.0
        %3354 = vmatprep.subr.mxu0 0.0
        %3355 = vmatpush2.msra.mxu0 0.0
        %3356 = vmatprep.subr.mxu0 0.0
        %3357 = vmatpush2.msra.mxu0 0.0
        %3358 = vmatprep.subr.mxu0 0.0
        %3359 = vmatpush2.msra.mxu0 0.0
        %3360 = vmatprep.subr.mxu0 0.0
        %3361 = vmatpush2.msra.mxu0 0.0
        %3362 = vmatprep.mubr.f32.mxu0 0.0
        %3363 = vmatmul.mubr.f32.gmra.mxu0 %v3155
        %v3364 = vpop.f32.mrf.mxu0
        %v3365 = vadd.f32 %v3223, %v3364
        %v3366 = vpop.f32.mrf.mxu0
        %v3367 = vadd.f32 %v3225, %v3366
        %3368 = vdwg.mxu0
        %3369 = vmatprep.subr.mxu0 %v717
        %3370 = vmatpush1.msra.mxu0 %v716
        %3371 = vmatprep.subr.mxu0 %v713
        %3372 = vmatpush1.msra.mxu0 %v712
        %3373 = vmatprep.subr.mxu0 %v709
        %3374 = vmatpush1.msra.mxu0 %v708
        %3375 = vmatprep.subr.mxu0 %v705
        %3376 = vmatpush1.msra.mxu0 %v704
        %3377 = vmatprep.subr.mxu0 %v701
        %3378 = vmatpush1.msra.mxu0 %v700
        %3379 = vmatprep.subr.mxu0 %v697
        %3380 = vmatpush1.msra.mxu0 %v696
        %3381 = vmatprep.subr.mxu0 %v693
        %3382 = vmatpush1.msra.mxu0 %v692
        %3383 = vmatprep.subr.mxu0 %v689
        %3384 = vmatpush1.msra.mxu0 %v688
        %3385 = vmatprep.subr.mxu0 %v685
        %3386 = vmatpush1.msra.mxu0 %v684
        %3387 = vmatprep.subr.mxu0 %v681
        %3388 = vmatpush1.msra.mxu0 %v680
        %3389 = vmatprep.subr.mxu0 %v677
        %3390 = vmatpush1.msra.mxu0 %v676
        %3391 = vmatprep.subr.mxu0 %v673
        %3392 = vmatpush1.msra.mxu0 %v672
        %3393 = vmatprep.subr.mxu0 %v669
        %3394 = vmatpush1.msra.mxu0 %v668
        %3395 = vmatprep.subr.mxu0 %v665
        %3396 = vmatpush1.msra.mxu0 %v664
        %3397 = vmatprep.subr.mxu0 %v661
        %3398 = vmatpush1.msra.mxu0 %v660
        %3399 = vmatprep.subr.mxu0 %v657
        %3400 = vmatpush1.msra.mxu0 %v656
        %3401 = vmatprep.subr.mxu0 0.0
        %3402 = vmatpush2.msra.mxu0 0.0
        %3403 = vmatprep.subr.mxu0 0.0
        %3404 = vmatpush2.msra.mxu0 0.0
        %3405 = vmatprep.subr.mxu0 0.0
        %3406 = vmatpush2.msra.mxu0 0.0
        %3407 = vmatprep.subr.mxu0 0.0
        %3408 = vmatpush2.msra.mxu0 0.0
        %3409 = vmatprep.subr.mxu0 0.0
        %3410 = vmatpush2.msra.mxu0 0.0
        %3411 = vmatprep.subr.mxu0 0.0
        %3412 = vmatpush2.msra.mxu0 0.0
        %3413 = vmatprep.subr.mxu0 0.0
        %3414 = vmatpush2.msra.mxu0 0.0
        %3415 = vmatprep.subr.mxu0 0.0
        %3416 = vmatpush2.msra.mxu0 0.0
        %3417 = vmatprep.subr.mxu0 0.0
        %3418 = vmatpush2.msra.mxu0 0.0
        %3419 = vmatprep.subr.mxu0 0.0
        %3420 = vmatpush2.msra.mxu0 0.0
        %3421 = vmatprep.subr.mxu0 0.0
        %3422 = vmatpush2.msra.mxu0 0.0
        %3423 = vmatprep.subr.mxu0 0.0
        %3424 = vmatpush2.msra.mxu0 0.0
        %3425 = vmatprep.subr.mxu0 0.0
        %3426 = vmatpush2.msra.mxu0 0.0
        %3427 = vmatprep.subr.mxu0 0.0
        %3428 = vmatpush2.msra.mxu0 0.0
        %3429 = vmatprep.subr.mxu0 0.0
        %3430 = vmatpush2.msra.mxu0 0.0
        %3431 = vmatprep.subr.mxu0 0.0
        %3432 = vmatpush2.msra.mxu0 0.0
        %3433 = vmatprep.mubr.f32.mxu0 0.0
        %3434 = vmatmul.mubr.f32.gmra.mxu0 %v3155
        %v3435 = vpop.f32.mrf.mxu0
        %v3436 = vadd.f32 %v3294, %v3435
        %v3437 = vpop.f32.mrf.mxu0
        %v3438 = vadd.f32 %v3296, %v3437
        %3439 = vdwg.mxu0
        %v3440 = vadd.f32 %v3365, %v1071
        %v3441 = vadd.f32 %v3367, %v1075
        %v3442 = vadd.f32 %v3436, %v1079
        %v3443 = vadd.f32 %v3438, %v1083
        %v3444 = vxor.u32 %v3440, 2147483648
        %v3445 = vmul.f32 %v3444, 1.442695
        %v3446 = vpow.pop %v3445
        %v3447 = vadd.f32 %v3446, 1.0
        %v3448 = vrcp.pop %v3447
        %v3449 = vmul.f32 1.0, %v3448
        %v3450 = vxor.u32 %v3441, 2147483648
        %v3451 = vmul.f32 %v3450, 1.442695
        %v3452 = vpow.pop %v3451
        %v3453 = vadd.f32 %v3452, 1.0
        %v3454 = vrcp.pop %v3453
        %v3455 = vmul.f32 1.0, %v3454
        %v3456 = vtanh.pop %v3442
        %v3457 = vxor.u32 %v3443, 2147483648
        %v3458 = vmul.f32 %v3457, 1.442695
        %v3459 = vpow.pop %v3458
        %v3460 = vadd.f32 %v3459, 1.0
        %v3461 = vrcp.pop %v3460
        %v3462 = vmul.f32 1.0, %v3461
        %v3463 = vmul.f32 %v3455, %v3073
        %v3464 = vmul.f32 %v3449, %v3456
        %v3465 = vadd.f32 %v3463, %v3464
        %v3466 = vtanh.pop %v3465
        %v3467 = vmul.f32 %v3462, %v3466
        %v3468 = vtanh.pop %v3467
        %v3469 = vstv %s3080
        %vm3470 = vcmp.eq.s32.totalorder %v558, %v3469
        %v3471 = vsel %vm3470, %v3468, %v3079
        %s3472 = sadd.s32 %s563, 7
        %s3473 = scalar_lea.vmem [#allocation6], 56
        %v3474 = vld [vmem:[%s3473] sm:$0xff]
        %3475 = vmatprep.subr.mxu0 0.0
        %3476 = vmatpush1.msra.mxu0 %v580
        %3477 = vmatprep.subr.mxu0 0.0
        %3478 = vmatpush1.msra.mxu0 %v579
        %3479 = vmatprep.subr.mxu0 0.0
        %3480 = vmatpush1.msra.mxu0 %v578
        %3481 = vmatprep.subr.mxu0 0.0
        %3482 = vmatpush1.msra.mxu0 %v577
        %3483 = vmatprep.subr.mxu0 0.0
        %3484 = vmatpush1.msra.mxu0 %v576
        %3485 = vmatprep.subr.mxu0 0.0
        %3486 = vmatpush1.msra.mxu0 %v575
        %3487 = vmatprep.subr.mxu0 0.0
        %3488 = vmatpush1.msra.mxu0 %v574
        %3489 = vmatprep.subr.mxu0 0.0
        %3490 = vmatpush1.msra.mxu0 %v573
        %3491 = vmatprep.subr.mxu0 0.0
        %3492 = vmatpush1.msra.mxu0 %v572
        %3493 = vmatprep.subr.mxu0 0.0
        %3494 = vmatpush1.msra.mxu0 %v571
        %3495 = vmatprep.subr.mxu0 0.0
        %3496 = vmatpush1.msra.mxu0 %v570
        %3497 = vmatprep.subr.mxu0 0.0
        %3498 = vmatpush1.msra.mxu0 %v569
        %3499 = vmatprep.subr.mxu0 0.0
        %3500 = vmatpush1.msra.mxu0 %v568
        %3501 = vmatprep.subr.mxu0 0.0
        %3502 = vmatpush1.msra.mxu0 %v567
        %3503 = vmatprep.subr.mxu0 0.0
        %3504 = vmatpush1.msra.mxu0 %v566
        %3505 = vmatprep.subr.mxu0 0.0
        %3506 = vmatpush1.msra.mxu0 %v565
        %3507 = vmatprep.subr.mxu0 0.0
        %3508 = vmatpush2.msra.mxu0 0.0
        %3509 = vmatprep.subr.mxu0 0.0
        %3510 = vmatpush2.msra.mxu0 0.0
        %3511 = vmatprep.subr.mxu0 0.0
        %3512 = vmatpush2.msra.mxu0 0.0
        %3513 = vmatprep.subr.mxu0 0.0
        %3514 = vmatpush2.msra.mxu0 0.0
        %3515 = vmatprep.subr.mxu0 0.0
        %3516 = vmatpush2.msra.mxu0 0.0
        %3517 = vmatprep.subr.mxu0 0.0
        %3518 = vmatpush2.msra.mxu0 0.0
        %3519 = vmatprep.subr.mxu0 0.0
        %3520 = vmatpush2.msra.mxu0 0.0
        %3521 = vmatprep.subr.mxu0 0.0
        %3522 = vmatpush2.msra.mxu0 0.0
        %3523 = vmatprep.subr.mxu0 0.0
        %3524 = vmatpush2.msra.mxu0 0.0
        %3525 = vmatprep.subr.mxu0 0.0
        %3526 = vmatpush2.msra.mxu0 0.0
        %3527 = vmatprep.subr.mxu0 0.0
        %3528 = vmatpush2.msra.mxu0 0.0
        %3529 = vmatprep.subr.mxu0 0.0
        %3530 = vmatpush2.msra.mxu0 0.0
        %3531 = vmatprep.subr.mxu0 0.0
        %3532 = vmatpush2.msra.mxu0 0.0
        %3533 = vmatprep.subr.mxu0 0.0
        %3534 = vmatpush2.msra.mxu0 0.0
        %3535 = vmatprep.subr.mxu0 0.0
        %3536 = vmatpush2.msra.mxu0 0.0
        %3537 = vmatprep.subr.mxu0 0.0
        %3538 = vmatpush2.msra.mxu0 0.0
        %3539 = vmatprep.mubr.f32.mxu0 0.0
        %3540 = vmatmul.mubr.f32.gmra.mxu0 %v3154
        %v3541 = vpop.f32.mrf.mxu0
        %v3542 = vadd.f32 0.0, %v3541
        %v3543 = vpop.f32.mrf.mxu0
        %3544 = vdwg.mxu0
        %v3545 = vadd.f32 %v3474, %v3542
        %v3546 = vtanh.pop %v3545
        %v3547 = vtanh.pop %v3546
        %3548 = vmatprep.subr.mxu0 %v779
        %3549 = vmatpush1.msra.mxu0 %v778
        %3550 = vmatprep.subr.mxu0 %v775
        %3551 = vmatpush1.msra.mxu0 %v774
        %3552 = vmatprep.subr.mxu0 %v771
        %3553 = vmatpush1.msra.mxu0 %v770
        %3554 = vmatprep.subr.mxu0 %v767
        %3555 = vmatpush1.msra.mxu0 %v766
        %3556 = vmatprep.subr.mxu0 %v763
        %3557 = vmatpush1.msra.mxu0 %v762
        %3558 = vmatprep.subr.mxu0 %v759
        %3559 = vmatpush1.msra.mxu0 %v758
        %3560 = vmatprep.subr.mxu0 %v755
        %3561 = vmatpush1.msra.mxu0 %v754
        %3562 = vmatprep.subr.mxu0 %v751
        %3563 = vmatpush1.msra.mxu0 %v750
        %3564 = vmatprep.subr.mxu0 %v747
        %3565 = vmatpush1.msra.mxu0 %v746
        %3566 = vmatprep.subr.mxu0 %v743
        %3567 = vmatpush1.msra.mxu0 %v742
        %3568 = vmatprep.subr.mxu0 %v739
        %3569 = vmatpush1.msra.mxu0 %v738
        %3570 = vmatprep.subr.mxu0 %v735
        %3571 = vmatpush1.msra.mxu0 %v734
        %3572 = vmatprep.subr.mxu0 %v731
        %3573 = vmatpush1.msra.mxu0 %v730
        %3574 = vmatprep.subr.mxu0 %v727
        %3575 = vmatpush1.msra.mxu0 %v726
        %3576 = vmatprep.subr.mxu0 %v723
        %3577 = vmatpush1.msra.mxu0 %v722
        %3578 = vmatprep.subr.mxu0 %v719
        %3579 = vmatpush1.msra.mxu0 %v718
        %3580 = vmatprep.subr.mxu0 0.0
        %3581 = vmatpush2.msra.mxu0 0.0
        %3582 = vmatprep.subr.mxu0 0.0
        %3583 = vmatpush2.msra.mxu0 0.0
        %3584 = vmatprep.subr.mxu0 0.0
        %3585 = vmatpush2.msra.mxu0 0.0
        %3586 = vmatprep.subr.mxu0 0.0
        %3587 = vmatpush2.msra.mxu0 0.0
        %3588 = vmatprep.subr.mxu0 0.0
        %3589 = vmatpush2.msra.mxu0 0.0
        %3590 = vmatprep.subr.mxu0 0.0
        %3591 = vmatpush2.msra.mxu0 0.0
        %3592 = vmatprep.subr.mxu0 0.0
        %3593 = vmatpush2.msra.mxu0 0.0
        %3594 = vmatprep.subr.mxu0 0.0
        %3595 = vmatpush2.msra.mxu0 0.0
        %3596 = vmatprep.subr.mxu0 0.0
        %3597 = vmatpush2.msra.mxu0 0.0
        %3598 = vmatprep.subr.mxu0 0.0
        %3599 = vmatpush2.msra.mxu0 0.0
        %3600 = vmatprep.subr.mxu0 0.0
        %3601 = vmatpush2.msra.mxu0 0.0
        %3602 = vmatprep.subr.mxu0 0.0
        %3603 = vmatpush2.msra.mxu0 0.0
        %3604 = vmatprep.subr.mxu0 0.0
        %3605 = vmatpush2.msra.mxu0 0.0
        %3606 = vmatprep.subr.mxu0 0.0
        %3607 = vmatpush2.msra.mxu0 0.0
        %3608 = vmatprep.subr.mxu0 0.0
        %3609 = vmatpush2.msra.mxu0 0.0
        %3610 = vmatprep.subr.mxu0 0.0
        %3611 = vmatpush2.msra.mxu0 0.0
        %3612 = vmatprep.mubr.f32.mxu0 0.0
        %3613 = vmatmul.mubr.f32.gmra.mxu0 %v3467
        %v3614 = vpop.f32.mrf.mxu0
        %v3615 = vadd.f32 0.0, %v3614
        %v3616 = vpop.f32.mrf.mxu0
        %v3617 = vadd.f32 0.0, %v3616
        %3618 = vdwg.mxu0
        %3619 = vmatprep.subr.mxu0 %v781
        %3620 = vmatpush1.msra.mxu0 %v780
        %3621 = vmatprep.subr.mxu0 %v777
        %3622 = vmatpush1.msra.mxu0 %v776
        %3623 = vmatprep.subr.mxu0 %v773
        %3624 = vmatpush1.msra.mxu0 %v772
        %3625 = vmatprep.subr.mxu0 %v769
        %3626 = vmatpush1.msra.mxu0 %v768
        %3627 = vmatprep.subr.mxu0 %v765
        %3628 = vmatpush1.msra.mxu0 %v764
        %3629 = vmatprep.subr.mxu0 %v761
        %3630 = vmatpush1.msra.mxu0 %v760
        %3631 = vmatprep.subr.mxu0 %v757
        %3632 = vmatpush1.msra.mxu0 %v756
        %3633 = vmatprep.subr.mxu0 %v753
        %3634 = vmatpush1.msra.mxu0 %v752
        %3635 = vmatprep.subr.mxu0 %v749
        %3636 = vmatpush1.msra.mxu0 %v748
        %3637 = vmatprep.subr.mxu0 %v745
        %3638 = vmatpush1.msra.mxu0 %v744
        %3639 = vmatprep.subr.mxu0 %v741
        %3640 = vmatpush1.msra.mxu0 %v740
        %3641 = vmatprep.subr.mxu0 %v737
        %3642 = vmatpush1.msra.mxu0 %v736
        %3643 = vmatprep.subr.mxu0 %v733
        %3644 = vmatpush1.msra.mxu0 %v732
        %3645 = vmatprep.subr.mxu0 %v729
        %3646 = vmatpush1.msra.mxu0 %v728
        %3647 = vmatprep.subr.mxu0 %v725
        %3648 = vmatpush1.msra.mxu0 %v724
        %3649 = vmatprep.subr.mxu0 %v721
        %3650 = vmatpush1.msra.mxu0 %v720
        %3651 = vmatprep.subr.mxu0 0.0
        %3652 = vmatpush2.msra.mxu0 0.0
        %3653 = vmatprep.subr.mxu0 0.0
        %3654 = vmatpush2.msra.mxu0 0.0
        %3655 = vmatprep.subr.mxu0 0.0
        %3656 = vmatpush2.msra.mxu0 0.0
        %3657 = vmatprep.subr.mxu0 0.0
        %3658 = vmatpush2.msra.mxu0 0.0
        %3659 = vmatprep.subr.mxu0 0.0
        %3660 = vmatpush2.msra.mxu0 0.0
        %3661 = vmatprep.subr.mxu0 0.0
        %3662 = vmatpush2.msra.mxu0 0.0
        %3663 = vmatprep.subr.mxu0 0.0
        %3664 = vmatpush2.msra.mxu0 0.0
        %3665 = vmatprep.subr.mxu0 0.0
        %3666 = vmatpush2.msra.mxu0 0.0
        %3667 = vmatprep.subr.mxu0 0.0
        %3668 = vmatpush2.msra.mxu0 0.0
        %3669 = vmatprep.subr.mxu0 0.0
        %3670 = vmatpush2.msra.mxu0 0.0
        %3671 = vmatprep.subr.mxu0 0.0
        %3672 = vmatpush2.msra.mxu0 0.0
        %3673 = vmatprep.subr.mxu0 0.0
        %3674 = vmatpush2.msra.mxu0 0.0
        %3675 = vmatprep.subr.mxu0 0.0
        %3676 = vmatpush2.msra.mxu0 0.0
        %3677 = vmatprep.subr.mxu0 0.0
        %3678 = vmatpush2.msra.mxu0 0.0
        %3679 = vmatprep.subr.mxu0 0.0
        %3680 = vmatpush2.msra.mxu0 0.0
        %3681 = vmatprep.subr.mxu0 0.0
        %3682 = vmatpush2.msra.mxu0 0.0
        %3683 = vmatprep.mubr.f32.mxu0 0.0
        %3684 = vmatmul.mubr.f32.gmra.mxu0 %v3467
        %v3685 = vpop.f32.mrf.mxu0
        %v3686 = vadd.f32 0.0, %v3685
        %v3687 = vpop.f32.mrf.mxu0
        %v3688 = vadd.f32 0.0, %v3687
        %3689 = vdwg.mxu0
        %3690 = vmatprep.subr.mxu0 %v715
        %3691 = vmatpush1.msra.mxu0 %v714
        %3692 = vmatprep.subr.mxu0 %v711
        %3693 = vmatpush1.msra.mxu0 %v710
        %3694 = vmatprep.subr.mxu0 %v707
        %3695 = vmatpush1.msra.mxu0 %v706
        %3696 = vmatprep.subr.mxu0 %v703
        %3697 = vmatpush1.msra.mxu0 %v702
        %3698 = vmatprep.subr.mxu0 %v699
        %3699 = vmatpush1.msra.mxu0 %v698
        %3700 = vmatprep.subr.mxu0 %v695
        %3701 = vmatpush1.msra.mxu0 %v694
        %3702 = vmatprep.subr.mxu0 %v691
        %3703 = vmatpush1.msra.mxu0 %v690
        %3704 = vmatprep.subr.mxu0 %v687
        %3705 = vmatpush1.msra.mxu0 %v686
        %3706 = vmatprep.subr.mxu0 %v683
        %3707 = vmatpush1.msra.mxu0 %v682
        %3708 = vmatprep.subr.mxu0 %v679
        %3709 = vmatpush1.msra.mxu0 %v678
        %3710 = vmatprep.subr.mxu0 %v675
        %3711 = vmatpush1.msra.mxu0 %v674
        %3712 = vmatprep.subr.mxu0 %v671
        %3713 = vmatpush1.msra.mxu0 %v670
        %3714 = vmatprep.subr.mxu0 %v667
        %3715 = vmatpush1.msra.mxu0 %v666
        %3716 = vmatprep.subr.mxu0 %v663
        %3717 = vmatpush1.msra.mxu0 %v662
        %3718 = vmatprep.subr.mxu0 %v659
        %3719 = vmatpush1.msra.mxu0 %v658
        %3720 = vmatprep.subr.mxu0 %v655
        %3721 = vmatpush1.msra.mxu0 %v654
        %3722 = vmatprep.subr.mxu0 0.0
        %3723 = vmatpush2.msra.mxu0 0.0
        %3724 = vmatprep.subr.mxu0 0.0
        %3725 = vmatpush2.msra.mxu0 0.0
        %3726 = vmatprep.subr.mxu0 0.0
        %3727 = vmatpush2.msra.mxu0 0.0
        %3728 = vmatprep.subr.mxu0 0.0
        %3729 = vmatpush2.msra.mxu0 0.0
        %3730 = vmatprep.subr.mxu0 0.0
        %3731 = vmatpush2.msra.mxu0 0.0
        %3732 = vmatprep.subr.mxu0 0.0
        %3733 = vmatpush2.msra.mxu0 0.0
        %3734 = vmatprep.subr.mxu0 0.0
        %3735 = vmatpush2.msra.mxu0 0.0
        %3736 = vmatprep.subr.mxu0 0.0
        %3737 = vmatpush2.msra.mxu0 0.0
        %3738 = vmatprep.subr.mxu0 0.0
        %3739 = vmatpush2.msra.mxu0 0.0
        %3740 = vmatprep.subr.mxu0 0.0
        %3741 = vmatpush2.msra.mxu0 0.0
        %3742 = vmatprep.subr.mxu0 0.0
        %3743 = vmatpush2.msra.mxu0 0.0
        %3744 = vmatprep.subr.mxu0 0.0
        %3745 = vmatpush2.msra.mxu0 0.0
        %3746 = vmatprep.subr.mxu0 0.0
        %3747 = vmatpush2.msra.mxu0 0.0
        %3748 = vmatprep.subr.mxu0 0.0
        %3749 = vmatpush2.msra.mxu0 0.0
        %3750 = vmatprep.subr.mxu0 0.0
        %3751 = vmatpush2.msra.mxu0 0.0
        %3752 = vmatprep.subr.mxu0 0.0
        %3753 = vmatpush2.msra.mxu0 0.0
        %3754 = vmatprep.mubr.f32.mxu0 0.0
        %3755 = vmatmul.mubr.f32.gmra.mxu0 %v3547
        %v3756 = vpop.f32.mrf.mxu0
        %v3757 = vadd.f32 %v3615, %v3756
        %v3758 = vpop.f32.mrf.mxu0
        %v3759 = vadd.f32 %v3617, %v3758
        %3760 = vdwg.mxu0
        %3761 = vmatprep.subr.mxu0 %v717
        %3762 = vmatpush1.msra.mxu0 %v716
        %3763 = vmatprep.subr.mxu0 %v713
        %3764 = vmatpush1.msra.mxu0 %v712
        %3765 = vmatprep.subr.mxu0 %v709
        %3766 = vmatpush1.msra.mxu0 %v708
        %3767 = vmatprep.subr.mxu0 %v705
        %3768 = vmatpush1.msra.mxu0 %v704
        %3769 = vmatprep.subr.mxu0 %v701
        %3770 = vmatpush1.msra.mxu0 %v700
        %3771 = vmatprep.subr.mxu0 %v697
        %3772 = vmatpush1.msra.mxu0 %v696
        %3773 = vmatprep.subr.mxu0 %v693
        %3774 = vmatpush1.msra.mxu0 %v692
        %3775 = vmatprep.subr.mxu0 %v689
        %3776 = vmatpush1.msra.mxu0 %v688
        %3777 = vmatprep.subr.mxu0 %v685
        %3778 = vmatpush1.msra.mxu0 %v684
        %3779 = vmatprep.subr.mxu0 %v681
        %3780 = vmatpush1.msra.mxu0 %v680
        %3781 = vmatprep.subr.mxu0 %v677
        %3782 = vmatpush1.msra.mxu0 %v676
        %3783 = vmatprep.subr.mxu0 %v673
        %3784 = vmatpush1.msra.mxu0 %v672
        %3785 = vmatprep.subr.mxu0 %v669
        %3786 = vmatpush1.msra.mxu0 %v668
        %3787 = vmatprep.subr.mxu0 %v665
        %3788 = vmatpush1.msra.mxu0 %v664
        %3789 = vmatprep.subr.mxu0 %v661
        %3790 = vmatpush1.msra.mxu0 %v660
        %3791 = vmatprep.subr.mxu0 %v657
        %3792 = vmatpush1.msra.mxu0 %v656
        %3793 = vmatprep.subr.mxu0 0.0
        %3794 = vmatpush2.msra.mxu0 0.0
        %3795 = vmatprep.subr.mxu0 0.0
        %3796 = vmatpush2.msra.mxu0 0.0
        %3797 = vmatprep.subr.mxu0 0.0
        %3798 = vmatpush2.msra.mxu0 0.0
        %3799 = vmatprep.subr.mxu0 0.0
        %3800 = vmatpush2.msra.mxu0 0.0
        %3801 = vmatprep.subr.mxu0 0.0
        %3802 = vmatpush2.msra.mxu0 0.0
        %3803 = vmatprep.subr.mxu0 0.0
        %3804 = vmatpush2.msra.mxu0 0.0
        %3805 = vmatprep.subr.mxu0 0.0
        %3806 = vmatpush2.msra.mxu0 0.0
        %3807 = vmatprep.subr.mxu0 0.0
        %3808 = vmatpush2.msra.mxu0 0.0
        %3809 = vmatprep.subr.mxu0 0.0
        %3810 = vmatpush2.msra.mxu0 0.0
        %3811 = vmatprep.subr.mxu0 0.0
        %3812 = vmatpush2.msra.mxu0 0.0
        %3813 = vmatprep.subr.mxu0 0.0
        %3814 = vmatpush2.msra.mxu0 0.0
        %3815 = vmatprep.subr.mxu0 0.0
        %3816 = vmatpush2.msra.mxu0 0.0
        %3817 = vmatprep.subr.mxu0 0.0
        %3818 = vmatpush2.msra.mxu0 0.0
        %3819 = vmatprep.subr.mxu0 0.0
        %3820 = vmatpush2.msra.mxu0 0.0
        %3821 = vmatprep.subr.mxu0 0.0
        %3822 = vmatpush2.msra.mxu0 0.0
        %3823 = vmatprep.subr.mxu0 0.0
        %3824 = vmatpush2.msra.mxu0 0.0
        %3825 = vmatprep.mubr.f32.mxu0 0.0
        %3826 = vmatmul.mubr.f32.gmra.mxu0 %v3547
        %v3827 = vpop.f32.mrf.mxu0
        %v3828 = vadd.f32 %v3686, %v3827
        %v3829 = vpop.f32.mrf.mxu0
        %v3830 = vadd.f32 %v3688, %v3829
        %3831 = vdwg.mxu0
        %v3832 = vadd.f32 %v3757, %v1071
        %v3833 = vadd.f32 %v3759, %v1075
        %v3834 = vadd.f32 %v3828, %v1079
        %v3835 = vadd.f32 %v3830, %v1083
        %v3836 = vxor.u32 %v3832, 2147483648
        %v3837 = vmul.f32 %v3836, 1.442695
        %v3838 = vpow.pop %v3837
        %v3839 = vadd.f32 %v3838, 1.0
        %v3840 = vrcp.pop %v3839
        %v3841 = vmul.f32 1.0, %v3840
        %v3842 = vxor.u32 %v3833, 2147483648
        %v3843 = vmul.f32 %v3842, 1.442695
        %v3844 = vpow.pop %v3843
        %v3845 = vadd.f32 %v3844, 1.0
        %v3846 = vrcp.pop %v3845
        %v3847 = vmul.f32 1.0, %v3846
        %v3848 = vtanh.pop %v3834
        %v3849 = vxor.u32 %v3835, 2147483648
        %v3850 = vmul.f32 %v3849, 1.442695
        %v3851 = vpow.pop %v3850
        %v3852 = vadd.f32 %v3851, 1.0
        %v3853 = vrcp.pop %v3852
        %v3854 = vmul.f32 1.0, %v3853
        %v3855 = vmul.f32 %v3847, %v3465
        %v3856 = vmul.f32 %v3841, %v3848
        %v3857 = vadd.f32 %v3855, %v3856
        %v3858 = vtanh.pop %v3857
        %v3859 = vmul.f32 %v3854, %v3858
        %v3860 = vtanh.pop %v3859
        %v3861 = vstv %s3472
        %vm3862 = vcmp.eq.s32.totalorder %v558, %v3861
        %v3863 = vsel %vm3862, %v3860, %v3471
        %3864 = vst [vmem:[#allocation2] sm:$0xff] %v3546
        %3865 = vst [vmem:[#allocation3] sm:$0xff] %v3859
        %3866 = vst [vmem:[#allocation4] sm:$0xff] %v3857
        %3867 = vst [vmem:[#allocation5] sm:$0xff] %v3863
        %p3868 = scmp.eq.s32.totalorder %s24, 2
        // Predicated region
        $region77: #{tpu_custom_call.1} parent=59 // pred_check
          %p3869 = pneg %p3868
        $region78: #{tpu_custom_call.1} parent=59 // pred_check_branch
          %3871 = sbr.rel (%p3869) target = $region80
        $region79: #{tpu_custom_call.1} parent=59 // pred_region
          %v3872 = vld [vmem:[#allocation5] sm:$0xff]
          %v3873 = vld [vmem:[#allocation12] sm:$0xff]
          %v3874 = vld [vmem:[#allocation12 + $0x8] sm:$0xff]
          %v3875 = vld [vmem:[#allocation12 + $0x10] sm:$0xff]
          %v3876 = vld [vmem:[#allocation12 + $0x18] sm:$0xff]
          %v3877 = vld [vmem:[#allocation12 + $0x20] sm:$0xff]
          %v3878 = vld [vmem:[#allocation12 + $0x28] sm:$0xff]
          %v3879 = vld [vmem:[#allocation12 + $0x30] sm:$0xff]
          %v3880 = vld [vmem:[#allocation12 + $0x38] sm:$0xff]
          %v3881 = vld [vmem:[#allocation12 + $0x40] sm:$0xff]
          %v3882 = vld [vmem:[#allocation12 + $0x48] sm:$0xff]
          %v3883 = vld [vmem:[#allocation12 + $0x50] sm:$0xff]
          %v3884 = vld [vmem:[#allocation12 + $0x58] sm:$0xff]
          %v3885 = vld [vmem:[#allocation12 + $0x60] sm:$0xff]
          %v3886 = vld [vmem:[#allocation12 + $0x68] sm:$0xff]
          %v3887 = vld [vmem:[#allocation12 + $0x70] sm:$0xff]
          %v3888 = vld [vmem:[#allocation12 + $0x78] sm:$0xff]
          %v3889 = vld [vmem:[%s9] sm:$0x1]
          %v3891 = vlaneseq
          %v3892 = vshrl.u32 %v3891, 7
          %v3893 = vsub.s32 0, %v3892
          %v3894 = vrot.slane %v3889, %v3893
          %3896 = vmatprep.subr.mxu0 0.0
          %3897 = vmatpush1.msra.mxu0 %v3888
          %3898 = vmatprep.subr.mxu0 0.0
          %3899 = vmatpush1.msra.mxu0 %v3887
          %3900 = vmatprep.subr.mxu0 0.0
          %3901 = vmatpush1.msra.mxu0 %v3886
          %3902 = vmatprep.subr.mxu0 0.0
          %3903 = vmatpush1.msra.mxu0 %v3885
          %3904 = vmatprep.subr.mxu0 0.0
          %3905 = vmatpush1.msra.mxu0 %v3884
          %3906 = vmatprep.subr.mxu0 0.0
          %3907 = vmatpush1.msra.mxu0 %v3883
          %3908 = vmatprep.subr.mxu0 0.0
          %3909 = vmatpush1.msra.mxu0 %v3882
          %3910 = vmatprep.subr.mxu0 0.0
          %3911 = vmatpush1.msra.mxu0 %v3881
          %3912 = vmatprep.subr.mxu0 0.0
          %3913 = vmatpush1.msra.mxu0 %v3880
          %3914 = vmatprep.subr.mxu0 0.0
          %3915 = vmatpush1.msra.mxu0 %v3879
          %3916 = vmatprep.subr.mxu0 0.0
          %3917 = vmatpush1.msra.mxu0 %v3878
          %3918 = vmatprep.subr.mxu0 0.0
          %3919 = vmatpush1.msra.mxu0 %v3877
          %3920 = vmatprep.subr.mxu0 0.0
          %3921 = vmatpush1.msra.mxu0 %v3876
          %3922 = vmatprep.subr.mxu0 0.0
          %3923 = vmatpush1.msra.mxu0 %v3875
          %3924 = vmatprep.subr.mxu0 0.0
          %3925 = vmatpush1.msra.mxu0 %v3874
          %3926 = vmatprep.subr.mxu0 0.0
          %3927 = vmatpush1.msra.mxu0 %v3873
          %3928 = vmatprep.subr.mxu0 0.0
          %3929 = vmatpush2.msra.mxu0 0.0
          %3930 = vmatprep.subr.mxu0 0.0
          %3931 = vmatpush2.msra.mxu0 0.0
          %3932 = vmatprep.subr.mxu0 0.0
          %3933 = vmatpush2.msra.mxu0 0.0
          %3934 = vmatprep.subr.mxu0 0.0
          %3935 = vmatpush2.msra.mxu0 0.0
          %3936 = vmatprep.subr.mxu0 0.0
          %3937 = vmatpush2.msra.mxu0 0.0
          %3938 = vmatprep.subr.mxu0 0.0
          %3939 = vmatpush2.msra.mxu0 0.0
          %3940 = vmatprep.subr.mxu0 0.0
          %3941 = vmatpush2.msra.mxu0 0.0
          %3942 = vmatprep.subr.mxu0 0.0
          %3943 = vmatpush2.msra.mxu0 0.0
          %3944 = vmatprep.subr.mxu0 0.0
          %3945 = vmatpush2.msra.mxu0 0.0
          %3946 = vmatprep.subr.mxu0 0.0
          %3947 = vmatpush2.msra.mxu0 0.0
          %3948 = vmatprep.subr.mxu0 0.0
          %3949 = vmatpush2.msra.mxu0 0.0
          %3950 = vmatprep.subr.mxu0 0.0
          %3951 = vmatpush2.msra.mxu0 0.0
          %3952 = vmatprep.subr.mxu0 0.0
          %3953 = vmatpush2.msra.mxu0 0.0
          %3954 = vmatprep.subr.mxu0 0.0
          %3955 = vmatpush2.msra.mxu0 0.0
          %3956 = vmatprep.subr.mxu0 0.0
          %3957 = vmatpush2.msra.mxu0 0.0
          %3958 = vmatprep.subr.mxu0 0.0
          %3959 = vmatpush2.msra.mxu0 0.0
          %3960 = vmatprep.mubr.f32.mxu0 0.0
          %3961 = vmatmul.mubr.f32.gmra.mxu0 %v3872
          %v3962 = vpop.f32.mrf.mxu0
          %v3963 = vadd.f32 %v3894, %v3962
          %v3964 = vpop.f32.mrf.mxu0
          %3965 = vdwg.mxu0
          %v3966 = vlaneseq
          %v3967 = vand.u32 %v3966, 127
          %vm3968 = vcmp.lt.s32.totalorder %v3967, 8
          %v3969 = vsel %vm3968, %v3963, -1e+30
          %3970 = vmax.xlane.f32.xlu0 %v3969
          %v3971 = vpop.xlane.xlu0 %3970
          %v3972 = vsub.f32 %v3969, %v3971
          %v3973 = vmul.f32 %v3972, 1.442695
          %v3974 = vpow.pop %v3973
          %3975 = vadd.xlane.f32.xlu0 %v3974
          %v3976 = vpop.xlane.xlu0 %3975
          %v3977 = vlog2.pop %v3976
          %v3978 = vmul.f32 %v3977, 0.6931472
          %v3979 = vadd.f32 %v3971, %v3978
          %v3980 = vsub.f32 %v3969, %v3979
          %3981 = vst [vmem:[#allocation13] sm:$0xff] %v3980
        $region80: #{tpu_custom_call.1} parent=59 // pred_fallthru
          _
        // Predicated region
        $region81: #{tpu_custom_call.1} parent=59 // pred_check
          %p3982 = pneg %p252
        $region82: #{tpu_custom_call.1} parent=59 // pred_check_branch
          %3984 = sbr.rel (%p3982) target = $region84
        $region83: #{tpu_custom_call.1} parent=59 // pred_region
          %s3986 = ssub.s32 128, 128
          %3987 = vsyncadd [#allocation9], %s3986
          %s3989 = sshll.u32 [#allocation13], 4
          %s3990 = int_to_ptr.vmem [resolvable:$true] %s3989
          %3992 = dma.vmem_to_hbm [thread:$0]  %s3990, 128, %s10, [#allocation9]
        $region84: #{tpu_custom_call.1} parent=59 // pred_fallthru
          _
        // Predicated region
        $region85: #{tpu_custom_call.1} parent=59 // pred_check
          %p3993 = pneg %p252
        $region86: #{tpu_custom_call.1} parent=59 // pred_check_branch
          %3995 = sbr.rel (%p3993) target = $region88
        $region87: #{tpu_custom_call.1} parent=59 // pred_region
          %3996 = dma.done [#allocation9], 128
        $region88: #{tpu_custom_call.1} parent=59 // pred_fallthru
          _
      $region60: #{tpu_custom_call.1} parent=5 // pred_fallthru
        _
      %p3997 = scmp.le.s32.totalorder 2, %s19
      // Predicated region
      $region89: #{tpu_custom_call.1} parent=5 // pred_check
        %p3998 = pneg %p3997
      $region90: #{tpu_custom_call.1} parent=5 // pred_check_branch
        %4000 = sbr.rel (%p3998) target = $region92
      $region91: #{tpu_custom_call.1} parent=5 // pred_region
        %s4001 = ssub.s32 %s19, 2
      $region92: #{tpu_custom_call.1} parent=5 // pred_fallthru
        _
    $region6: #{tpu_custom_call.1} parent=1 // loop_footer
      %s23 = sadd.s32 1, %s19
    $region7: #{tpu_custom_call.1} parent=1 // loop_footer_branch
      %18 = sbr.rel target = $region3
    $region8: #{tpu_custom_call.1} parent=1 // loop_exit
      _
    %4002 = vsyncpa [#allocation8], 1
    %s4003 = scalar_lea.sflag [#allocation8], 1
    %4004 = vsyncpa %s4003, 1
    %4005 = vsyncpa [#allocation11], 1
    %4006 = vsyncpa [#allocation9], 1
    %s4007 = scalar_lea.sflag [#allocation9], 1
    %4008 = vsyncpa %s4007, 1

</llo_original>
